<compile_context>
chip_gen: v7x
topology: tpu7x:2x2x1
jax: 0.10.0
libtpu: 0.0.40
codegen_flags: <defaults>
</compile_context>

<pallas_src>
import jax
import jax.numpy as jnp
from jax.experimental import pallas as pl
from jax.experimental.pallas import tpu as pltpu

_BN_EPS = 1e-5


def _vec_layout(widths):
    """128-lane-aligned offsets for packing 1-D params into a single row."""
    offs, off = [], 0
    for w in widths:
        offs.append(off)
        off += ((int(w) + 127) // 128) * 128
    return offs, off


# ---------------------------------------------------------------------------
# In-kernel building blocks (traced inside the Pallas kernel body)
# ---------------------------------------------------------------------------
def _conv_pool_relu(x, w, b, pool):
    """Conv1d(valid) + MaxPool1d(pool, stride=pool) + ReLU, channels-last.

    x: (L, Cin) f32;  w: (K*Cin, Cout) bf16/f32;  b: (1, Cout) f32.
    """
    L, cin = x.shape
    kcin, cout = w.shape
    k = kcin // cin
    lout = L - k + 1
    # im2col: one wide-contraction MXU matmul instead of K narrow ones.
    cols = jnp.concatenate([x[i:i + lout, :] for i in range(k)], axis=-1)
    h = jnp.dot(cols.astype(w.dtype), w, preferred_element_type=jnp.float32) + b
    lp = (lout - pool) // pool + 1
    h = jnp.max(h[:lp * pool, :].reshape(lp, pool, cout), axis=1)
    return jnp.maximum(h, 0.0)          # ReLU; Dropout(0.5) = identity in eval.


def _wf_kernel(xmax_ref, x_ref, w1_ref, w2_ref, w3_ref, fw1_ref, fw2_ref,
               vec_ref, out_ref):
    # Static widths / packed-vector offsets derived from ref shapes.
    c1, c2, c3 = w1_ref.shape[1], w2_ref.shape[1], w3_ref.shape[1]
    f1, f2 = fw1_ref.shape[1], fw2_ref.shape[1]
    offs, _ = _vec_layout((c1, c2, c3, f1, f2, f2, 1))

    b1 = vec_ref[:, offs[0]:offs[0] + c1]      # conv1 bias
    b2 = vec_ref[:, offs[1]:offs[1] + c2]      # conv2 bias (BN1 folded in)
    b3 = vec_ref[:, offs[2]:offs[2] + c3]      # conv3 bias (BN2 folded in)
    fb1 = vec_ref[:, offs[3]:offs[3] + f1]     # fc1 bias  (BN3 folded in)
    fb2 = vec_ref[:, offs[4]:offs[4] + f2]     # fc2 bias
    w3r = vec_ref[:, offs[5]:offs[5] + f2]     # fc3 weight row (VPU path)
    fb3 = vec_ref[:, offs[6]:offs[6] + 1]      # fc3 bias

    # x = x / x.max(): scalar reciprocal + broadcast multiply (no vector divide).
    inv = pl.reciprocal(xmax_ref[...], approx=False)       # (1, 1) f32
    x = x_ref[...].astype(jnp.float32) * inv                # (L, Cin)

    k1 = w1_ref.shape[0] // x.shape[-1]                     # kernel1 == pool1
    h = _conv_pool_relu(x, w1_ref[...], b1, pool=k1)
    h = _conv_pool_relu(h, w2_ref[...], b2, pool=2)
    h = _conv_pool_relu(h, w3_ref[...], b3, pool=2)

    # Flatten (PyTorch order via pre-permuted fw1) fused with fc1, then fc2.
    hf = h.reshape(1, h.shape[0] * h.shape[1])
    h = jnp.maximum(
        jnp.dot(hf.astype(fw1_ref.dtype), fw1_ref[...],
                preferred_element_type=jnp.float32) + fb1, 0.0)
    h = jnp.maximum(
        jnp.dot(h.astype(fw2_ref.dtype), fw2_ref[...],
                preferred_element_type=jnp.float32) + fb2, 0.0)

    # fc3 (output width 1): VPU multiply + cross-lane reduce, no MXU pass.
    out = jnp.sum(h * w3r, axis=-1, keepdims=True) + fb3
    out_ref[...] = out.astype(out_ref.dtype)


# ---------------------------------------------------------------------------
# One-time parameter preparation: layout, BN folding, packing, bf16 cast
# ---------------------------------------------------------------------------
def _fold_bn_forward(w, b, scale, shift):
    """Fold y = x*scale + shift (per *input* channel, axis 1 of w) into (w, b)."""
    b_new = b + jnp.sum(w * shift[None, :, None], axis=(0, 1))
    return w * scale[None, :, None], b_new


def prepare_params(p, *, weight_dtype=jnp.bfloat16):
    """Call once per model (outside the per-call jit path)."""
    f32 = jnp.float32

    def bn_scale_shift(i):
        s = p[f'bn{i}_gamma'].astype(f32) * jax.lax.rsqrt(
            p[f'bn{i}_var'].astype(f32) + _BN_EPS)
        t = p[f'bn{i}_beta'].astype(f32) - p[f'bn{i}_mean'].astype(f32) * s
        return s, t

    s1, t1 = bn_scale_shift(1)
    s2, t2 = bn_scale_shift(2)
    s3, t3 = bn_scale_shift(3)

    def conv_kio(w):                    # (Cout, Cin, K) -> (K, Cin, Cout)
        return jnp.transpose(w.astype(f32), (2, 1, 0))

    w1 = conv_kio(p['conv1_w'])
    b1 = p['conv1_b'].astype(f32)
    w2, b2 = _fold_bn_forward(conv_kio(p['conv2_w']),
                              p['conv2_b'].astype(f32), s1, t1)
    w3, b3 = _fold_bn_forward(conv_kio(p['conv3_w']),
                              p['conv3_b'].astype(f32), s2, t2)

    # fc1 weight (512, 256*Lp) with PyTorch flatten index c*Lp + l
    #   -> (Lp, 256, 512) so rows match the channels-last flatten order l*256+c.
    n_out1, n_in1 = p['fc1_w'].shape
    lp = n_in1 // 256
    fw1 = jnp.transpose(p['fc1_w'].astype(f32).reshape(n_out1, 256, lp),
                        (2, 1, 0))
    fw1, fb1 = _fold_bn_forward(fw1, p['fc1_b'].astype(f32), s3, t3)

    fw2 = p['fc2_w'].astype(f32).T
    fb2 = p['fc2_b'].astype(f32)
    w3row = p['fc3_w'].astype(f32).reshape(-1)
    fb3 = p['fc3_b'].astype(f32).reshape(-1)

    # Pack all 1-D params + the fc3 weight row into one (1, N) f32 vector.
    parts = [b1, b2, b3, fb1, fb2, w3row, fb3]
    offs, total = _vec_layout([v.size for v in parts])
    vec = jnp.zeros((total,), f32)
    for v, off in zip(parts, offs):
        vec = vec.at[off:off + v.size].set(v)
    vec = vec.reshape(1, total)

    def flat2(w):                       # (K, Cin, Cout) -> (K*Cin, Cout)
        return w.reshape(w.shape[0] * w.shape[1], w.shape[2])

    wd = weight_dtype
    return {
        'w1': flat2(w1).astype(wd),
        'w2': flat2(w2).astype(wd),
        'w3': flat2(w3).astype(wd),
        'fw1': flat2(fw1).astype(wd),
        'fw2': fw2.astype(wd),
        'vec': vec,
    }


# ---------------------------------------------------------------------------
# Forward wrappers
# ---------------------------------------------------------------------------
def wf1dcnn3fc2_forward_prepared(x, prep):
    """x: (B, Cin, L) NCL as in PyTorch.  prep: output of prepare_params."""
    B, cin, L = x.shape
    x_l = jnp.transpose(x, (0, 2, 1)).astype(jnp.float32)       # (B, L, Cin)
    # Global max over the whole batch (matches torch x.max()); hoisted so the
    # kernel can be batch-gridded with identical semantics.
    xmax = jnp.max(x_l).reshape(1, 1)

    w1, w2, w3 = prep['w1'], prep['w2'], prep['w3']
    fw1, fw2, vec = prep['fw1'], prep['fw2'], prep['vec']

    out = pl.pallas_call(
        _wf_kernel,
        out_shape=jax.ShapeDtypeStruct((B, 1, 1), jnp.float32),
        grid=(B,),
        in_specs=[
            pl.BlockSpec((1, 1), lambda b: (0, 0)),             # xmax (resident)
            pl.BlockSpec((None, L, cin), lambda b: (b, 0, 0)),  # x, per-sample
            pl.BlockSpec(w1.shape, lambda b: (0, 0)),           # weights stay
            pl.BlockSpec(w2.shape, lambda b: (0, 0)),           #   resident
            pl.BlockSpec(w3.shape, lambda b: (0, 0)),
            pl.BlockSpec(fw1.shape, lambda b: (0, 0)),
            pl.BlockSpec(fw2.shape, lambda b: (0, 0)),
            pl.BlockSpec(vec.shape, lambda b: (0, 0)),
        ],
        out_specs=pl.BlockSpec((None, 1, 1), lambda b: (b, 0, 0)),
        compiler_params=pltpu.CompilerParams(
            dimension_semantics=("parallel",)),                 # both TCs on v7x
    )(xmax, x_l, w1, w2, w3, fw1, fw2, vec)
    return out.reshape(B, 1)


def wf1dcnn3fc2_forward(x, params, *, kernel1=None,
                        weight_dtype=jnp.bfloat16):
    """Compatibility entry point taking raw PyTorch-layout params.

    Prefer prepare_params(...) once + wf1dcnn3fc2_forward_prepared per call.
    `kernel1` is accepted for interface compatibility but derived from shapes.
    """
    del kernel1
    return wf1dcnn3fc2_forward_prepared(x, prepare_params(
        params, weight_dtype=weight_dtype))


# ---------------------------------------------------------------------------
# Deterministic parameter initialization (synthetic; mirrors module shapes)
# ---------------------------------------------------------------------------
def init_params(key, n_point, n_channel, kernel1):
    nPt = (n_point - kernel1 + 1) // kernel1
    nPt = (nPt - 3 + 1) // 2
    nPt = (nPt - 3 + 1) // 2

    ks = iter(jax.random.split(key, 32))

    def nrm(shape, scale):
        return (scale * jax.random.normal(next(ks), shape)).astype(jnp.float32)

    p = {}
    for name, (cout, cin, kk) in (('1', (64, n_channel, kernel1)),
                                  ('2', (128, 64, 3)),
                                  ('3', (256, 128, 3))):
        p[f'conv{name}_w'] = nrm((cout, cin, kk), 0.1)
        p[f'conv{name}_b'] = nrm((cout,), 0.05)
        p[f'bn{name}_gamma'] = 1.0 + nrm((cout,), 0.05)
        p[f'bn{name}_beta'] = nrm((cout,), 0.05)
        p[f'bn{name}_mean'] = nrm((cout,), 0.05)
        p[f'bn{name}_var'] = 1.0 + jnp.abs(nrm((cout,), 0.1))

    p['fc1_w'] = nrm((512, nPt * 256), 0.05)
    p['fc1_b'] = nrm((512,), 0.05)
    p['fc2_w'] = nrm((512, 512), 0.05)
    p['fc2_b'] = nrm((512,), 0.05)
    p['fc3_w'] = nrm((1, 512), 0.05)
    p['fc3_b'] = nrm((1,), 0.05)
    return p, nPt


if __name__ == "__main__":
    B, nCh, nPoint, k1 = 2, 4, 128, 8     # nPt3 = 2 -> fc1 input = 2 * 256

    key = jax.random.PRNGKey(0)
    kx, kp = jax.random.split(key)
    x = jax.random.uniform(kx, (B, nCh, nPoint), dtype=jnp.float32,
                           minval=0.0, maxval=1.0)
    params, _nPt3 = init_params(kp, nPoint, nCh, k1)

    prep = prepare_params(params)         # one-time fold / pack / bf16 cast
    fwd = jax.jit(wf1dcnn3fc2_forward_prepared)
    out = fwd(x, prep)
    jax.block_until_ready(out)
    assert out.shape == (B, 1), out.shape
    print("KERNEL_OK")
</pallas_src>

<mosaic_0001>
module attributes {stable_mosaic.version = 11 : i64} {
  func.func @_wf_kernel(%arg0: i32, %arg1: memref<1x1xf32, #tpu.memory_space<vmem>>, %arg2: memref<1x128x4xf32, #tpu.memory_space<vmem>>, %arg3: memref<32x64xbf16, #tpu.memory_space<vmem>>, %arg4: memref<192x128xbf16, #tpu.memory_space<vmem>>, %arg5: memref<384x256xbf16, #tpu.memory_space<vmem>>, %arg6: memref<512x512xbf16, #tpu.memory_space<vmem>>, %arg7: memref<512x512xbf16, #tpu.memory_space<vmem>>, %arg8: memref<1x2176xf32, #tpu.memory_space<vmem>>, %arg9: memref<1x1x1xf32, #tpu.memory_space<vmem>>) attributes {dimension_semantics = [#tpu.dimension_semantics<parallel>], iteration_bounds = array<i64: 2>, scalar_prefetch = 0 : i64, scratch_operands = 0 : i64, tpu.core_type = #tpu.core_type<tc>, window_params = [{pipeline_mode = #tpu.pipeline_mode<synchronous>, transform_indices = @transform_0, window_bounds = array<i64: 1, 1>}, {transform_indices = @transform_1, window_bounds = array<i64: 1, 128, 4>}, {pipeline_mode = #tpu.pipeline_mode<synchronous>, transform_indices = @transform_2, window_bounds = array<i64: 32, 64>}, {pipeline_mode = #tpu.pipeline_mode<synchronous>, transform_indices = @transform_3, window_bounds = array<i64: 192, 128>}, {pipeline_mode = #tpu.pipeline_mode<synchronous>, transform_indices = @transform_4, window_bounds = array<i64: 384, 256>}, {pipeline_mode = #tpu.pipeline_mode<synchronous>, transform_indices = @transform_5, window_bounds = array<i64: 512, 512>}, {pipeline_mode = #tpu.pipeline_mode<synchronous>, transform_indices = @transform_6, window_bounds = array<i64: 512, 512>}, {pipeline_mode = #tpu.pipeline_mode<synchronous>, transform_indices = @transform_7, window_bounds = array<i64: 1, 2176>}, {transform_indices = @transform_8, window_bounds = array<i64: 1, 1, 1>}]} {
    %c0 = arith.constant 0 : index
    %c0_0 = arith.constant 0 : index
    %0 = vector.load %arg8[%c0, %c0_0] : memref<1x2176xf32, #tpu.memory_space<vmem>>, vector<1x64xf32>
    %c0_1 = arith.constant 0 : index
    %c128 = arith.constant 128 : index
    %1 = vector.load %arg8[%c0_1, %c128] : memref<1x2176xf32, #tpu.memory_space<vmem>>, vector<1x128xf32>
    %c0_2 = arith.constant 0 : index
    %c256 = arith.constant 256 : index
    %2 = vector.load %arg8[%c0_2, %c256] : memref<1x2176xf32, #tpu.memory_space<vmem>>, vector<1x256xf32>
    %c0_3 = arith.constant 0 : index
    %c512 = arith.constant 512 : index
    %3 = vector.load %arg8[%c0_3, %c512] : memref<1x2176xf32, #tpu.memory_space<vmem>>, vector<1x512xf32>
    %c0_4 = arith.constant 0 : index
    %c1024 = arith.constant 1024 : index
    %4 = vector.load %arg8[%c0_4, %c1024] : memref<1x2176xf32, #tpu.memory_space<vmem>>, vector<1x512xf32>
    %c0_5 = arith.constant 0 : index
    %c1536 = arith.constant 1536 : index
    %5 = vector.load %arg8[%c0_5, %c1536] : memref<1x2176xf32, #tpu.memory_space<vmem>>, vector<1x512xf32>
    %c0_6 = arith.constant 0 : index
    %c2048 = arith.constant 2048 : index
    %6 = vector.load %arg8[%c0_6, %c2048] : memref<1x2176xf32, #tpu.memory_space<vmem>>, vector<1x1xf32>
    %c0_7 = arith.constant 0 : index
    %c0_8 = arith.constant 0 : index
    %7 = vector.load %arg1[%c0_7, %c0_8] : memref<1x1xf32, #tpu.memory_space<vmem>>, vector<1x1xf32>
    %8 = tpu.reciprocal %7 : vector<1x1xf32> -> vector<1x1xf32>
    %c0_9 = arith.constant 0 : index
    %c0_10 = arith.constant 0 : index
    %c0_11 = arith.constant 0 : index
    %9 = vector.load %arg2[%c0_9, %c0_10, %c0_11] : memref<1x128x4xf32, #tpu.memory_space<vmem>>, vector<1x128x4xf32>
    %10 = vector.shape_cast %9 : vector<1x128x4xf32> to vector<128x4xf32>
    %11 = vector.broadcast %8 : vector<1x1xf32> to vector<128x4xf32>
    %12 = arith.mulf %10, %11 : vector<128x4xf32>
    %c0_12 = arith.constant 0 : index
    %c0_13 = arith.constant 0 : index
    %13 = vector.load %arg3[%c0_12, %c0_13] : memref<32x64xbf16, #tpu.memory_space<vmem>>, vector<32x64xbf16>
    %14 = vector.extract_strided_slice %12 {offsets = [0, 0], sizes = [121, 4], strides = [1, 1]} : vector<128x4xf32> to vector<121x4xf32>
    %15 = vector.extract_strided_slice %12 {offsets = [1, 0], sizes = [121, 4], strides = [1, 1]} : vector<128x4xf32> to vector<121x4xf32>
    %16 = vector.extract_strided_slice %12 {offsets = [2, 0], sizes = [121, 4], strides = [1, 1]} : vector<128x4xf32> to vector<121x4xf32>
    %17 = vector.extract_strided_slice %12 {offsets = [3, 0], sizes = [121, 4], strides = [1, 1]} : vector<128x4xf32> to vector<121x4xf32>
    %18 = vector.extract_strided_slice %12 {offsets = [4, 0], sizes = [121, 4], strides = [1, 1]} : vector<128x4xf32> to vector<121x4xf32>
    %19 = vector.extract_strided_slice %12 {offsets = [5, 0], sizes = [121, 4], strides = [1, 1]} : vector<128x4xf32> to vector<121x4xf32>
    %20 = vector.extract_strided_slice %12 {offsets = [6, 0], sizes = [121, 4], strides = [1, 1]} : vector<128x4xf32> to vector<121x4xf32>
    %21 = vector.extract_strided_slice %12 {offsets = [7, 0], sizes = [121, 4], strides = [1, 1]} : vector<128x4xf32> to vector<121x4xf32>
    %22 = tpu.concatenate %14, %15, %16, %17, %18, %19, %20, %21 in 1 : vector<121x4xf32>, vector<121x4xf32>, vector<121x4xf32>, vector<121x4xf32>, vector<121x4xf32>, vector<121x4xf32>, vector<121x4xf32>, vector<121x4xf32> -> vector<121x32xf32>
    %23 = arith.truncf %22 : vector<121x32xf32> to vector<121x32xbf16>
    %cst = arith.constant dense<0.000000e+00> : vector<121x64xf32>
    %24 = tpu.matmul %23, %13, %cst {dimension_numbers = #tpu.dot_dimension_numbers<[1], [0], [0], [1], [0, 0, 1, 1], [], []>} : vector<121x32xbf16>, vector<32x64xbf16>, vector<121x64xf32> -> vector<121x64xf32>
    %25 = vector.broadcast %0 : vector<1x64xf32> to vector<121x64xf32>
    %26 = arith.addf %24, %25 : vector<121x64xf32>
    %27 = vector.extract_strided_slice %26 {offsets = [0, 0], sizes = [120, 64], strides = [1, 1]} : vector<121x64xf32> to vector<120x64xf32>
    %28 = vector.shape_cast %27 : vector<120x64xf32> to vector<15x8x64xf32>
    %cst_14 = arith.constant dense<0xFF800000> : vector<15x64xf32>
    %29 = vector.multi_reduction <maximumf>, %28, %cst_14 [1] : vector<15x8x64xf32> to vector<15x64xf32>
    %cst_15 = arith.constant 0.000000e+00 : f32
    %30 = vector.broadcast %cst_15 : f32 to vector<15x64xf32>
    %31 = arith.maximumf %29, %30 : vector<15x64xf32>
    %c0_16 = arith.constant 0 : index
    %c0_17 = arith.constant 0 : index
    %32 = vector.load %arg4[%c0_16, %c0_17] : memref<192x128xbf16, #tpu.memory_space<vmem>>, vector<192x128xbf16>
    %33 = vector.extract_strided_slice %31 {offsets = [0, 0], sizes = [13, 64], strides = [1, 1]} : vector<15x64xf32> to vector<13x64xf32>
    %34 = vector.extract_strided_slice %31 {offsets = [1, 0], sizes = [13, 64], strides = [1, 1]} : vector<15x64xf32> to vector<13x64xf32>
    %35 = vector.extract_strided_slice %31 {offsets = [2, 0], sizes = [13, 64], strides = [1, 1]} : vector<15x64xf32> to vector<13x64xf32>
    %36 = tpu.concatenate %33, %34, %35 in 1 : vector<13x64xf32>, vector<13x64xf32>, vector<13x64xf32> -> vector<13x192xf32>
    %37 = arith.truncf %36 : vector<13x192xf32> to vector<13x192xbf16>
    %cst_18 = arith.constant dense<0.000000e+00> : vector<13x128xf32>
    %38 = tpu.matmul %37, %32, %cst_18 {dimension_numbers = #tpu.dot_dimension_numbers<[1], [0], [0], [1], [0, 0, 1, 1], [], []>} : vector<13x192xbf16>, vector<192x128xbf16>, vector<13x128xf32> -> vector<13x128xf32>
    %39 = vector.broadcast %1 : vector<1x128xf32> to vector<13x128xf32>
    %40 = arith.addf %38, %39 : vector<13x128xf32>
    %41 = vector.extract_strided_slice %40 {offsets = [0, 0], sizes = [12, 128], strides = [1, 1]} : vector<13x128xf32> to vector<12x128xf32>
    %42 = vector.shape_cast %41 : vector<12x128xf32> to vector<6x2x128xf32>
    %cst_19 = arith.constant dense<0xFF800000> : vector<6x128xf32>
    %43 = vector.multi_reduction <maximumf>, %42, %cst_19 [1] : vector<6x2x128xf32> to vector<6x128xf32>
    %cst_20 = arith.constant 0.000000e+00 : f32
    %44 = vector.broadcast %cst_20 : f32 to vector<6x128xf32>
    %45 = arith.maximumf %43, %44 : vector<6x128xf32>
    %c0_21 = arith.constant 0 : index
    %c0_22 = arith.constant 0 : index
    %46 = vector.load %arg5[%c0_21, %c0_22] : memref<384x256xbf16, #tpu.memory_space<vmem>>, vector<384x256xbf16>
    %47 = vector.extract_strided_slice %45 {offsets = [0, 0], sizes = [4, 128], strides = [1, 1]} : vector<6x128xf32> to vector<4x128xf32>
    %48 = vector.extract_strided_slice %45 {offsets = [1, 0], sizes = [4, 128], strides = [1, 1]} : vector<6x128xf32> to vector<4x128xf32>
    %49 = vector.extract_strided_slice %45 {offsets = [2, 0], sizes = [4, 128], strides = [1, 1]} : vector<6x128xf32> to vector<4x128xf32>
    %50 = tpu.concatenate %47, %48, %49 in 1 : vector<4x128xf32>, vector<4x128xf32>, vector<4x128xf32> -> vector<4x384xf32>
    %51 = arith.truncf %50 : vector<4x384xf32> to vector<4x384xbf16>
    %cst_23 = arith.constant dense<0.000000e+00> : vector<4x256xf32>
    %52 = tpu.matmul %51, %46, %cst_23 {dimension_numbers = #tpu.dot_dimension_numbers<[1], [0], [0], [1], [0, 0, 1, 1], [], []>} : vector<4x384xbf16>, vector<384x256xbf16>, vector<4x256xf32> -> vector<4x256xf32>
    %53 = vector.broadcast %2 : vector<1x256xf32> to vector<4x256xf32>
    %54 = arith.addf %52, %53 : vector<4x256xf32>
    %55 = vector.shape_cast %54 : vector<4x256xf32> to vector<2x2x256xf32>
    %cst_24 = arith.constant dense<0xFF800000> : vector<2x256xf32>
    %56 = vector.multi_reduction <maximumf>, %55, %cst_24 [1] : vector<2x2x256xf32> to vector<2x256xf32>
    %cst_25 = arith.constant 0.000000e+00 : f32
    %57 = vector.broadcast %cst_25 : f32 to vector<2x256xf32>
    %58 = arith.maximumf %56, %57 : vector<2x256xf32>
    %59 = vector.shape_cast %58 : vector<2x256xf32> to vector<1x512xf32>
    %60 = arith.truncf %59 : vector<1x512xf32> to vector<1x512xbf16>
    %c0_26 = arith.constant 0 : index
    %c0_27 = arith.constant 0 : index
    %61 = vector.load %arg6[%c0_26, %c0_27] : memref<512x512xbf16, #tpu.memory_space<vmem>>, vector<512x512xbf16>
    %cst_28 = arith.constant dense<0.000000e+00> : vector<1x512xf32>
    %62 = tpu.matmul %60, %61, %cst_28 {dimension_numbers = #tpu.dot_dimension_numbers<[1], [0], [0], [1], [0, 0, 1, 1], [], []>} : vector<1x512xbf16>, vector<512x512xbf16>, vector<1x512xf32> -> vector<1x512xf32>
    %63 = arith.addf %62, %3 : vector<1x512xf32>
    %cst_29 = arith.constant 0.000000e+00 : f32
    %64 = vector.broadcast %cst_29 : f32 to vector<1x512xf32>
    %65 = arith.maximumf %63, %64 : vector<1x512xf32>
    %66 = arith.truncf %65 : vector<1x512xf32> to vector<1x512xbf16>
    %c0_30 = arith.constant 0 : index
    %c0_31 = arith.constant 0 : index
    %67 = vector.load %arg7[%c0_30, %c0_31] : memref<512x512xbf16, #tpu.memory_space<vmem>>, vector<512x512xbf16>
    %cst_32 = arith.constant dense<0.000000e+00> : vector<1x512xf32>
    %68 = tpu.matmul %66, %67, %cst_32 {dimension_numbers = #tpu.dot_dimension_numbers<[1], [0], [0], [1], [0, 0, 1, 1], [], []>} : vector<1x512xbf16>, vector<512x512xbf16>, vector<1x512xf32> -> vector<1x512xf32>
    %69 = arith.addf %68, %4 : vector<1x512xf32>
    %cst_33 = arith.constant 0.000000e+00 : f32
    %70 = vector.broadcast %cst_33 : f32 to vector<1x512xf32>
    %71 = arith.maximumf %69, %70 : vector<1x512xf32>
    %72 = arith.mulf %71, %5 : vector<1x512xf32>
    %cst_34 = arith.constant dense<0.000000e+00> : vector<1xf32>
    %73 = vector.multi_reduction <add>, %72, %cst_34 [1] : vector<1x512xf32> to vector<1xf32>
    %74 = vector.shape_cast %73 : vector<1xf32> to vector<1x1xf32>
    %75 = arith.addf %74, %6 : vector<1x1xf32>
    %c0_35 = arith.constant 0 : index
    %c0_36 = arith.constant 0 : index
    %c0_37 = arith.constant 0 : index
    %76 = vector.load %arg9[%c0_35, %c0_36, %c0_37] : memref<1x1x1xf32, #tpu.memory_space<vmem>>, vector<1x1x1xf32>
    %77 = vector.shape_cast %76 : vector<1x1x1xf32> to vector<1x1xf32>
    %78 = vector.shape_cast %75 : vector<1x1xf32> to vector<1x1x1xf32>
    tpu.vector_store %arg9[%c0_35, %c0_36, %c0_37], %78 {strides = array<i32>} : memref<1x1x1xf32, #tpu.memory_space<vmem>>, vector<1x1x1xf32>,
    return
  }
  func.func @transform_0(%arg0: i32) -> (i32, i32) {
    %c0_i32 = arith.constant 0 : i32
    %c0_i32_0 = arith.constant 0 : i32
    %c0_i32_1 = arith.constant 0 : i32
    return %c0_i32, %c0_i32_0 : i32, i32
  }
  func.func @transform_1(%arg0: i32) -> (i32, i32, i32) {
    %c0_i32 = arith.constant 0 : i32
    %c0_i32_0 = arith.constant 0 : i32
    %c0_i32_1 = arith.constant 0 : i32
    return %arg0, %c0_i32, %c0_i32_0 : i32, i32, i32
  }
  func.func @transform_2(%arg0: i32) -> (i32, i32) {
    %c0_i32 = arith.constant 0 : i32
    %c0_i32_0 = arith.constant 0 : i32
    %c0_i32_1 = arith.constant 0 : i32
    return %c0_i32, %c0_i32_0 : i32, i32
  }
  func.func @transform_3(%arg0: i32) -> (i32, i32) {
    %c0_i32 = arith.constant 0 : i32
    %c0_i32_0 = arith.constant 0 : i32
    %c0_i32_1 = arith.constant 0 : i32
    return %c0_i32, %c0_i32_0 : i32, i32
  }
  func.func @transform_4(%arg0: i32) -> (i32, i32) {
    %c0_i32 = arith.constant 0 : i32
    %c0_i32_0 = arith.constant 0 : i32
    %c0_i32_1 = arith.constant 0 : i32
    return %c0_i32, %c0_i32_0 : i32, i32
  }
  func.func @transform_5(%arg0: i32) -> (i32, i32) {
    %c0_i32 = arith.constant 0 : i32
    %c0_i32_0 = arith.constant 0 : i32
    %c0_i32_1 = arith.constant 0 : i32
    return %c0_i32, %c0_i32_0 : i32, i32
  }
  func.func @transform_6(%arg0: i32) -> (i32, i32) {
    %c0_i32 = arith.constant 0 : i32
    %c0_i32_0 = arith.constant 0 : i32
    %c0_i32_1 = arith.constant 0 : i32
    return %c0_i32, %c0_i32_0 : i32, i32
  }
  func.func @transform_7(%arg0: i32) -> (i32, i32) {
    %c0_i32 = arith.constant 0 : i32
    %c0_i32_0 = arith.constant 0 : i32
    %c0_i32_1 = arith.constant 0 : i32
    return %c0_i32, %c0_i32_0 : i32, i32
  }
  func.func @transform_8(%arg0: i32) -> (i32, i32, i32) {
    %c0_i32 = arith.constant 0 : i32
    %c0_i32_0 = arith.constant 0 : i32
    %c0_i32_1 = arith.constant 0 : i32
    return %arg0, %c0_i32, %c0_i32_0 : i32, i32, i32
  }
}

</mosaic_0001>

<llo_original>
// kernel: wf1dcnn3fc2_forward_prepared.1
$region0: #{wf1dcnn3fc2_forward_prepared.1}
  #allocation0 [shape = 'u32[]', space=smem, size = 0x4, offset = 0x4, fixed_abs, tag = 'smem constant byte address 0x4 - core index']
  #allocation1 [shape = 'u32[144,128]{1,0:T(1,128)}', space=vmem, size = 0x12000, scoped, tag = 'internal scratch']
  #allocation2 [shape = 'f32[1,1]{1,0:T(1,128)S(1)}', space=vmem, size = 0x200, scoped, tag = 'scoped memory for wf1dcnn3fc2_forward_prepared.1']
  %s0 = inlined_call_operand.<no memory space> [shape: f32[1,1], index: 0, kind: input, shape index: {}]
  %s1 = inlined_call_operand.vmem [shape: f32[2,128,4], index: 1, kind: input, shape index: {}]
  %s2 = inlined_call_operand.vmem [shape: bf16[32,64], index: 2, kind: input, shape index: {}]
  %s3 = inlined_call_operand.vmem [shape: bf16[192,128], index: 3, kind: input, shape index: {}]
  %s4 = inlined_call_operand.hbm [shape: bf16[384,256], index: 4, kind: input, shape index: {}]
  %s5 = inlined_call_operand.hbm [shape: bf16[512,512], index: 5, kind: input, shape index: {}]
  %s6 = inlined_call_operand.hbm [shape: bf16[512,512], index: 6, kind: input, shape index: {}]
  %s7 = inlined_call_operand.vmem [shape: f32[1,2176], index: 7, kind: input, shape index: {}]
  %s8 = inlined_call_operand.vmem [shape: f32[2,1,1], index: 8, kind: output, shape index: {}]
  %s9 = sld [smem:[#allocation0]]
  $region77: #{wf1dcnn3fc2_forward_prepared.1} parent=0
    _
  %s11 = ssub.s32 1, %s9
  %s12 = scalar_select 0, %s11, %s9
  %v13 = vstv %s0
  %14 = vst [vmem:[#allocation2] sm:$0x1] %v13
  $region1: #{wf1dcnn3fc2_forward_prepared.1} parent=0
    #allocation3 [shape = 'u8[196608]{0}', space=vmem, size = 0x30000, scoped, tag = 'input window, operand 4, single buffered']
    #allocation4 [shape = 's32[2]{0}', space=sflag, size = 0x8, scoped, tag = 'scoped memory for wf1dcnn3fc2_forward_prepared.1']
    #allocation5 [shape = 'u8[524288]{0}', space=vmem, size = 0x80000, scoped, tag = 'input window, operand 5, single buffered']
    #allocation6 [shape = 's32[1]{0}', space=sflag, size = 0x4, scoped, tag = 'scoped memory for wf1dcnn3fc2_forward_prepared.1']
    #allocation7 [shape = 'u8[524288]{0}', space=vmem, size = 0x80000, scoped, tag = 'input window, operand 6, single buffered']
    %15 = vsyncpa [#allocation4], 0
    %16 = vsyncpa [#allocation6], 0
    loop: start=0, step=1, limit=4
    $region2: #{wf1dcnn3fc2_forward_prepared.1} parent=1 // loop_pre_header
      _
    $region3: #{wf1dcnn3fc2_forward_prepared.1} parent=1 // loop_header
      %s18 = sphi 0, %s22
      %p19 = scmp.ge.s32.totalorder %s18, 4
      %s26 = sphi 0, %s26
      %s28 = sphi 0, %s26
      %s29 = sphi 0, %s28
      %s43 = sphi 0, %s29
      %s49 = sphi 0, %s51
      %s52 = sphi 0, %s49
      %s53 = sphi 0, %s52
      %s69 = sphi 0, %s53
      %s73 = sphi 0, %s73
      %s75 = sphi 0, %s73
      %s76 = sphi 0, %s75
      %s90 = sphi 0, %s76
      %s94 = sphi 0, %s94
      %s96 = sphi 0, %s94
      %s97 = sphi 0, %s96
      %s111 = sphi 0, %s97
      %s115 = sphi 0, %s115
      %s117 = sphi 0, %s115
      %s118 = sphi 0, %s117
      %s132 = sphi 0, %s118
      %s136 = sphi 0, %s136
      %s138 = sphi 0, %s136
      %s139 = sphi 0, %s138
      %s153 = sphi 0, %s139
      %s157 = sphi 0, %s157
      %s159 = sphi 0, %s157
      %s160 = sphi 0, %s159
      %s174 = sphi 0, %s160
      %s178 = sphi 0, %s178
      %s180 = sphi 0, %s178
      %s181 = sphi 0, %s180
      %s195 = sphi 0, %s181
      %s201 = sphi 0, %s203
      %s204 = sphi 0, %s201
      %s205 = sphi 0, %s204
      %s221 = sphi 0, %s205
    $region4: #{wf1dcnn3fc2_forward_prepared.1} parent=1 // loop_header_branch
      %21 = sbr.rel (%p19) target = $region8
    $region5: #{wf1dcnn3fc2_forward_prepared.1} parent=1 // loop_body
      %s23 = ssub.s32 %s18, 1
      %s24 = ssub.s32 %s18, 2
      %s25 = sadd.s32 %s18, 1
      %s27 = sadd.s32 %s26, 1
      %p30 = scmp.eq.s32.totalorder %s18, 1
      %p31 = scmp.ne.s32.totalorder %s26, %s28
      %p32 = scmp.eq.s32.totalorder %s18, 0
      %p33 = por %p31, %p32
      %p34 = scmp.ne.s32.totalorder %s26, %s28
      %p35 = scmp.eq.s32.totalorder %s23, 1
      %p36 = por %p34, %p35
      %p37 = scmp.ne.s32.totalorder %s28, %s29
      %p38 = scmp.eq.s32.totalorder %s23, 0
      %p39 = por %p37, %p38
      %p40 = scmp.ne.s32.totalorder %s28, %s29
      %p41 = scmp.eq.s32.totalorder %s24, 1
      %p42 = por %p40, %p41
      %p44 = scmp.ne.s32.totalorder %s29, %s43
      %p45 = scmp.eq.s32.totalorder %s24, 0
      %p46 = por %p44, %p45
      %s47 = ssub.s32 %s18, %s25
      %p48 = scmp.eq.s32.totalorder %s47, 0
      %s50 = sadd.s32 %s49, 1
      %s51 = scalar_select %p48, %s49, %s50
      %p54 = pneg %p48
      %p55 = scmp.eq.s32.totalorder %s18, 1
      %p56 = por %p54, %p55
      %p57 = scmp.ne.s32.totalorder %s49, %s52
      %p58 = scmp.eq.s32.totalorder %s18, 0
      %p59 = por %p57, %p58
      %p60 = scmp.ne.s32.totalorder %s49, %s52
      %p61 = scmp.eq.s32.totalorder %s23, 1
      %p62 = por %p60, %p61
      %p63 = scmp.ne.s32.totalorder %s52, %s53
      %p64 = scmp.eq.s32.totalorder %s23, 0
      %p65 = por %p63, %p64
      %p66 = scmp.ne.s32.totalorder %s52, %s53
      %p67 = scmp.eq.s32.totalorder %s24, 1
      %p68 = por %p66, %p67
      %p70 = scmp.ne.s32.totalorder %s53, %s69
      %p71 = scmp.eq.s32.totalorder %s24, 0
      %p72 = por %p70, %p71
      %s74 = sadd.s32 %s73, 1
      %p77 = scmp.eq.s32.totalorder %s18, 1
      %p78 = scmp.ne.s32.totalorder %s73, %s75
      %p79 = scmp.eq.s32.totalorder %s18, 0
      %p80 = por %p78, %p79
      %p81 = scmp.ne.s32.totalorder %s73, %s75
      %p82 = scmp.eq.s32.totalorder %s23, 1
      %p83 = por %p81, %p82
      %p84 = scmp.ne.s32.totalorder %s75, %s76
      %p85 = scmp.eq.s32.totalorder %s23, 0
      %p86 = por %p84, %p85
      %p87 = scmp.ne.s32.totalorder %s75, %s76
      %p88 = scmp.eq.s32.totalorder %s24, 1
      %p89 = por %p87, %p88
      %p91 = scmp.ne.s32.totalorder %s76, %s90
      %p92 = scmp.eq.s32.totalorder %s24, 0
      %p93 = por %p91, %p92
      %s95 = sadd.s32 %s94, 1
      %p98 = scmp.eq.s32.totalorder %s18, 1
      %p99 = scmp.ne.s32.totalorder %s94, %s96
      %p100 = scmp.eq.s32.totalorder %s18, 0
      %p101 = por %p99, %p100
      %p102 = scmp.ne.s32.totalorder %s94, %s96
      %p103 = scmp.eq.s32.totalorder %s23, 1
      %p104 = por %p102, %p103
      %p105 = scmp.ne.s32.totalorder %s96, %s97
      %p106 = scmp.eq.s32.totalorder %s23, 0
      %p107 = por %p105, %p106
      %p108 = scmp.ne.s32.totalorder %s96, %s97
      %p109 = scmp.eq.s32.totalorder %s24, 1
      %p110 = por %p108, %p109
      %p112 = scmp.ne.s32.totalorder %s97, %s111
      %p113 = scmp.eq.s32.totalorder %s24, 0
      %p114 = por %p112, %p113
      %s116 = sadd.s32 %s115, 1
      %p119 = scmp.eq.s32.totalorder %s18, 1
      %p120 = scmp.ne.s32.totalorder %s115, %s117
      %p121 = scmp.eq.s32.totalorder %s18, 0
      %p122 = por %p120, %p121
      %p123 = scmp.ne.s32.totalorder %s115, %s117
      %p124 = scmp.eq.s32.totalorder %s23, 1
      %p125 = por %p123, %p124
      %p126 = scmp.ne.s32.totalorder %s117, %s118
      %p127 = scmp.eq.s32.totalorder %s23, 0
      %p128 = por %p126, %p127
      %p129 = scmp.ne.s32.totalorder %s117, %s118
      %p130 = scmp.eq.s32.totalorder %s24, 1
      %p131 = por %p129, %p130
      %p133 = scmp.ne.s32.totalorder %s118, %s132
      %p134 = scmp.eq.s32.totalorder %s24, 0
      %p135 = por %p133, %p134
      %s137 = sadd.s32 %s136, 1
      %p140 = scmp.eq.s32.totalorder %s18, 1
      %p141 = scmp.ne.s32.totalorder %s136, %s138
      %p142 = scmp.eq.s32.totalorder %s18, 0
      %p143 = por %p141, %p142
      %p144 = scmp.ne.s32.totalorder %s136, %s138
      %p145 = scmp.eq.s32.totalorder %s23, 1
      %p146 = por %p144, %p145
      %p147 = scmp.ne.s32.totalorder %s138, %s139
      %p148 = scmp.eq.s32.totalorder %s23, 0
      %p149 = por %p147, %p148
      %p150 = scmp.ne.s32.totalorder %s138, %s139
      %p151 = scmp.eq.s32.totalorder %s24, 1
      %p152 = por %p150, %p151
      %p154 = scmp.ne.s32.totalorder %s139, %s153
      %p155 = scmp.eq.s32.totalorder %s24, 0
      %p156 = por %p154, %p155
      %s158 = sadd.s32 %s157, 1
      %p161 = scmp.eq.s32.totalorder %s18, 1
      %p162 = scmp.ne.s32.totalorder %s157, %s159
      %p163 = scmp.eq.s32.totalorder %s18, 0
      %p164 = por %p162, %p163
      %p165 = scmp.ne.s32.totalorder %s157, %s159
      %p166 = scmp.eq.s32.totalorder %s23, 1
      %p167 = por %p165, %p166
      %p168 = scmp.ne.s32.totalorder %s159, %s160
      %p169 = scmp.eq.s32.totalorder %s23, 0
      %p170 = por %p168, %p169
      %p171 = scmp.ne.s32.totalorder %s159, %s160
      %p172 = scmp.eq.s32.totalorder %s24, 1
      %p173 = por %p171, %p172
      %p175 = scmp.ne.s32.totalorder %s160, %s174
      %p176 = scmp.eq.s32.totalorder %s24, 0
      %p177 = por %p175, %p176
      %s179 = sadd.s32 %s178, 1
      %p182 = scmp.eq.s32.totalorder %s18, 1
      %p183 = scmp.ne.s32.totalorder %s178, %s180
      %p184 = scmp.eq.s32.totalorder %s18, 0
      %p185 = por %p183, %p184
      %p186 = scmp.ne.s32.totalorder %s178, %s180
      %p187 = scmp.eq.s32.totalorder %s23, 1
      %p188 = por %p186, %p187
      %p189 = scmp.ne.s32.totalorder %s180, %s181
      %p190 = scmp.eq.s32.totalorder %s23, 0
      %p191 = por %p189, %p190
      %p192 = scmp.ne.s32.totalorder %s180, %s181
      %p193 = scmp.eq.s32.totalorder %s24, 1
      %p194 = por %p192, %p193
      %p196 = scmp.ne.s32.totalorder %s181, %s195
      %p197 = scmp.eq.s32.totalorder %s24, 0
      %p198 = por %p196, %p197
      %s199 = ssub.s32 %s18, %s25
      %p200 = scmp.eq.s32.totalorder %s199, 0
      %s202 = sadd.s32 %s201, 1
      %s203 = scalar_select %p200, %s201, %s202
      %p206 = pneg %p200
      %p207 = scmp.eq.s32.totalorder %s18, 1
      %p208 = por %p206, %p207
      %p209 = scmp.ne.s32.totalorder %s201, %s204
      %p210 = scmp.eq.s32.totalorder %s18, 0
      %p211 = por %p209, %p210
      %p212 = scmp.ne.s32.totalorder %s201, %s204
      %p213 = scmp.eq.s32.totalorder %s23, 1
      %p214 = por %p212, %p213
      %p215 = scmp.ne.s32.totalorder %s204, %s205
      %p216 = scmp.eq.s32.totalorder %s23, 0
      %p217 = por %p215, %p216
      %p218 = scmp.ne.s32.totalorder %s204, %s205
      %p219 = scmp.eq.s32.totalorder %s24, 1
      %p220 = por %p218, %p219
      %p222 = scmp.ne.s32.totalorder %s205, %s221
      %p223 = scmp.eq.s32.totalorder %s24, 0
      %p224 = por %p222, %p223
      %p225 = scmp.le.s32.totalorder 1, %s18
      %p226 = scmp.lt.s32.totalorder %s18, 3
      %p227 = pnand %p225, %p226
      %p228 = pneg %p227
      // Predicated region
      $region9: #{wf1dcnn3fc2_forward_prepared.1} parent=5 // pred_check
        _
      $region10: #{wf1dcnn3fc2_forward_prepared.1} parent=5 // pred_check_branch
        %230 = sbr.rel (%p227) target = $region12
      $region11: #{wf1dcnn3fc2_forward_prepared.1} parent=5 // pred_region
        %s231 = ssub.s32 %s18, 1
        // Predicated region
        $region13: #{wf1dcnn3fc2_forward_prepared.1} parent=11 // pred_check
          %p232 = pneg %p39
        $region14: #{wf1dcnn3fc2_forward_prepared.1} parent=11 // pred_check_branch
          %234 = sbr.rel (%p232) target = $region16
        $region15: #{wf1dcnn3fc2_forward_prepared.1} parent=11 // pred_region
          _
        $region16: #{wf1dcnn3fc2_forward_prepared.1} parent=11 // pred_fallthru
          _
        // Predicated region
        $region17: #{wf1dcnn3fc2_forward_prepared.1} parent=11 // pred_check
          %p235 = pneg %p86
        $region18: #{wf1dcnn3fc2_forward_prepared.1} parent=11 // pred_check_branch
          %237 = sbr.rel (%p235) target = $region20
        $region19: #{wf1dcnn3fc2_forward_prepared.1} parent=11 // pred_region
          _
        $region20: #{wf1dcnn3fc2_forward_prepared.1} parent=11 // pred_fallthru
          _
        // Predicated region
        $region21: #{wf1dcnn3fc2_forward_prepared.1} parent=11 // pred_check
          %p238 = pneg %p107
        $region22: #{wf1dcnn3fc2_forward_prepared.1} parent=11 // pred_check_branch
          %240 = sbr.rel (%p238) target = $region24
        $region23: #{wf1dcnn3fc2_forward_prepared.1} parent=11 // pred_region
          _
        $region24: #{wf1dcnn3fc2_forward_prepared.1} parent=11 // pred_fallthru
          _
        // Predicated region
        $region25: #{wf1dcnn3fc2_forward_prepared.1} parent=11 // pred_check
          %p241 = pneg %p128
        $region26: #{wf1dcnn3fc2_forward_prepared.1} parent=11 // pred_check_branch
          %243 = sbr.rel (%p241) target = $region28
        $region27: #{wf1dcnn3fc2_forward_prepared.1} parent=11 // pred_region
          %s245 = ssub.s32 6144, 6144
          %246 = vsyncadd [#allocation4], %s245
          %s247 = sshll.u32 [#allocation3], 4
          %s248 = int_to_ptr.vmem [resolvable:$true] %s247
          %253 = dma.hbm_to_vmem [thread:$0]  %s4, 6144, %s248, [#allocation4], 128, 128, 8
        $region28: #{wf1dcnn3fc2_forward_prepared.1} parent=11 // pred_fallthru
          _
        // Predicated region
        $region29: #{wf1dcnn3fc2_forward_prepared.1} parent=11 // pred_check
          %p254 = pneg %p149
        $region30: #{wf1dcnn3fc2_forward_prepared.1} parent=11 // pred_check_branch
          %256 = sbr.rel (%p254) target = $region32
        $region31: #{wf1dcnn3fc2_forward_prepared.1} parent=11 // pred_region
          %s258 = ssub.s32 16384, 16384
          %259 = vsyncadd [#allocation6], %s258
          %s260 = sshll.u32 [#allocation5], 4
          %s261 = int_to_ptr.vmem [resolvable:$true] %s260
          %266 = dma.hbm_to_vmem [thread:$0]  %s5, 16384, %s261, [#allocation6], 256, 256, 16
        $region32: #{wf1dcnn3fc2_forward_prepared.1} parent=11 // pred_fallthru
          _
        // Predicated region
        $region33: #{wf1dcnn3fc2_forward_prepared.1} parent=11 // pred_check
          %p267 = pneg %p170
        $region34: #{wf1dcnn3fc2_forward_prepared.1} parent=11 // pred_check_branch
          %269 = sbr.rel (%p267) target = $region36
        $region35: #{wf1dcnn3fc2_forward_prepared.1} parent=11 // pred_region
          %s271 = ssub.s32 16384, 16384
          %272 = vsyncadd [#allocation6], %s271
          %s273 = sshll.u32 [#allocation7], 4
          %s274 = int_to_ptr.vmem [resolvable:$true] %s273
          %279 = dma.hbm_to_vmem [thread:$0]  %s6, 16384, %s274, [#allocation6], 256, 256, 16
        $region36: #{wf1dcnn3fc2_forward_prepared.1} parent=11 // pred_fallthru
          _
        // Predicated region
        $region37: #{wf1dcnn3fc2_forward_prepared.1} parent=11 // pred_check
          %p280 = pneg %p191
        $region38: #{wf1dcnn3fc2_forward_prepared.1} parent=11 // pred_check_branch
          %282 = sbr.rel (%p280) target = $region40
        $region39: #{wf1dcnn3fc2_forward_prepared.1} parent=11 // pred_region
          _
        $region40: #{wf1dcnn3fc2_forward_prepared.1} parent=11 // pred_fallthru
          _
      $region12: #{wf1dcnn3fc2_forward_prepared.1} parent=5 // pred_fallthru
        _
      %p283 = scmp.lt.s32.totalorder %s18, 2
      // Predicated region
      $region41: #{wf1dcnn3fc2_forward_prepared.1} parent=5 // pred_check
        %p284 = pneg %p283
      $region42: #{wf1dcnn3fc2_forward_prepared.1} parent=5 // pred_check_branch
        %286 = sbr.rel (%p284) target = $region44
      $region43: #{wf1dcnn3fc2_forward_prepared.1} parent=5 // pred_region
        // Predicated region
        $region45: #{wf1dcnn3fc2_forward_prepared.1} parent=43 // pred_check
          %p287 = pneg %p59
        $region46: #{wf1dcnn3fc2_forward_prepared.1} parent=43 // pred_check_branch
          %289 = sbr.rel (%p287) target = $region48
        $region47: #{wf1dcnn3fc2_forward_prepared.1} parent=43 // pred_region
          %p290 = scmp.lt.s32.totalorder %s18, 1
          %s291 = scalar_select %p290, %s18, 1
          %s292 = smul.addr %s291, 16
          %s293 = smul.addr %s292, 8
          %s294 = scalar_lea.vmem %s1, %s293
        $region48: #{wf1dcnn3fc2_forward_prepared.1} parent=43 // pred_fallthru
          _
      $region44: #{wf1dcnn3fc2_forward_prepared.1} parent=5 // pred_fallthru
        _
      %p295 = scmp.le.s32.totalorder 1, %s18
      %p296 = scmp.lt.s32.totalorder %s18, 3
      %p297 = pnand %p295, %p296
      %p298 = pneg %p297
      // Predicated region
      $region49: #{wf1dcnn3fc2_forward_prepared.1} parent=5 // pred_check
        _
      $region50: #{wf1dcnn3fc2_forward_prepared.1} parent=5 // pred_check_branch
        %300 = sbr.rel (%p297) target = $region52
      $region51: #{wf1dcnn3fc2_forward_prepared.1} parent=5 // pred_region
        %s301 = ssub.s32 %s18, 1
        // Predicated region
        $region53: #{wf1dcnn3fc2_forward_prepared.1} parent=51 // pred_check
          %p302 = pneg %p128
        $region54: #{wf1dcnn3fc2_forward_prepared.1} parent=51 // pred_check_branch
          %304 = sbr.rel (%p302) target = $region56
        $region55: #{wf1dcnn3fc2_forward_prepared.1} parent=51 // pred_region
          %305 = dma.done [#allocation4], 6144
        $region56: #{wf1dcnn3fc2_forward_prepared.1} parent=51 // pred_fallthru
          _
        // Predicated region
        $region57: #{wf1dcnn3fc2_forward_prepared.1} parent=51 // pred_check
          %p306 = pneg %p149
        $region58: #{wf1dcnn3fc2_forward_prepared.1} parent=51 // pred_check_branch
          %308 = sbr.rel (%p306) target = $region60
        $region59: #{wf1dcnn3fc2_forward_prepared.1} parent=51 // pred_region
          %309 = dma.done [#allocation6], 16384
        $region60: #{wf1dcnn3fc2_forward_prepared.1} parent=51 // pred_fallthru
          _
        // Predicated region
        $region61: #{wf1dcnn3fc2_forward_prepared.1} parent=51 // pred_check
          %p310 = pneg %p170
        $region62: #{wf1dcnn3fc2_forward_prepared.1} parent=51 // pred_check_branch
          %312 = sbr.rel (%p310) target = $region64
        $region63: #{wf1dcnn3fc2_forward_prepared.1} parent=51 // pred_region
          %313 = dma.done [#allocation6], 16384
        $region64: #{wf1dcnn3fc2_forward_prepared.1} parent=51 // pred_fallthru
          _
        %p314 = pneg %p39
        %p315 = pneg %p36
        %p316 = scmp.lt.s32.totalorder %s23, 1
        %s317 = scalar_select %p316, %s23, 1
        %s318 = smul.addr %s317, 16
        %s319 = smul.addr %s318, 8
        %s320 = scalar_lea.vmem %s1, %s319
        %p321 = pneg %p65
        %p322 = pneg %p62
        %p323 = pneg %p86
        %p324 = pneg %p83
        %p325 = pneg %p107
        %p326 = pneg %p104
        %p327 = pneg %p128
        %p328 = pneg %p125
        %p329 = pneg %p149
        %p330 = pneg %p146
        %p331 = pneg %p170
        %p332 = pneg %p167
        %p333 = pneg %p191
        %p334 = pneg %p188
        %p335 = pneg %p217
        %p336 = pneg %p214
        %p337 = scmp.lt.s32.totalorder %s23, 1
        %s338 = scalar_select %p337, %s23, 1
        %s339 = scalar_lea.vmem %s8, %s338
        %p340 = scmp.lt.s32.totalorder %s23, 1
        %s341 = scalar_select %p340, %s23, 1
        %s342 = smul.addr %s341, 16
        %s343 = smul.addr %s342, 8
        %s344 = scalar_lea.vmem %s1, %s343
        %p345 = scmp.lt.s32.totalorder %s23, 1
        %s346 = scalar_select %p345, %s23, 1
        %s347 = scalar_lea.vmem %s8, %s346
        %v349 = vld [vmem:[%s7] sm:$0x1]
        %v350 = vld [vmem:[%s7 + $0x1] sm:$0x1]
        %v351 = vld [vmem:[%s7 + $0x2] sm:$0x3]
        %v352 = vld [vmem:[%s7 + $0x4] sm:$0xf]
        %v353 = vld [vmem:[%s7 + $0x8] sm:$0xf]
        %v354 = vld [vmem:[%s7 + $0xc] sm:$0xf]
        %v355 = vld [vmem:[%s7 + $0x10] sm:$0x1]
        %v356 = vld [vmem:[#allocation2] sm:$0x1]
        %v357 = vrcp.pop %v356
        %v358 = vld [vmem:[%s344] sm:$0xff]
        %v359 = vld [vmem:[%s344 + $0x8] sm:$0xff]
        %v360 = vld [vmem:[%s344 + $0x10] sm:$0xff]
        %v361 = vld [vmem:[%s344 + $0x18] sm:$0xff]
        %v362 = vld [vmem:[%s344 + $0x20] sm:$0xff]
        %v363 = vld [vmem:[%s344 + $0x28] sm:$0xff]
        %v364 = vld [vmem:[%s344 + $0x30] sm:$0xff]
        %v365 = vld [vmem:[%s344 + $0x38] sm:$0xff]
        %v366 = vld [vmem:[%s344 + $0x40] sm:$0xff]
        %v367 = vld [vmem:[%s344 + $0x48] sm:$0xff]
        %v368 = vld [vmem:[%s344 + $0x50] sm:$0xff]
        %v369 = vld [vmem:[%s344 + $0x58] sm:$0xff]
        %v370 = vld [vmem:[%s344 + $0x60] sm:$0xff]
        %v371 = vld [vmem:[%s344 + $0x68] sm:$0xff]
        %v372 = vld [vmem:[%s344 + $0x70] sm:$0xff]
        %v373 = vld [vmem:[%s344 + $0x78] sm:$0xff]
        %v375 = vlaneseq
        %v376 = vshrl.u32 %v375, 7
        %v377 = vsub.s32 0, %v376
        %v378 = vrot.slane %v357, %v377
        %379 = vset.pattern.permute.xlu0 0
        %380 = vperm.xlu0 %379, %v378
        %v381 = vpop.permute.xlu0 %380
        %v383 = vmul.f32 %v358, %v381
        %v384 = vmul.f32 %v359, %v381
        %v385 = vmul.f32 %v360, %v381
        %v386 = vmul.f32 %v361, %v381
        %v387 = vmul.f32 %v362, %v381
        %v388 = vmul.f32 %v363, %v381
        %v389 = vmul.f32 %v364, %v381
        %v390 = vmul.f32 %v365, %v381
        %v391 = vmul.f32 %v366, %v381
        %v392 = vmul.f32 %v367, %v381
        %v393 = vmul.f32 %v368, %v381
        %v394 = vmul.f32 %v369, %v381
        %v395 = vmul.f32 %v370, %v381
        %v396 = vmul.f32 %v371, %v381
        %v397 = vmul.f32 %v372, %v381
        %v398 = vmul.f32 %v373, %v381
        %v399 = vld [vmem:[%s2] sm:$0xf]
        %v400 = vld [vmem:[%s2 + $0x4] sm:$0xf]
        %v401 = vld [vmem:[%s2 + $0x8] sm:$0xf]
        %v402 = vld [vmem:[%s2 + $0xc] sm:$0xf]
        %vm419 = vcmask 1046528
        %v420 = vrot.slane %v383, 1
        %v421 = vrot.slane %v384, 1
        %v422 = vsel %vm419, %v420, %v421
        %v423 = vrot.slane %v385, 1
        %v424 = vsel %vm419, %v421, %v423
        %v425 = vrot.slane %v386, 1
        %v426 = vsel %vm419, %v423, %v425
        %v427 = vrot.slane %v387, 1
        %v428 = vsel %vm419, %v425, %v427
        %v429 = vrot.slane %v388, 1
        %v430 = vsel %vm419, %v427, %v429
        %v431 = vrot.slane %v389, 1
        %v432 = vsel %vm419, %v429, %v431
        %v433 = vrot.slane %v390, 1
        %v434 = vsel %vm419, %v431, %v433
        %v435 = vrot.slane %v391, 1
        %v436 = vsel %vm419, %v433, %v435
        %v437 = vrot.slane %v392, 1
        %v438 = vsel %vm419, %v435, %v437
        %v439 = vrot.slane %v393, 1
        %v440 = vsel %vm419, %v437, %v439
        %v441 = vrot.slane %v394, 1
        %v442 = vsel %vm419, %v439, %v441
        %v443 = vrot.slane %v395, 1
        %v444 = vsel %vm419, %v441, %v443
        %v445 = vrot.slane %v396, 1
        %v446 = vsel %vm419, %v443, %v445
        %v447 = vrot.slane %v397, 1
        %v448 = vsel %vm419, %v445, %v447
        %v449 = vrot.slane %v398, 1
        %v450 = vsel %vm419, %v447, %v449
        %451 = vrot.lane.b32.xlu0 %v422, 4
        %v452 = vpop.permute.xlu0 %451
        %453 = vrot.lane.b32.xlu0 %v424, 4
        %v454 = vpop.permute.xlu0 %453
        %455 = vrot.lane.b32.xlu0 %v426, 4
        %v456 = vpop.permute.xlu0 %455
        %457 = vrot.lane.b32.xlu0 %v428, 4
        %v458 = vpop.permute.xlu0 %457
        %459 = vrot.lane.b32.xlu0 %v430, 4
        %v460 = vpop.permute.xlu0 %459
        %461 = vrot.lane.b32.xlu0 %v432, 4
        %v462 = vpop.permute.xlu0 %461
        %463 = vrot.lane.b32.xlu0 %v434, 4
        %v464 = vpop.permute.xlu0 %463
        %465 = vrot.lane.b32.xlu0 %v436, 4
        %v466 = vpop.permute.xlu0 %465
        %467 = vrot.lane.b32.xlu0 %v438, 4
        %v468 = vpop.permute.xlu0 %467
        %469 = vrot.lane.b32.xlu0 %v440, 4
        %v470 = vpop.permute.xlu0 %469
        %471 = vrot.lane.b32.xlu0 %v442, 4
        %v472 = vpop.permute.xlu0 %471
        %473 = vrot.lane.b32.xlu0 %v444, 4
        %v474 = vpop.permute.xlu0 %473
        %475 = vrot.lane.b32.xlu0 %v446, 4
        %v476 = vpop.permute.xlu0 %475
        %477 = vrot.lane.b32.xlu0 %v448, 4
        %v478 = vpop.permute.xlu0 %477
        %479 = vrot.lane.b32.xlu0 %v450, 4
        %v480 = vpop.permute.xlu0 %479
        %481 = vrot.lane.b32.xlu0 %v449, 4
        %v482 = vpop.permute.xlu0 %481
        %vm499 = vcmask 1045504
        %v500 = vrot.slane %v383, 2
        %v501 = vrot.slane %v384, 2
        %v502 = vsel %vm499, %v500, %v501
        %v503 = vrot.slane %v385, 2
        %v504 = vsel %vm499, %v501, %v503
        %v505 = vrot.slane %v386, 2
        %v506 = vsel %vm499, %v503, %v505
        %v507 = vrot.slane %v387, 2
        %v508 = vsel %vm499, %v505, %v507
        %v509 = vrot.slane %v388, 2
        %v510 = vsel %vm499, %v507, %v509
        %v511 = vrot.slane %v389, 2
        %v512 = vsel %vm499, %v509, %v511
        %v513 = vrot.slane %v390, 2
        %v514 = vsel %vm499, %v511, %v513
        %v515 = vrot.slane %v391, 2
        %v516 = vsel %vm499, %v513, %v515
        %v517 = vrot.slane %v392, 2
        %v518 = vsel %vm499, %v515, %v517
        %v519 = vrot.slane %v393, 2
        %v520 = vsel %vm499, %v517, %v519
        %v521 = vrot.slane %v394, 2
        %v522 = vsel %vm499, %v519, %v521
        %v523 = vrot.slane %v395, 2
        %v524 = vsel %vm499, %v521, %v523
        %v525 = vrot.slane %v396, 2
        %v526 = vsel %vm499, %v523, %v525
        %v527 = vrot.slane %v397, 2
        %v528 = vsel %vm499, %v525, %v527
        %v529 = vrot.slane %v398, 2
        %v530 = vsel %vm499, %v527, %v529
        %531 = vrot.lane.b32.xlu0 %v502, 8
        %v532 = vpop.permute.xlu0 %531
        %533 = vrot.lane.b32.xlu0 %v504, 8
        %v534 = vpop.permute.xlu0 %533
        %535 = vrot.lane.b32.xlu0 %v506, 8
        %v536 = vpop.permute.xlu0 %535
        %537 = vrot.lane.b32.xlu0 %v508, 8
        %v538 = vpop.permute.xlu0 %537
        %539 = vrot.lane.b32.xlu0 %v510, 8
        %v540 = vpop.permute.xlu0 %539
        %541 = vrot.lane.b32.xlu0 %v512, 8
        %v542 = vpop.permute.xlu0 %541
        %543 = vrot.lane.b32.xlu0 %v514, 8
        %v544 = vpop.permute.xlu0 %543
        %545 = vrot.lane.b32.xlu0 %v516, 8
        %v546 = vpop.permute.xlu0 %545
        %547 = vrot.lane.b32.xlu0 %v518, 8
        %v548 = vpop.permute.xlu0 %547
        %549 = vrot.lane.b32.xlu0 %v520, 8
        %v550 = vpop.permute.xlu0 %549
        %551 = vrot.lane.b32.xlu0 %v522, 8
        %v552 = vpop.permute.xlu0 %551
        %553 = vrot.lane.b32.xlu0 %v524, 8
        %v554 = vpop.permute.xlu0 %553
        %555 = vrot.lane.b32.xlu0 %v526, 8
        %v556 = vpop.permute.xlu0 %555
        %557 = vrot.lane.b32.xlu0 %v528, 8
        %v558 = vpop.permute.xlu0 %557
        %559 = vrot.lane.b32.xlu0 %v530, 8
        %v560 = vpop.permute.xlu0 %559
        %561 = vrot.lane.b32.xlu0 %v529, 8
        %v562 = vpop.permute.xlu0 %561
        %vm579 = vcmask 1044480
        %v580 = vrot.slane %v383, 3
        %v581 = vrot.slane %v384, 3
        %v582 = vsel %vm579, %v580, %v581
        %v583 = vrot.slane %v385, 3
        %v584 = vsel %vm579, %v581, %v583
        %v585 = vrot.slane %v386, 3
        %v586 = vsel %vm579, %v583, %v585
        %v587 = vrot.slane %v387, 3
        %v588 = vsel %vm579, %v585, %v587
        %v589 = vrot.slane %v388, 3
        %v590 = vsel %vm579, %v587, %v589
        %v591 = vrot.slane %v389, 3
        %v592 = vsel %vm579, %v589, %v591
        %v593 = vrot.slane %v390, 3
        %v594 = vsel %vm579, %v591, %v593
        %v595 = vrot.slane %v391, 3
        %v596 = vsel %vm579, %v593, %v595
        %v597 = vrot.slane %v392, 3
        %v598 = vsel %vm579, %v595, %v597
        %v599 = vrot.slane %v393, 3
        %v600 = vsel %vm579, %v597, %v599
        %v601 = vrot.slane %v394, 3
        %v602 = vsel %vm579, %v599, %v601
        %v603 = vrot.slane %v395, 3
        %v604 = vsel %vm579, %v601, %v603
        %v605 = vrot.slane %v396, 3
        %v606 = vsel %vm579, %v603, %v605
        %v607 = vrot.slane %v397, 3
        %v608 = vsel %vm579, %v605, %v607
        %v609 = vrot.slane %v398, 3
        %v610 = vsel %vm579, %v607, %v609
        %611 = vrot.lane.b32.xlu0 %v582, 12
        %v612 = vpop.permute.xlu0 %611
        %613 = vrot.lane.b32.xlu0 %v584, 12
        %v614 = vpop.permute.xlu0 %613
        %615 = vrot.lane.b32.xlu0 %v586, 12
        %v616 = vpop.permute.xlu0 %615
        %617 = vrot.lane.b32.xlu0 %v588, 12
        %v618 = vpop.permute.xlu0 %617
        %619 = vrot.lane.b32.xlu0 %v590, 12
        %v620 = vpop.permute.xlu0 %619
        %621 = vrot.lane.b32.xlu0 %v592, 12
        %v622 = vpop.permute.xlu0 %621
        %623 = vrot.lane.b32.xlu0 %v594, 12
        %v624 = vpop.permute.xlu0 %623
        %625 = vrot.lane.b32.xlu0 %v596, 12
        %v626 = vpop.permute.xlu0 %625
        %627 = vrot.lane.b32.xlu0 %v598, 12
        %v628 = vpop.permute.xlu0 %627
        %629 = vrot.lane.b32.xlu0 %v600, 12
        %v630 = vpop.permute.xlu0 %629
        %631 = vrot.lane.b32.xlu0 %v602, 12
        %v632 = vpop.permute.xlu0 %631
        %633 = vrot.lane.b32.xlu0 %v604, 12
        %v634 = vpop.permute.xlu0 %633
        %635 = vrot.lane.b32.xlu0 %v606, 12
        %v636 = vpop.permute.xlu0 %635
        %637 = vrot.lane.b32.xlu0 %v608, 12
        %v638 = vpop.permute.xlu0 %637
        %639 = vrot.lane.b32.xlu0 %v610, 12
        %v640 = vpop.permute.xlu0 %639
        %641 = vrot.lane.b32.xlu0 %v609, 12
        %v642 = vpop.permute.xlu0 %641
        %vm659 = vcmask 1043456
        %v660 = vrot.slane %v383, 4
        %v661 = vrot.slane %v384, 4
        %v662 = vsel %vm659, %v660, %v661
        %v663 = vrot.slane %v385, 4
        %v664 = vsel %vm659, %v661, %v663
        %v665 = vrot.slane %v386, 4
        %v666 = vsel %vm659, %v663, %v665
        %v667 = vrot.slane %v387, 4
        %v668 = vsel %vm659, %v665, %v667
        %v669 = vrot.slane %v388, 4
        %v670 = vsel %vm659, %v667, %v669
        %v671 = vrot.slane %v389, 4
        %v672 = vsel %vm659, %v669, %v671
        %v673 = vrot.slane %v390, 4
        %v674 = vsel %vm659, %v671, %v673
        %v675 = vrot.slane %v391, 4
        %v676 = vsel %vm659, %v673, %v675
        %v677 = vrot.slane %v392, 4
        %v678 = vsel %vm659, %v675, %v677
        %v679 = vrot.slane %v393, 4
        %v680 = vsel %vm659, %v677, %v679
        %v681 = vrot.slane %v394, 4
        %v682 = vsel %vm659, %v679, %v681
        %v683 = vrot.slane %v395, 4
        %v684 = vsel %vm659, %v681, %v683
        %v685 = vrot.slane %v396, 4
        %v686 = vsel %vm659, %v683, %v685
        %v687 = vrot.slane %v397, 4
        %v688 = vsel %vm659, %v685, %v687
        %v689 = vrot.slane %v398, 4
        %v690 = vsel %vm659, %v687, %v689
        %691 = vrot.lane.b32.xlu0 %v662, 16
        %v692 = vpop.permute.xlu0 %691
        %693 = vrot.lane.b32.xlu0 %v664, 16
        %v694 = vpop.permute.xlu0 %693
        %695 = vrot.lane.b32.xlu0 %v666, 16
        %v696 = vpop.permute.xlu0 %695
        %697 = vrot.lane.b32.xlu0 %v668, 16
        %v698 = vpop.permute.xlu0 %697
        %699 = vrot.lane.b32.xlu0 %v670, 16
        %v700 = vpop.permute.xlu0 %699
        %701 = vrot.lane.b32.xlu0 %v672, 16
        %v702 = vpop.permute.xlu0 %701
        %703 = vrot.lane.b32.xlu0 %v674, 16
        %v704 = vpop.permute.xlu0 %703
        %705 = vrot.lane.b32.xlu0 %v676, 16
        %v706 = vpop.permute.xlu0 %705
        %707 = vrot.lane.b32.xlu0 %v678, 16
        %v708 = vpop.permute.xlu0 %707
        %709 = vrot.lane.b32.xlu0 %v680, 16
        %v710 = vpop.permute.xlu0 %709
        %711 = vrot.lane.b32.xlu0 %v682, 16
        %v712 = vpop.permute.xlu0 %711
        %713 = vrot.lane.b32.xlu0 %v684, 16
        %v714 = vpop.permute.xlu0 %713
        %715 = vrot.lane.b32.xlu0 %v686, 16
        %v716 = vpop.permute.xlu0 %715
        %717 = vrot.lane.b32.xlu0 %v688, 16
        %v718 = vpop.permute.xlu0 %717
        %719 = vrot.lane.b32.xlu0 %v690, 16
        %v720 = vpop.permute.xlu0 %719
        %721 = vrot.lane.b32.xlu0 %v689, 16
        %v722 = vpop.permute.xlu0 %721
        %vm739 = vcmask 1042432
        %v740 = vrot.slane %v383, 5
        %v741 = vrot.slane %v384, 5
        %v742 = vsel %vm739, %v740, %v741
        %v743 = vrot.slane %v385, 5
        %v744 = vsel %vm739, %v741, %v743
        %v745 = vrot.slane %v386, 5
        %v746 = vsel %vm739, %v743, %v745
        %v747 = vrot.slane %v387, 5
        %v748 = vsel %vm739, %v745, %v747
        %v749 = vrot.slane %v388, 5
        %v750 = vsel %vm739, %v747, %v749
        %v751 = vrot.slane %v389, 5
        %v752 = vsel %vm739, %v749, %v751
        %v753 = vrot.slane %v390, 5
        %v754 = vsel %vm739, %v751, %v753
        %v755 = vrot.slane %v391, 5
        %v756 = vsel %vm739, %v753, %v755
        %v757 = vrot.slane %v392, 5
        %v758 = vsel %vm739, %v755, %v757
        %v759 = vrot.slane %v393, 5
        %v760 = vsel %vm739, %v757, %v759
        %v761 = vrot.slane %v394, 5
        %v762 = vsel %vm739, %v759, %v761
        %v763 = vrot.slane %v395, 5
        %v764 = vsel %vm739, %v761, %v763
        %v765 = vrot.slane %v396, 5
        %v766 = vsel %vm739, %v763, %v765
        %v767 = vrot.slane %v397, 5
        %v768 = vsel %vm739, %v765, %v767
        %v769 = vrot.slane %v398, 5
        %v770 = vsel %vm739, %v767, %v769
        %771 = vrot.lane.b32.xlu0 %v742, 20
        %v772 = vpop.permute.xlu0 %771
        %773 = vrot.lane.b32.xlu0 %v744, 20
        %v774 = vpop.permute.xlu0 %773
        %775 = vrot.lane.b32.xlu0 %v746, 20
        %v776 = vpop.permute.xlu0 %775
        %777 = vrot.lane.b32.xlu0 %v748, 20
        %v778 = vpop.permute.xlu0 %777
        %779 = vrot.lane.b32.xlu0 %v750, 20
        %v780 = vpop.permute.xlu0 %779
        %781 = vrot.lane.b32.xlu0 %v752, 20
        %v782 = vpop.permute.xlu0 %781
        %783 = vrot.lane.b32.xlu0 %v754, 20
        %v784 = vpop.permute.xlu0 %783
        %785 = vrot.lane.b32.xlu0 %v756, 20
        %v786 = vpop.permute.xlu0 %785
        %787 = vrot.lane.b32.xlu0 %v758, 20
        %v788 = vpop.permute.xlu0 %787
        %789 = vrot.lane.b32.xlu0 %v760, 20
        %v790 = vpop.permute.xlu0 %789
        %791 = vrot.lane.b32.xlu0 %v762, 20
        %v792 = vpop.permute.xlu0 %791
        %793 = vrot.lane.b32.xlu0 %v764, 20
        %v794 = vpop.permute.xlu0 %793
        %795 = vrot.lane.b32.xlu0 %v766, 20
        %v796 = vpop.permute.xlu0 %795
        %797 = vrot.lane.b32.xlu0 %v768, 20
        %v798 = vpop.permute.xlu0 %797
        %799 = vrot.lane.b32.xlu0 %v770, 20
        %v800 = vpop.permute.xlu0 %799
        %801 = vrot.lane.b32.xlu0 %v769, 20
        %v802 = vpop.permute.xlu0 %801
        %vm819 = vcmask 1041408
        %v820 = vrot.slane %v383, 6
        %v821 = vrot.slane %v384, 6
        %v822 = vsel %vm819, %v820, %v821
        %v823 = vrot.slane %v385, 6
        %v824 = vsel %vm819, %v821, %v823
        %v825 = vrot.slane %v386, 6
        %v826 = vsel %vm819, %v823, %v825
        %v827 = vrot.slane %v387, 6
        %v828 = vsel %vm819, %v825, %v827
        %v829 = vrot.slane %v388, 6
        %v830 = vsel %vm819, %v827, %v829
        %v831 = vrot.slane %v389, 6
        %v832 = vsel %vm819, %v829, %v831
        %v833 = vrot.slane %v390, 6
        %v834 = vsel %vm819, %v831, %v833
        %v835 = vrot.slane %v391, 6
        %v836 = vsel %vm819, %v833, %v835
        %v837 = vrot.slane %v392, 6
        %v838 = vsel %vm819, %v835, %v837
        %v839 = vrot.slane %v393, 6
        %v840 = vsel %vm819, %v837, %v839
        %v841 = vrot.slane %v394, 6
        %v842 = vsel %vm819, %v839, %v841
        %v843 = vrot.slane %v395, 6
        %v844 = vsel %vm819, %v841, %v843
        %v845 = vrot.slane %v396, 6
        %v846 = vsel %vm819, %v843, %v845
        %v847 = vrot.slane %v397, 6
        %v848 = vsel %vm819, %v845, %v847
        %v849 = vrot.slane %v398, 6
        %v850 = vsel %vm819, %v847, %v849
        %851 = vrot.lane.b32.xlu0 %v822, 24
        %v852 = vpop.permute.xlu0 %851
        %853 = vrot.lane.b32.xlu0 %v824, 24
        %v854 = vpop.permute.xlu0 %853
        %855 = vrot.lane.b32.xlu0 %v826, 24
        %v856 = vpop.permute.xlu0 %855
        %857 = vrot.lane.b32.xlu0 %v828, 24
        %v858 = vpop.permute.xlu0 %857
        %859 = vrot.lane.b32.xlu0 %v830, 24
        %v860 = vpop.permute.xlu0 %859
        %861 = vrot.lane.b32.xlu0 %v832, 24
        %v862 = vpop.permute.xlu0 %861
        %863 = vrot.lane.b32.xlu0 %v834, 24
        %v864 = vpop.permute.xlu0 %863
        %865 = vrot.lane.b32.xlu0 %v836, 24
        %v866 = vpop.permute.xlu0 %865
        %867 = vrot.lane.b32.xlu0 %v838, 24
        %v868 = vpop.permute.xlu0 %867
        %869 = vrot.lane.b32.xlu0 %v840, 24
        %v870 = vpop.permute.xlu0 %869
        %871 = vrot.lane.b32.xlu0 %v842, 24
        %v872 = vpop.permute.xlu0 %871
        %873 = vrot.lane.b32.xlu0 %v844, 24
        %v874 = vpop.permute.xlu0 %873
        %875 = vrot.lane.b32.xlu0 %v846, 24
        %v876 = vpop.permute.xlu0 %875
        %877 = vrot.lane.b32.xlu0 %v848, 24
        %v878 = vpop.permute.xlu0 %877
        %879 = vrot.lane.b32.xlu0 %v850, 24
        %v880 = vpop.permute.xlu0 %879
        %881 = vrot.lane.b32.xlu0 %v849, 24
        %v882 = vpop.permute.xlu0 %881
        %vm899 = vcmask 1040384
        %v900 = vrot.slane %v383, 7
        %v901 = vrot.slane %v384, 7
        %v902 = vsel %vm899, %v900, %v901
        %v903 = vrot.slane %v385, 7
        %v904 = vsel %vm899, %v901, %v903
        %v905 = vrot.slane %v386, 7
        %v906 = vsel %vm899, %v903, %v905
        %v907 = vrot.slane %v387, 7
        %v908 = vsel %vm899, %v905, %v907
        %v909 = vrot.slane %v388, 7
        %v910 = vsel %vm899, %v907, %v909
        %v911 = vrot.slane %v389, 7
        %v912 = vsel %vm899, %v909, %v911
        %v913 = vrot.slane %v390, 7
        %v914 = vsel %vm899, %v911, %v913
        %v915 = vrot.slane %v391, 7
        %v916 = vsel %vm899, %v913, %v915
        %v917 = vrot.slane %v392, 7
        %v918 = vsel %vm899, %v915, %v917
        %v919 = vrot.slane %v393, 7
        %v920 = vsel %vm899, %v917, %v919
        %v921 = vrot.slane %v394, 7
        %v922 = vsel %vm899, %v919, %v921
        %v923 = vrot.slane %v395, 7
        %v924 = vsel %vm899, %v921, %v923
        %v925 = vrot.slane %v396, 7
        %v926 = vsel %vm899, %v923, %v925
        %v927 = vrot.slane %v397, 7
        %v928 = vsel %vm899, %v925, %v927
        %v929 = vrot.slane %v398, 7
        %v930 = vsel %vm899, %v927, %v929
        %931 = vrot.lane.b32.xlu0 %v902, 28
        %v932 = vpop.permute.xlu0 %931
        %933 = vrot.lane.b32.xlu0 %v904, 28
        %v934 = vpop.permute.xlu0 %933
        %935 = vrot.lane.b32.xlu0 %v906, 28
        %v936 = vpop.permute.xlu0 %935
        %937 = vrot.lane.b32.xlu0 %v908, 28
        %v938 = vpop.permute.xlu0 %937
        %939 = vrot.lane.b32.xlu0 %v910, 28
        %v940 = vpop.permute.xlu0 %939
        %941 = vrot.lane.b32.xlu0 %v912, 28
        %v942 = vpop.permute.xlu0 %941
        %943 = vrot.lane.b32.xlu0 %v914, 28
        %v944 = vpop.permute.xlu0 %943
        %945 = vrot.lane.b32.xlu0 %v916, 28
        %v946 = vpop.permute.xlu0 %945
        %947 = vrot.lane.b32.xlu0 %v918, 28
        %v948 = vpop.permute.xlu0 %947
        %949 = vrot.lane.b32.xlu0 %v920, 28
        %v950 = vpop.permute.xlu0 %949
        %951 = vrot.lane.b32.xlu0 %v922, 28
        %v952 = vpop.permute.xlu0 %951
        %953 = vrot.lane.b32.xlu0 %v924, 28
        %v954 = vpop.permute.xlu0 %953
        %955 = vrot.lane.b32.xlu0 %v926, 28
        %v956 = vpop.permute.xlu0 %955
        %957 = vrot.lane.b32.xlu0 %v928, 28
        %v958 = vpop.permute.xlu0 %957
        %959 = vrot.lane.b32.xlu0 %v930, 28
        %v960 = vpop.permute.xlu0 %959
        %961 = vrot.lane.b32.xlu0 %v929, 28
        %v962 = vpop.permute.xlu0 %961
        %vm979 = vcmask 31744
        %v980 = vsel %vm979, %v383, %v452
        %v981 = vsel %vm979, %v384, %v454
        %v982 = vsel %vm979, %v385, %v456
        %v983 = vsel %vm979, %v386, %v458
        %v984 = vsel %vm979, %v387, %v460
        %v985 = vsel %vm979, %v388, %v462
        %v986 = vsel %vm979, %v389, %v464
        %v987 = vsel %vm979, %v390, %v466
        %v988 = vsel %vm979, %v391, %v468
        %v989 = vsel %vm979, %v392, %v470
        %v990 = vsel %vm979, %v393, %v472
        %v991 = vsel %vm979, %v394, %v474
        %v992 = vsel %vm979, %v395, %v476
        %v993 = vsel %vm979, %v396, %v478
        %v994 = vsel %vm979, %v397, %v480
        %v995 = vsel %vm979, %v398, %v482
        %vm996 = vcmask 64512
        %v997 = vsel %vm996, %v980, %v532
        %v998 = vsel %vm996, %v981, %v534
        %v999 = vsel %vm996, %v982, %v536
        %v1000 = vsel %vm996, %v983, %v538
        %v1001 = vsel %vm996, %v984, %v540
        %v1002 = vsel %vm996, %v985, %v542
        %v1003 = vsel %vm996, %v986, %v544
        %v1004 = vsel %vm996, %v987, %v546
        %v1005 = vsel %vm996, %v988, %v548
        %v1006 = vsel %vm996, %v989, %v550
        %v1007 = vsel %vm996, %v990, %v552
        %v1008 = vsel %vm996, %v991, %v554
        %v1009 = vsel %vm996, %v992, %v556
        %v1010 = vsel %vm996, %v993, %v558
        %v1011 = vsel %vm996, %v994, %v560
        %v1012 = vsel %vm996, %v995, %v562
        %vm1013 = vcmask 97280
        %v1014 = vsel %vm1013, %v997, %v612
        %v1015 = vsel %vm1013, %v998, %v614
        %v1016 = vsel %vm1013, %v999, %v616
        %v1017 = vsel %vm1013, %v1000, %v618
        %v1018 = vsel %vm1013, %v1001, %v620
        %v1019 = vsel %vm1013, %v1002, %v622
        %v1020 = vsel %vm1013, %v1003, %v624
        %v1021 = vsel %vm1013, %v1004, %v626
        %v1022 = vsel %vm1013, %v1005, %v628
        %v1023 = vsel %vm1013, %v1006, %v630
        %v1024 = vsel %vm1013, %v1007, %v632
        %v1025 = vsel %vm1013, %v1008, %v634
        %v1026 = vsel %vm1013, %v1009, %v636
        %v1027 = vsel %vm1013, %v1010, %v638
        %v1028 = vsel %vm1013, %v1011, %v640
        %v1029 = vsel %vm1013, %v1012, %v642
        %vm1030 = vcmask 130048
        %v1031 = vsel %vm1030, %v1014, %v692
        %v1032 = vsel %vm1030, %v1015, %v694
        %v1033 = vsel %vm1030, %v1016, %v696
        %v1034 = vsel %vm1030, %v1017, %v698
        %v1035 = vsel %vm1030, %v1018, %v700
        %v1036 = vsel %vm1030, %v1019, %v702
        %v1037 = vsel %vm1030, %v1020, %v704
        %v1038 = vsel %vm1030, %v1021, %v706
        %v1039 = vsel %vm1030, %v1022, %v708
        %v1040 = vsel %vm1030, %v1023, %v710
        %v1041 = vsel %vm1030, %v1024, %v712
        %v1042 = vsel %vm1030, %v1025, %v714
        %v1043 = vsel %vm1030, %v1026, %v716
        %v1044 = vsel %vm1030, %v1027, %v718
        %v1045 = vsel %vm1030, %v1028, %v720
        %v1046 = vsel %vm1030, %v1029, %v722
        %vm1047 = vcmask 162816
        %v1048 = vsel %vm1047, %v1031, %v772
        %v1049 = vsel %vm1047, %v1032, %v774
        %v1050 = vsel %vm1047, %v1033, %v776
        %v1051 = vsel %vm1047, %v1034, %v778
        %v1052 = vsel %vm1047, %v1035, %v780
        %v1053 = vsel %vm1047, %v1036, %v782
        %v1054 = vsel %vm1047, %v1037, %v784
        %v1055 = vsel %vm1047, %v1038, %v786
        %v1056 = vsel %vm1047, %v1039, %v788
        %v1057 = vsel %vm1047, %v1040, %v790
        %v1058 = vsel %vm1047, %v1041, %v792
        %v1059 = vsel %vm1047, %v1042, %v794
        %v1060 = vsel %vm1047, %v1043, %v796
        %v1061 = vsel %vm1047, %v1044, %v798
        %v1062 = vsel %vm1047, %v1045, %v800
        %v1063 = vsel %vm1047, %v1046, %v802
        %vm1064 = vcmask 195584
        %v1065 = vsel %vm1064, %v1048, %v852
        %v1066 = vsel %vm1064, %v1049, %v854
        %v1067 = vsel %vm1064, %v1050, %v856
        %v1068 = vsel %vm1064, %v1051, %v858
        %v1069 = vsel %vm1064, %v1052, %v860
        %v1070 = vsel %vm1064, %v1053, %v862
        %v1071 = vsel %vm1064, %v1054, %v864
        %v1072 = vsel %vm1064, %v1055, %v866
        %v1073 = vsel %vm1064, %v1056, %v868
        %v1074 = vsel %vm1064, %v1057, %v870
        %v1075 = vsel %vm1064, %v1058, %v872
        %v1076 = vsel %vm1064, %v1059, %v874
        %v1077 = vsel %vm1064, %v1060, %v876
        %v1078 = vsel %vm1064, %v1061, %v878
        %v1079 = vsel %vm1064, %v1062, %v880
        %v1080 = vsel %vm1064, %v1063, %v882
        %vm1081 = vcmask 228352
        %v1082 = vsel %vm1081, %v1065, %v932
        %v1083 = vsel %vm1081, %v1066, %v934
        %v1084 = vsel %vm1081, %v1067, %v936
        %v1085 = vsel %vm1081, %v1068, %v938
        %v1086 = vsel %vm1081, %v1069, %v940
        %v1087 = vsel %vm1081, %v1070, %v942
        %v1088 = vsel %vm1081, %v1071, %v944
        %v1089 = vsel %vm1081, %v1072, %v946
        %v1090 = vsel %vm1081, %v1073, %v948
        %v1091 = vsel %vm1081, %v1074, %v950
        %v1092 = vsel %vm1081, %v1075, %v952
        %v1093 = vsel %vm1081, %v1076, %v954
        %v1094 = vsel %vm1081, %v1077, %v956
        %v1095 = vsel %vm1081, %v1078, %v958
        %v1096 = vsel %vm1081, %v1079, %v960
        %v1097 = vsel %vm1081, %v1080, %v962
        %v1098 = vpack.c.bf16 %v1083, %v1082
        %v1099 = vpack.c.bf16 %v1085, %v1084
        %v1100 = vpack.c.bf16 %v1087, %v1086
        %v1101 = vpack.c.bf16 %v1089, %v1088
        %v1102 = vpack.c.bf16 %v1091, %v1090
        %v1103 = vpack.c.bf16 %v1093, %v1092
        %v1104 = vpack.c.bf16 %v1095, %v1094
        %v1105 = vpack.c.bf16 %v1097, %v1096
        %v1107 = vlaneseq
        %v1108 = vshrl.u32 %v1107, 7
        %v1109 = vsub.s32 0, %v1108
        %v1110 = vrot.slane %v349, %v1109
        %v1116 = vunpack.c.l.b16 %v399
        %v1117 = vunpack.c.l.b16 %v400
        %v1118 = vunpack.c.l.b16 %v401
        %v1119 = vunpack.c.l.b16 %v402
        %v1120 = vpack.c.b16 %v1117, %v1116
        %v1121 = vpack.c.b16 %v1119, %v1118
        %vm1124 = vcmask 261120
        %v1126 = vsel %vm1124, %v1098, 0
        %v1129 = vsel %vm1124, %v1099, 0
        %v1132 = vsel %vm1124, %v1100, 0
        %v1135 = vsel %vm1124, %v1101, 0
        %v1138 = vsel %vm1124, %v1102, 0
        %v1141 = vsel %vm1124, %v1103, 0
        %v1144 = vsel %vm1124, %v1104, 0
        %v1147 = vsel %vm1124, %v1105, 0
        %1149 = vmatprep.subr.bf16.mxu0 0
        %1150 = vmatpush1.bf16.msra.mxu0 %v1120
        %1151 = vmatprep.subr.bf16.mxu0 0
        %1152 = vmatpush1.bf16.msra.mxu0 %v1121
        %1153 = vmatprep.subr.bf16.mxu0 0
        %1154 = vmatpush1.bf16.msra.mxu0 0
        %1155 = vmatprep.subr.bf16.mxu0 0
        %1156 = vmatpush1.bf16.msra.mxu0 0
        %1157 = vmatprep.subr.bf16.mxu0 0
        %1158 = vmatpush1.bf16.msra.mxu0 0
        %1159 = vmatprep.subr.bf16.mxu0 0
        %1160 = vmatpush1.bf16.msra.mxu0 0
        %1161 = vmatprep.subr.bf16.mxu0 0
        %1162 = vmatpush1.bf16.msra.mxu0 0
        %1163 = vmatprep.subr.bf16.mxu0 0
        %1164 = vmatpush1.bf16.msra.mxu0 0
        %1165 = vmatprep.subr.bf16.mxu0 0
        %1166 = vmatpush1.bf16.msra.mxu0 0
        %1167 = vmatprep.subr.bf16.mxu0 0
        %1168 = vmatpush1.bf16.msra.mxu0 0
        %1169 = vmatprep.subr.bf16.mxu0 0
        %1170 = vmatpush1.bf16.msra.mxu0 0
        %1171 = vmatprep.subr.bf16.mxu0 0
        %1172 = vmatpush1.bf16.msra.mxu0 0
        %1173 = vmatprep.subr.bf16.mxu0 0
        %1174 = vmatpush1.bf16.msra.mxu0 0
        %1175 = vmatprep.subr.bf16.mxu0 0
        %1176 = vmatpush1.bf16.msra.mxu0 0
        %1177 = vmatprep.subr.bf16.mxu0 0
        %1178 = vmatpush1.bf16.msra.mxu0 0
        %1179 = vmatprep.subr.bf16.mxu0 0
        %1180 = vmatpush1.bf16.msra.mxu0 0
        %1181 = vmatprep.mubr.bf16.mxu0 0
        %1182 = vmatmul.mubr.bf16.gmra.mrb[0].mxu0 %v1126
        %v1183 = vpop.f32.mrb[0].mxu0
        %v1184 = vadd.f32 %v1110, %v1183
        %v1185 = vpop.f32.mrb[0].mxu0
        %v1186 = vpop.f32.mrb[0].mxu0
        %v1187 = vadd.f32 %v1110, %v1186
        %v1188 = vpop.f32.mrb[0].mxu0
        %1189 = vmatprep.mubr.bf16.mxu0 0
        %1190 = vmatmul.mubr.bf16.gmra.mrb[0].mxu0 %v1129
        %v1191 = vpop.f32.mrb[0].mxu0
        %v1192 = vadd.f32 %v1110, %v1191
        %v1193 = vpop.f32.mrb[0].mxu0
        %v1194 = vpop.f32.mrb[0].mxu0
        %v1195 = vadd.f32 %v1110, %v1194
        %v1196 = vpop.f32.mrb[0].mxu0
        %1197 = vmatprep.mubr.bf16.mxu0 0
        %1198 = vmatmul.mubr.bf16.gmra.mrb[0].mxu0 %v1132
        %v1199 = vpop.f32.mrb[0].mxu0
        %v1200 = vadd.f32 %v1110, %v1199
        %v1201 = vpop.f32.mrb[0].mxu0
        %v1202 = vpop.f32.mrb[0].mxu0
        %v1203 = vadd.f32 %v1110, %v1202
        %v1204 = vpop.f32.mrb[0].mxu0
        %1205 = vmatprep.mubr.bf16.mxu0 0
        %1206 = vmatmul.mubr.bf16.gmra.mrb[0].mxu0 %v1135
        %v1207 = vpop.f32.mrb[0].mxu0
        %v1208 = vadd.f32 %v1110, %v1207
        %v1209 = vpop.f32.mrb[0].mxu0
        %v1210 = vpop.f32.mrb[0].mxu0
        %v1211 = vadd.f32 %v1110, %v1210
        %v1212 = vpop.f32.mrb[0].mxu0
        %1213 = vmatprep.mubr.bf16.mxu0 0
        %1214 = vmatmul.mubr.bf16.gmra.mrb[0].mxu0 %v1138
        %v1215 = vpop.f32.mrb[0].mxu0
        %v1216 = vadd.f32 %v1110, %v1215
        %v1217 = vpop.f32.mrb[0].mxu0
        %v1218 = vpop.f32.mrb[0].mxu0
        %v1219 = vadd.f32 %v1110, %v1218
        %v1220 = vpop.f32.mrb[0].mxu0
        %1221 = vmatprep.mubr.bf16.mxu0 0
        %1222 = vmatmul.mubr.bf16.gmra.mrb[0].mxu0 %v1141
        %v1223 = vpop.f32.mrb[0].mxu0
        %v1224 = vadd.f32 %v1110, %v1223
        %v1225 = vpop.f32.mrb[0].mxu0
        %v1226 = vpop.f32.mrb[0].mxu0
        %v1227 = vadd.f32 %v1110, %v1226
        %v1228 = vpop.f32.mrb[0].mxu0
        %1229 = vmatprep.mubr.bf16.mxu0 0
        %1230 = vmatmul.mubr.bf16.gmra.mrb[0].mxu0 %v1144
        %v1231 = vpop.f32.mrb[0].mxu0
        %v1232 = vadd.f32 %v1110, %v1231
        %v1233 = vpop.f32.mrb[0].mxu0
        %v1234 = vpop.f32.mrb[0].mxu0
        %v1235 = vadd.f32 %v1110, %v1234
        %v1236 = vpop.f32.mrb[0].mxu0
        %1237 = vmatprep.mubr.bf16.mxu0 0
        %1238 = vmatmul.mubr.bf16.gmra.mrb[0].mxu0 %v1147
        %v1239 = vpop.f32.mrb[0].mxu0
        %v1240 = vadd.f32 %v1110, %v1239
        %v1241 = vpop.f32.mrb[0].mxu0
        %v1242 = vpop.f32.mrb[0].mxu0
        %v1243 = vpop.f32.mrb[0].mxu0
        %1244 = vdwg.mxu0
        %vm1245 = vcmask 523264
        %v1246 = vsel %vm1245, %v1184, -inf
        %v1247 = vrot.slane %v1246, 4
        %v1248 = vmax.f32 %v1246, %v1247
        %v1249 = vrot.slane %v1248, 2
        %v1250 = vmax.f32 %v1248, %v1249
        %v1251 = vrot.slane %v1250, 1
        %v1252 = vmax.f32 %v1250, %v1251
        %v1253 = vsel %vm1245, %v1187, -inf
        %v1254 = vrot.slane %v1253, 4
        %v1255 = vmax.f32 %v1253, %v1254
        %v1256 = vrot.slane %v1255, 2
        %v1257 = vmax.f32 %v1255, %v1256
        %v1258 = vrot.slane %v1257, 1
        %v1259 = vmax.f32 %v1257, %v1258
        %v1260 = vsel %vm1245, %v1192, -inf
        %v1261 = vrot.slane %v1260, 4
        %v1262 = vmax.f32 %v1260, %v1261
        %v1263 = vrot.slane %v1262, 2
        %v1264 = vmax.f32 %v1262, %v1263
        %v1265 = vrot.slane %v1264, 1
        %v1266 = vmax.f32 %v1264, %v1265
        %v1267 = vsel %vm1245, %v1195, -inf
        %v1268 = vrot.slane %v1267, 4
        %v1269 = vmax.f32 %v1267, %v1268
        %v1270 = vrot.slane %v1269, 2
        %v1271 = vmax.f32 %v1269, %v1270
        %v1272 = vrot.slane %v1271, 1
        %v1273 = vmax.f32 %v1271, %v1272
        %v1274 = vsel %vm1245, %v1200, -inf
        %v1275 = vrot.slane %v1274, 4
        %v1276 = vmax.f32 %v1274, %v1275
        %v1277 = vrot.slane %v1276, 2
        %v1278 = vmax.f32 %v1276, %v1277
        %v1279 = vrot.slane %v1278, 1
        %v1280 = vmax.f32 %v1278, %v1279
        %v1281 = vsel %vm1245, %v1203, -inf
        %v1282 = vrot.slane %v1281, 4
        %v1283 = vmax.f32 %v1281, %v1282
        %v1284 = vrot.slane %v1283, 2
        %v1285 = vmax.f32 %v1283, %v1284
        %v1286 = vrot.slane %v1285, 1
        %v1287 = vmax.f32 %v1285, %v1286
        %v1288 = vsel %vm1245, %v1208, -inf
        %v1289 = vrot.slane %v1288, 4
        %v1290 = vmax.f32 %v1288, %v1289
        %v1291 = vrot.slane %v1290, 2
        %v1292 = vmax.f32 %v1290, %v1291
        %v1293 = vrot.slane %v1292, 1
        %v1294 = vmax.f32 %v1292, %v1293
        %v1295 = vsel %vm1245, %v1211, -inf
        %v1296 = vrot.slane %v1295, 4
        %v1297 = vmax.f32 %v1295, %v1296
        %v1298 = vrot.slane %v1297, 2
        %v1299 = vmax.f32 %v1297, %v1298
        %v1300 = vrot.slane %v1299, 1
        %v1301 = vmax.f32 %v1299, %v1300
        %v1302 = vsel %vm1245, %v1216, -inf
        %v1303 = vrot.slane %v1302, 4
        %v1304 = vmax.f32 %v1302, %v1303
        %v1305 = vrot.slane %v1304, 2
        %v1306 = vmax.f32 %v1304, %v1305
        %v1307 = vrot.slane %v1306, 1
        %v1308 = vmax.f32 %v1306, %v1307
        %v1309 = vsel %vm1245, %v1219, -inf
        %v1310 = vrot.slane %v1309, 4
        %v1311 = vmax.f32 %v1309, %v1310
        %v1312 = vrot.slane %v1311, 2
        %v1313 = vmax.f32 %v1311, %v1312
        %v1314 = vrot.slane %v1313, 1
        %v1315 = vmax.f32 %v1313, %v1314
        %v1316 = vsel %vm1245, %v1224, -inf
        %v1317 = vrot.slane %v1316, 4
        %v1318 = vmax.f32 %v1316, %v1317
        %v1319 = vrot.slane %v1318, 2
        %v1320 = vmax.f32 %v1318, %v1319
        %v1321 = vrot.slane %v1320, 1
        %v1322 = vmax.f32 %v1320, %v1321
        %v1323 = vsel %vm1245, %v1227, -inf
        %v1324 = vrot.slane %v1323, 4
        %v1325 = vmax.f32 %v1323, %v1324
        %v1326 = vrot.slane %v1325, 2
        %v1327 = vmax.f32 %v1325, %v1326
        %v1328 = vrot.slane %v1327, 1
        %v1329 = vmax.f32 %v1327, %v1328
        %v1330 = vsel %vm1245, %v1232, -inf
        %v1331 = vrot.slane %v1330, 4
        %v1332 = vmax.f32 %v1330, %v1331
        %v1333 = vrot.slane %v1332, 2
        %v1334 = vmax.f32 %v1332, %v1333
        %v1335 = vrot.slane %v1334, 1
        %v1336 = vmax.f32 %v1334, %v1335
        %v1337 = vsel %vm1245, %v1235, -inf
        %v1338 = vrot.slane %v1337, 4
        %v1339 = vmax.f32 %v1337, %v1338
        %v1340 = vrot.slane %v1339, 2
        %v1341 = vmax.f32 %v1339, %v1340
        %v1342 = vrot.slane %v1341, 1
        %v1343 = vmax.f32 %v1341, %v1342
        %v1344 = vsel %vm1245, %v1240, -inf
        %v1345 = vrot.slane %v1344, 4
        %v1346 = vmax.f32 %v1344, %v1345
        %v1347 = vrot.slane %v1346, 2
        %v1348 = vmax.f32 %v1346, %v1347
        %v1349 = vrot.slane %v1348, 1
        %v1350 = vmax.f32 %v1348, %v1349
        %v1351 = vmax.f32 %v1252, 0.0
        %v1352 = vmax.f32 %v1259, 0.0
        %v1353 = vmax.f32 %v1266, 0.0
        %v1354 = vmax.f32 %v1273, 0.0
        %v1355 = vmax.f32 %v1280, 0.0
        %v1356 = vmax.f32 %v1287, 0.0
        %v1357 = vmax.f32 %v1294, 0.0
        %v1358 = vmax.f32 %v1301, 0.0
        %v1359 = vmax.f32 %v1308, 0.0
        %v1360 = vmax.f32 %v1315, 0.0
        %v1361 = vmax.f32 %v1322, 0.0
        %v1362 = vmax.f32 %v1329, 0.0
        %v1363 = vmax.f32 %v1336, 0.0
        %v1364 = vmax.f32 %v1343, 0.0
        %v1365 = vmax.f32 %v1350, 0.0
        %v1366 = vld [vmem:[%s3] sm:$0xf]
        %v1367 = vld [vmem:[%s3 + $0x4] sm:$0xf]
        %v1368 = vld [vmem:[%s3 + $0x8] sm:$0xf]
        %v1369 = vld [vmem:[%s3 + $0xc] sm:$0xf]
        %v1370 = vld [vmem:[%s3 + $0x10] sm:$0xf]
        %v1371 = vld [vmem:[%s3 + $0x14] sm:$0xf]
        %v1372 = vld [vmem:[%s3 + $0x18] sm:$0xf]
        %v1373 = vld [vmem:[%s3 + $0x1c] sm:$0xf]
        %v1374 = vld [vmem:[%s3 + $0x20] sm:$0xf]
        %v1375 = vld [vmem:[%s3 + $0x24] sm:$0xf]
        %v1376 = vld [vmem:[%s3 + $0x28] sm:$0xf]
        %v1377 = vld [vmem:[%s3 + $0x2c] sm:$0xf]
        %v1378 = vld [vmem:[%s3 + $0x30] sm:$0xf]
        %v1379 = vld [vmem:[%s3 + $0x34] sm:$0xf]
        %v1380 = vld [vmem:[%s3 + $0x38] sm:$0xf]
        %v1381 = vld [vmem:[%s3 + $0x3c] sm:$0xf]
        %v1382 = vld [vmem:[%s3 + $0x40] sm:$0xf]
        %v1383 = vld [vmem:[%s3 + $0x44] sm:$0xf]
        %v1384 = vld [vmem:[%s3 + $0x48] sm:$0xf]
        %v1385 = vld [vmem:[%s3 + $0x4c] sm:$0xf]
        %v1386 = vld [vmem:[%s3 + $0x50] sm:$0xf]
        %v1387 = vld [vmem:[%s3 + $0x54] sm:$0xf]
        %v1388 = vld [vmem:[%s3 + $0x58] sm:$0xf]
        %v1389 = vld [vmem:[%s3 + $0x5c] sm:$0xf]
        %vm1403 = vcmask 1041409
        %v1404 = vsel %vm1403, %v1352, %v1351
        %vm1405 = vcmask 1042434
        %v1406 = vsel %vm1405, %v1353, %v1404
        %vm1407 = vcmask 1043459
        %v1408 = vsel %vm1407, %v1354, %v1406
        %vm1409 = vcmask 1044484
        %v1410 = vsel %vm1409, %v1355, %v1408
        %vm1411 = vcmask 1045509
        %v1412 = vsel %vm1411, %v1356, %v1410
        %vm1413 = vcmask 1046534
        %v1414 = vsel %vm1413, %v1357, %v1412
        %vm1415 = vcmask 1047559
        %v1416 = vsel %vm1415, %v1358, %v1414
        %v1417 = vsel %vm1403, %v1360, %v1359
        %v1418 = vsel %vm1405, %v1361, %v1417
        %v1419 = vsel %vm1407, %v1362, %v1418
        %v1420 = vsel %vm1409, %v1363, %v1419
        %v1424 = vsel %vm1403, %v1353, %v1352
        %v1425 = vsel %vm1405, %v1354, %v1424
        %v1426 = vsel %vm1407, %v1355, %v1425
        %v1427 = vsel %vm1409, %v1356, %v1426
        %v1428 = vsel %vm1411, %v1357, %v1427
        %v1429 = vsel %vm1413, %v1358, %v1428
        %v1430 = vsel %vm1415, %v1359, %v1429
        %v1431 = vsel %vm1403, %v1361, %v1360
        %v1432 = vsel %vm1405, %v1362, %v1431
        %v1433 = vsel %vm1407, %v1363, %v1432
        %v1434 = vsel %vm1409, %v1364, %v1433
        %1435 = vrot.lane.b32.xlu0 %v1430, 64
        %v1436 = vpop.permute.xlu0 %1435
        %1437 = vrot.lane.b32.xlu0 %v1434, 64
        %v1438 = vpop.permute.xlu0 %1437
        %v1442 = vsel %vm1403, %v1354, %v1353
        %v1443 = vsel %vm1405, %v1355, %v1442
        %v1444 = vsel %vm1407, %v1356, %v1443
        %v1445 = vsel %vm1409, %v1357, %v1444
        %v1446 = vsel %vm1411, %v1358, %v1445
        %v1447 = vsel %vm1413, %v1359, %v1446
        %v1448 = vsel %vm1415, %v1360, %v1447
        %v1449 = vsel %vm1403, %v1362, %v1361
        %v1450 = vsel %vm1405, %v1363, %v1449
        %v1451 = vsel %vm1407, %v1364, %v1450
        %v1452 = vsel %vm1409, %v1365, %v1451
        %v1455 = vsel %vm1245, %v1416, %v1436
        %v1456 = vsel %vm1245, %v1420, %v1438
        %v1457 = vpack.c.bf16 %v1456, %v1455
        %v1458 = vpack.c.bf16 %v1452, %v1448
        %v1460 = vlaneseq
        %v1461 = vshrl.u32 %v1460, 7
        %v1462 = vsub.s32 0, %v1461
        %v1463 = vrot.slane %v350, %v1462
        %v1489 = vunpack.c.l.b16 %v1366
        %v1490 = vunpack.c.l.b16 %v1367
        %v1491 = vunpack.c.l.b16 %v1368
        %v1492 = vunpack.c.l.b16 %v1369
        %v1493 = vunpack.c.l.b16 %v1370
        %v1494 = vunpack.c.l.b16 %v1371
        %v1495 = vunpack.c.l.b16 %v1372
        %v1496 = vunpack.c.l.b16 %v1373
        %v1497 = vunpack.c.l.b16 %v1374
        %v1498 = vunpack.c.l.b16 %v1375
        %v1499 = vunpack.c.l.b16 %v1376
        %v1500 = vunpack.c.l.b16 %v1377
        %v1501 = vunpack.c.l.b16 %v1378
        %v1502 = vunpack.c.l.b16 %v1379
        %v1503 = vunpack.c.l.b16 %v1380
        %v1504 = vunpack.c.l.b16 %v1381
        %v1505 = vunpack.c.l.b16 %v1382
        %v1506 = vunpack.c.l.b16 %v1383
        %v1507 = vunpack.c.l.b16 %v1384
        %v1508 = vunpack.c.l.b16 %v1385
        %v1509 = vunpack.c.l.b16 %v1386
        %v1510 = vunpack.c.l.b16 %v1387
        %v1511 = vunpack.c.l.b16 %v1388
        %v1512 = vunpack.c.l.b16 %v1389
        %v1513 = vpack.c.b16 %v1490, %v1489
        %v1514 = vpack.c.b16 %v1492, %v1491
        %v1515 = vpack.c.b16 %v1494, %v1493
        %v1516 = vpack.c.b16 %v1496, %v1495
        %v1517 = vpack.c.b16 %v1498, %v1497
        %v1518 = vpack.c.b16 %v1500, %v1499
        %v1519 = vpack.c.b16 %v1502, %v1501
        %v1520 = vpack.c.b16 %v1504, %v1503
        %v1521 = vpack.c.b16 %v1506, %v1505
        %v1522 = vpack.c.b16 %v1508, %v1507
        %v1523 = vpack.c.b16 %v1510, %v1509
        %v1524 = vpack.c.b16 %v1512, %v1511
        %v1538 = vsel %vm1245, %v1458, 0
        %1540 = vmatprep.subr.bf16.mxu0 0
        %1541 = vmatpush1.bf16.msra.mxu0 %v1513
        %1542 = vmatprep.subr.bf16.mxu0 0
        %1543 = vmatpush1.bf16.msra.mxu0 %v1514
        %1544 = vmatprep.subr.bf16.mxu0 0
        %1545 = vmatpush1.bf16.msra.mxu0 %v1515
        %1546 = vmatprep.subr.bf16.mxu0 0
        %1547 = vmatpush1.bf16.msra.mxu0 %v1516
        %1548 = vmatprep.subr.bf16.mxu0 0
        %1549 = vmatpush1.bf16.msra.mxu0 %v1517
        %1550 = vmatprep.subr.bf16.mxu0 0
        %1551 = vmatpush1.bf16.msra.mxu0 %v1518
        %1552 = vmatprep.subr.bf16.mxu0 0
        %1553 = vmatpush1.bf16.msra.mxu0 %v1519
        %1554 = vmatprep.subr.bf16.mxu0 0
        %1555 = vmatpush1.bf16.msra.mxu0 %v1520
        %1556 = vmatprep.subr.bf16.mxu0 0
        %1557 = vmatpush1.bf16.msra.mxu0 %v1521
        %1558 = vmatprep.subr.bf16.mxu0 0
        %1559 = vmatpush1.bf16.msra.mxu0 %v1522
        %1560 = vmatprep.subr.bf16.mxu0 0
        %1561 = vmatpush1.bf16.msra.mxu0 %v1523
        %1562 = vmatprep.subr.bf16.mxu0 0
        %1563 = vmatpush1.bf16.msra.mxu0 %v1524
        %1564 = vmatprep.subr.bf16.mxu0 0
        %1565 = vmatpush1.bf16.msra.mxu0 0
        %1566 = vmatprep.subr.bf16.mxu0 0
        %1567 = vmatpush1.bf16.msra.mxu0 0
        %1568 = vmatprep.subr.bf16.mxu0 0
        %1569 = vmatpush1.bf16.msra.mxu0 0
        %1570 = vmatprep.subr.bf16.mxu0 0
        %1571 = vmatpush1.bf16.msra.mxu0 0
        %1572 = vmatprep.mubr.bf16.mxu0 %v1538
        %1573 = vmatmul.mubr.bf16.gmra.mrb[0].mxu0 %v1457
        %v1574 = vpop.f32.mrb[0].mxu0
        %v1575 = vadd.f32 %v1463, %v1574
        %v1576 = vpop.f32.mrb[0].mxu0
        %v1577 = vpop.f32.mrb[0].mxu0
        %v1578 = vadd.f32 %v1463, %v1577
        %v1579 = vpop.f32.mrb[0].mxu0
        %1580 = vdwg.mxu0
        %v1583 = vcombine.high %v1575, %v1575
        %v1585 = vunpack.c.l.s4 1983009808
        %v1586 = vunpack.c.0.s8 %v1585
        %v1587 = vlaneseq
        %v1588 = vshrl.u32 %v1587, 7
        %v1589 = vsub.s32 %v1586, %v1588
        %v1590 = vrot.slane %v1575, %v1589
        %v1592 = vunpack.c.l.s4 1983009808
        %v1593 = vunpack.c.0.s8 %v1592
        %v1594 = vlaneseq
        %v1595 = vshrl.u32 %v1594, 7
        %v1596 = vsub.s32 %v1593, %v1595
        %v1597 = vrot.slane %v1583, %v1596
        %v1598 = vcombine.high %v1590, %v1590
        %v1599 = vcombine.high %v1597, %v1597
        %v1601 = vunpack.c.l.s4 1983009808
        %v1602 = vunpack.c.0.s8 %v1601
        %v1603 = vlaneseq
        %v1604 = vshrl.u32 %v1603, 7
        %v1605 = vsub.s32 %v1602, %v1604
        %v1606 = vrot.slane %v1578, %v1605
        %v1607 = vcombine.high %v1606, %v1606
        %v1614 = vsel %vm819, %v1590, -inf
        %v1615 = vrot.slane %v1614, 4
        %v1616 = vmax.f32 %v1614, %v1615
        %v1617 = vrot.slane %v1616, 2
        %v1618 = vmax.f32 %v1616, %v1617
        %v1619 = vrot.slane %v1618, 1
        %v1620 = vmax.f32 %v1618, %v1619
        %v1621 = vsel %vm819, %v1598, -inf
        %v1622 = vrot.slane %v1621, 4
        %v1623 = vmax.f32 %v1621, %v1622
        %v1624 = vrot.slane %v1623, 2
        %v1625 = vmax.f32 %v1623, %v1624
        %v1626 = vrot.slane %v1625, 1
        %v1627 = vmax.f32 %v1625, %v1626
        %v1628 = vsel %vm819, %v1597, -inf
        %v1629 = vrot.slane %v1628, 4
        %v1630 = vmax.f32 %v1628, %v1629
        %v1631 = vrot.slane %v1630, 2
        %v1632 = vmax.f32 %v1630, %v1631
        %v1633 = vrot.slane %v1632, 1
        %v1634 = vmax.f32 %v1632, %v1633
        %v1635 = vsel %vm819, %v1599, -inf
        %v1636 = vrot.slane %v1635, 4
        %v1637 = vmax.f32 %v1635, %v1636
        %v1638 = vrot.slane %v1637, 2
        %v1639 = vmax.f32 %v1637, %v1638
        %v1640 = vrot.slane %v1639, 1
        %v1641 = vmax.f32 %v1639, %v1640
        %v1642 = vsel %vm819, %v1606, -inf
        %v1643 = vrot.slane %v1642, 4
        %v1644 = vmax.f32 %v1642, %v1643
        %v1645 = vrot.slane %v1644, 2
        %v1646 = vmax.f32 %v1644, %v1645
        %v1647 = vrot.slane %v1646, 1
        %v1648 = vmax.f32 %v1646, %v1647
        %v1649 = vsel %vm819, %v1607, -inf
        %v1650 = vrot.slane %v1649, 4
        %v1651 = vmax.f32 %v1649, %v1650
        %v1652 = vrot.slane %v1651, 2
        %v1653 = vmax.f32 %v1651, %v1652
        %v1654 = vrot.slane %v1653, 1
        %v1655 = vmax.f32 %v1653, %v1654
        %v1656 = vmax.f32 %v1620, 0.0
        %v1657 = vmax.f32 %v1627, 0.0
        %v1658 = vmax.f32 %v1634, 0.0
        %v1659 = vmax.f32 %v1641, 0.0
        %v1660 = vmax.f32 %v1648, 0.0
        %v1661 = vmax.f32 %v1655, 0.0
        %v1662 = vld [vmem:[#allocation3] sm:$0xff]
        %v1663 = vld [vmem:[#allocation3 + $0x8] sm:$0xff]
        %v1664 = vld [vmem:[#allocation3 + $0x10] sm:$0xff]
        %v1665 = vld [vmem:[#allocation3 + $0x18] sm:$0xff]
        %v1666 = vld [vmem:[#allocation3 + $0x20] sm:$0xff]
        %v1667 = vld [vmem:[#allocation3 + $0x28] sm:$0xff]
        %v1668 = vld [vmem:[#allocation3 + $0x30] sm:$0xff]
        %v1669 = vld [vmem:[#allocation3 + $0x38] sm:$0xff]
        %v1670 = vld [vmem:[#allocation3 + $0x40] sm:$0xff]
        %v1671 = vld [vmem:[#allocation3 + $0x48] sm:$0xff]
        %v1672 = vld [vmem:[#allocation3 + $0x50] sm:$0xff]
        %v1673 = vld [vmem:[#allocation3 + $0x58] sm:$0xff]
        %v1674 = vld [vmem:[#allocation3 + $0x60] sm:$0xff]
        %v1675 = vld [vmem:[#allocation3 + $0x68] sm:$0xff]
        %v1676 = vld [vmem:[#allocation3 + $0x70] sm:$0xff]
        %v1677 = vld [vmem:[#allocation3 + $0x78] sm:$0xff]
        %v1678 = vld [vmem:[#allocation3 + $0x80] sm:$0xff]
        %v1679 = vld [vmem:[#allocation3 + $0x88] sm:$0xff]
        %v1680 = vld [vmem:[#allocation3 + $0x90] sm:$0xff]
        %v1681 = vld [vmem:[#allocation3 + $0x98] sm:$0xff]
        %v1682 = vld [vmem:[#allocation3 + $0xa0] sm:$0xff]
        %v1683 = vld [vmem:[#allocation3 + $0xa8] sm:$0xff]
        %v1684 = vld [vmem:[#allocation3 + $0xb0] sm:$0xff]
        %v1685 = vld [vmem:[#allocation3 + $0xb8] sm:$0xff]
        %v1686 = vld [vmem:[#allocation3 + $0xc0] sm:$0xff]
        %v1687 = vld [vmem:[#allocation3 + $0xc8] sm:$0xff]
        %v1688 = vld [vmem:[#allocation3 + $0xd0] sm:$0xff]
        %v1689 = vld [vmem:[#allocation3 + $0xd8] sm:$0xff]
        %v1690 = vld [vmem:[#allocation3 + $0xe0] sm:$0xff]
        %v1691 = vld [vmem:[#allocation3 + $0xe8] sm:$0xff]
        %v1692 = vld [vmem:[#allocation3 + $0xf0] sm:$0xff]
        %v1693 = vld [vmem:[#allocation3 + $0xf8] sm:$0xff]
        %v1694 = vld [vmem:[#allocation3 + $0x100] sm:$0xff]
        %v1695 = vld [vmem:[#allocation3 + $0x108] sm:$0xff]
        %v1696 = vld [vmem:[#allocation3 + $0x110] sm:$0xff]
        %v1697 = vld [vmem:[#allocation3 + $0x118] sm:$0xff]
        %v1698 = vld [vmem:[#allocation3 + $0x120] sm:$0xff]
        %v1699 = vld [vmem:[#allocation3 + $0x128] sm:$0xff]
        %v1700 = vld [vmem:[#allocation3 + $0x130] sm:$0xff]
        %v1701 = vld [vmem:[#allocation3 + $0x138] sm:$0xff]
        %v1702 = vld [vmem:[#allocation3 + $0x140] sm:$0xff]
        %v1703 = vld [vmem:[#allocation3 + $0x148] sm:$0xff]
        %v1704 = vld [vmem:[#allocation3 + $0x150] sm:$0xff]
        %v1705 = vld [vmem:[#allocation3 + $0x158] sm:$0xff]
        %v1706 = vld [vmem:[#allocation3 + $0x160] sm:$0xff]
        %v1707 = vld [vmem:[#allocation3 + $0x168] sm:$0xff]
        %v1708 = vld [vmem:[#allocation3 + $0x170] sm:$0xff]
        %v1709 = vld [vmem:[#allocation3 + $0x178] sm:$0xff]
        %v1714 = vsel %vm1403, %v1657, %v1656
        %v1715 = vsel %vm1405, %v1658, %v1714
        %v1716 = vsel %vm1407, %v1659, %v1715
        %v1719 = vsel %vm1403, %v1658, %v1657
        %v1720 = vsel %vm1405, %v1659, %v1719
        %v1721 = vsel %vm1407, %v1660, %v1720
        %v1724 = vsel %vm1403, %v1659, %v1658
        %v1725 = vsel %vm1405, %v1660, %v1724
        %v1726 = vsel %vm1407, %v1661, %v1725
        %v1728 = vpack.c.bf16 %v1716, %v1716
        %v1729 = vpack.c.bf16 %v1721, %v1721
        %v1730 = vpack.c.bf16 %v1726, %v1726
        %v1732 = vlaneseq
        %v1733 = vshrl.u32 %v1732, 7
        %v1734 = vsub.s32 0, %v1733
        %v1735 = vrot.slane %v351, %v1734
        %v1736 = vlaneseq
        %v1737 = vshrl.u32 %v1736, 7
        %v1738 = vsub.s32 1, %v1737
        %v1739 = vrot.slane %v351, %v1738
        %v1790 = vunpack.c.l.b16 %v1662
        %v1791 = vunpack.c.h.b16 %v1662
        %v1792 = vunpack.c.l.b16 %v1663
        %v1793 = vunpack.c.h.b16 %v1663
        %v1794 = vunpack.c.l.b16 %v1664
        %v1795 = vunpack.c.h.b16 %v1664
        %v1796 = vunpack.c.l.b16 %v1665
        %v1797 = vunpack.c.h.b16 %v1665
        %v1798 = vunpack.c.l.b16 %v1666
        %v1799 = vunpack.c.h.b16 %v1666
        %v1800 = vunpack.c.l.b16 %v1667
        %v1801 = vunpack.c.h.b16 %v1667
        %v1802 = vunpack.c.l.b16 %v1668
        %v1803 = vunpack.c.h.b16 %v1668
        %v1804 = vunpack.c.l.b16 %v1669
        %v1805 = vunpack.c.h.b16 %v1669
        %v1806 = vunpack.c.l.b16 %v1670
        %v1807 = vunpack.c.h.b16 %v1670
        %v1808 = vunpack.c.l.b16 %v1671
        %v1809 = vunpack.c.h.b16 %v1671
        %v1810 = vunpack.c.l.b16 %v1672
        %v1811 = vunpack.c.h.b16 %v1672
        %v1812 = vunpack.c.l.b16 %v1673
        %v1813 = vunpack.c.h.b16 %v1673
        %v1814 = vunpack.c.l.b16 %v1674
        %v1815 = vunpack.c.h.b16 %v1674
        %v1816 = vunpack.c.l.b16 %v1675
        %v1817 = vunpack.c.h.b16 %v1675
        %v1818 = vunpack.c.l.b16 %v1676
        %v1819 = vunpack.c.h.b16 %v1676
        %v1820 = vunpack.c.l.b16 %v1677
        %v1821 = vunpack.c.h.b16 %v1677
        %v1822 = vunpack.c.l.b16 %v1678
        %v1823 = vunpack.c.h.b16 %v1678
        %v1824 = vunpack.c.l.b16 %v1679
        %v1825 = vunpack.c.h.b16 %v1679
        %v1826 = vunpack.c.l.b16 %v1680
        %v1827 = vunpack.c.h.b16 %v1680
        %v1828 = vunpack.c.l.b16 %v1681
        %v1829 = vunpack.c.h.b16 %v1681
        %v1830 = vunpack.c.l.b16 %v1682
        %v1831 = vunpack.c.h.b16 %v1682
        %v1832 = vunpack.c.l.b16 %v1683
        %v1833 = vunpack.c.h.b16 %v1683
        %v1834 = vunpack.c.l.b16 %v1684
        %v1835 = vunpack.c.h.b16 %v1684
        %v1836 = vunpack.c.l.b16 %v1685
        %v1837 = vunpack.c.h.b16 %v1685
        %v1838 = vunpack.c.l.b16 %v1686
        %v1839 = vunpack.c.h.b16 %v1686
        %v1840 = vunpack.c.l.b16 %v1687
        %v1841 = vunpack.c.h.b16 %v1687
        %v1842 = vunpack.c.l.b16 %v1688
        %v1843 = vunpack.c.h.b16 %v1688
        %v1844 = vunpack.c.l.b16 %v1689
        %v1845 = vunpack.c.h.b16 %v1689
        %v1846 = vunpack.c.l.b16 %v1690
        %v1847 = vunpack.c.h.b16 %v1690
        %v1848 = vunpack.c.l.b16 %v1691
        %v1849 = vunpack.c.h.b16 %v1691
        %v1850 = vunpack.c.l.b16 %v1692
        %v1851 = vunpack.c.h.b16 %v1692
        %v1852 = vunpack.c.l.b16 %v1693
        %v1853 = vunpack.c.h.b16 %v1693
        %v1854 = vunpack.c.l.b16 %v1694
        %v1855 = vunpack.c.h.b16 %v1694
        %v1856 = vunpack.c.l.b16 %v1695
        %v1857 = vunpack.c.h.b16 %v1695
        %v1858 = vunpack.c.l.b16 %v1696
        %v1859 = vunpack.c.h.b16 %v1696
        %v1860 = vunpack.c.l.b16 %v1697
        %v1861 = vunpack.c.h.b16 %v1697
        %v1862 = vunpack.c.l.b16 %v1698
        %v1863 = vunpack.c.h.b16 %v1698
        %v1864 = vunpack.c.l.b16 %v1699
        %v1865 = vunpack.c.h.b16 %v1699
        %v1866 = vunpack.c.l.b16 %v1700
        %v1867 = vunpack.c.h.b16 %v1700
        %v1868 = vunpack.c.l.b16 %v1701
        %v1869 = vunpack.c.h.b16 %v1701
        %v1870 = vunpack.c.l.b16 %v1702
        %v1871 = vunpack.c.h.b16 %v1702
        %v1872 = vunpack.c.l.b16 %v1703
        %v1873 = vunpack.c.h.b16 %v1703
        %v1874 = vunpack.c.l.b16 %v1704
        %v1875 = vunpack.c.h.b16 %v1704
        %v1876 = vunpack.c.l.b16 %v1705
        %v1877 = vunpack.c.h.b16 %v1705
        %v1878 = vunpack.c.l.b16 %v1706
        %v1879 = vunpack.c.h.b16 %v1706
        %v1880 = vunpack.c.l.b16 %v1707
        %v1881 = vunpack.c.h.b16 %v1707
        %v1882 = vunpack.c.l.b16 %v1708
        %v1883 = vunpack.c.h.b16 %v1708
        %v1884 = vunpack.c.l.b16 %v1709
        %v1885 = vunpack.c.h.b16 %v1709
        %v1886 = vpack.c.b16 %v1792, %v1790
        %v1887 = vpack.c.b16 %v1793, %v1791
        %v1888 = vpack.c.b16 %v1796, %v1794
        %v1889 = vpack.c.b16 %v1797, %v1795
        %v1890 = vpack.c.b16 %v1800, %v1798
        %v1891 = vpack.c.b16 %v1801, %v1799
        %v1892 = vpack.c.b16 %v1804, %v1802
        %v1893 = vpack.c.b16 %v1805, %v1803
        %v1894 = vpack.c.b16 %v1808, %v1806
        %v1895 = vpack.c.b16 %v1809, %v1807
        %v1896 = vpack.c.b16 %v1812, %v1810
        %v1897 = vpack.c.b16 %v1813, %v1811
        %v1898 = vpack.c.b16 %v1816, %v1814
        %v1899 = vpack.c.b16 %v1817, %v1815
        %v1900 = vpack.c.b16 %v1820, %v1818
        %v1901 = vpack.c.b16 %v1821, %v1819
        %v1902 = vpack.c.b16 %v1824, %v1822
        %v1903 = vpack.c.b16 %v1825, %v1823
        %v1904 = vpack.c.b16 %v1828, %v1826
        %v1905 = vpack.c.b16 %v1829, %v1827
        %v1906 = vpack.c.b16 %v1832, %v1830
        %v1907 = vpack.c.b16 %v1833, %v1831
        %v1908 = vpack.c.b16 %v1836, %v1834
        %v1909 = vpack.c.b16 %v1837, %v1835
        %v1910 = vpack.c.b16 %v1840, %v1838
        %v1911 = vpack.c.b16 %v1841, %v1839
        %v1912 = vpack.c.b16 %v1844, %v1842
        %v1913 = vpack.c.b16 %v1845, %v1843
        %v1914 = vpack.c.b16 %v1848, %v1846
        %v1915 = vpack.c.b16 %v1849, %v1847
        %v1916 = vpack.c.b16 %v1852, %v1850
        %v1917 = vpack.c.b16 %v1853, %v1851
        %v1918 = vpack.c.b16 %v1856, %v1854
        %v1919 = vpack.c.b16 %v1857, %v1855
        %v1920 = vpack.c.b16 %v1860, %v1858
        %v1921 = vpack.c.b16 %v1861, %v1859
        %v1922 = vpack.c.b16 %v1864, %v1862
        %v1923 = vpack.c.b16 %v1865, %v1863
        %v1924 = vpack.c.b16 %v1868, %v1866
        %v1925 = vpack.c.b16 %v1869, %v1867
        %v1926 = vpack.c.b16 %v1872, %v1870
        %v1927 = vpack.c.b16 %v1873, %v1871
        %v1928 = vpack.c.b16 %v1876, %v1874
        %v1929 = vpack.c.b16 %v1877, %v1875
        %v1930 = vpack.c.b16 %v1880, %v1878
        %v1931 = vpack.c.b16 %v1881, %v1879
        %v1932 = vpack.c.b16 %v1884, %v1882
        %v1933 = vpack.c.b16 %v1885, %v1883
        %1982 = vmatprep.subr.bf16.mxu0 %v1887
        %1983 = vmatpush1.bf16.msra.mxu0 %v1886
        %1984 = vmatprep.subr.bf16.mxu0 %v1889
        %1985 = vmatpush1.bf16.msra.mxu0 %v1888
        %1986 = vmatprep.subr.bf16.mxu0 %v1891
        %1987 = vmatpush1.bf16.msra.mxu0 %v1890
        %1988 = vmatprep.subr.bf16.mxu0 %v1893
        %1989 = vmatpush1.bf16.msra.mxu0 %v1892
        %1990 = vmatprep.subr.bf16.mxu0 %v1895
        %1991 = vmatpush1.bf16.msra.mxu0 %v1894
        %1992 = vmatprep.subr.bf16.mxu0 %v1897
        %1993 = vmatpush1.bf16.msra.mxu0 %v1896
        %1994 = vmatprep.subr.bf16.mxu0 %v1899
        %1995 = vmatpush1.bf16.msra.mxu0 %v1898
        %1996 = vmatprep.subr.bf16.mxu0 %v1901
        %1997 = vmatpush1.bf16.msra.mxu0 %v1900
        %1998 = vmatprep.subr.bf16.mxu0 %v1903
        %1999 = vmatpush1.bf16.msra.mxu0 %v1902
        %2000 = vmatprep.subr.bf16.mxu0 %v1905
        %2001 = vmatpush1.bf16.msra.mxu0 %v1904
        %2002 = vmatprep.subr.bf16.mxu0 %v1907
        %2003 = vmatpush1.bf16.msra.mxu0 %v1906
        %2004 = vmatprep.subr.bf16.mxu0 %v1909
        %2005 = vmatpush1.bf16.msra.mxu0 %v1908
        %2006 = vmatprep.subr.bf16.mxu0 %v1911
        %2007 = vmatpush1.bf16.msra.mxu0 %v1910
        %2008 = vmatprep.subr.bf16.mxu0 %v1913
        %2009 = vmatpush1.bf16.msra.mxu0 %v1912
        %2010 = vmatprep.subr.bf16.mxu0 %v1915
        %2011 = vmatpush1.bf16.msra.mxu0 %v1914
        %2012 = vmatprep.subr.bf16.mxu0 %v1917
        %2013 = vmatpush1.bf16.msra.mxu0 %v1916
        %2014 = vmatprep.mubr.bf16.mxu0 %v1729
        %2015 = vmatmul.mubr.bf16.gmra.mrb[0].mxu0 %v1728
        %v2016 = vpop.f32.mrb[0].mxu0
        %v2017 = vadd.f32 %v1735, %v2016
        %v2018 = vpop.f32.mrb[0].mxu0
        %v2019 = vadd.f32 %v1739, %v2018
        %v2020 = vpop.f32.mrb[0].mxu0
        %v2021 = vpop.f32.mrb[0].mxu0
        %2022 = vdwg.mxu0
        %2023 = vmatprep.subr.bf16.mxu0 %v1919
        %2024 = vmatpush1.bf16.msra.mxu0 %v1918
        %2025 = vmatprep.subr.bf16.mxu0 %v1921
        %2026 = vmatpush1.bf16.msra.mxu0 %v1920
        %2027 = vmatprep.subr.bf16.mxu0 %v1923
        %2028 = vmatpush1.bf16.msra.mxu0 %v1922
        %2029 = vmatprep.subr.bf16.mxu0 %v1925
        %2030 = vmatpush1.bf16.msra.mxu0 %v1924
        %2031 = vmatprep.subr.bf16.mxu0 %v1927
        %2032 = vmatpush1.bf16.msra.mxu0 %v1926
        %2033 = vmatprep.subr.bf16.mxu0 %v1929
        %2034 = vmatpush1.bf16.msra.mxu0 %v1928
        %2035 = vmatprep.subr.bf16.mxu0 %v1931
        %2036 = vmatpush1.bf16.msra.mxu0 %v1930
        %2037 = vmatprep.subr.bf16.mxu0 %v1933
        %2038 = vmatpush1.bf16.msra.mxu0 %v1932
        %2039 = vmatprep.subr.bf16.mxu0 0
        %2040 = vmatpush1.bf16.msra.mxu0 0
        %2041 = vmatprep.subr.bf16.mxu0 0
        %2042 = vmatpush1.bf16.msra.mxu0 0
        %2043 = vmatprep.subr.bf16.mxu0 0
        %2044 = vmatpush1.bf16.msra.mxu0 0
        %2045 = vmatprep.subr.bf16.mxu0 0
        %2046 = vmatpush1.bf16.msra.mxu0 0
        %2047 = vmatprep.subr.bf16.mxu0 0
        %2048 = vmatpush1.bf16.msra.mxu0 0
        %2049 = vmatprep.subr.bf16.mxu0 0
        %2050 = vmatpush1.bf16.msra.mxu0 0
        %2051 = vmatprep.subr.bf16.mxu0 0
        %2052 = vmatpush1.bf16.msra.mxu0 0
        %2053 = vmatprep.subr.bf16.mxu0 0
        %2054 = vmatpush1.bf16.msra.mxu0 0
        %2055 = vmatprep.mubr.bf16.mxu0 0
        %2056 = vmatmul.mubr.bf16.gmra.mrb[0].mxu0 %v1730
        %v2057 = vpop.f32.mrb[0].mxu0
        %v2058 = vadd.f32 %v2017, %v2057
        %v2059 = vpop.f32.mrb[0].mxu0
        %v2060 = vadd.f32 %v2019, %v2059
        %v2061 = vpop.f32.mrb[0].mxu0
        %v2062 = vpop.f32.mrb[0].mxu0
        %2063 = vdwg.mxu0
        %v2066 = vcombine.low %v2058, %v2060
        %v2068 = vunpack.c.l.s4 1983009808
        %v2069 = vunpack.c.0.s8 %v2068
        %v2070 = vlaneseq
        %v2071 = vshrl.u32 %v2070, 7
        %v2072 = vsub.s32 %v2069, %v2071
        %v2073 = vrot.slane %v2066, %v2072
        %v2074 = vcombine.high %v2073, %v2073
        %v2076 = vunpack.c.l.s4 1983009808
        %v2077 = vunpack.c.0.s8 %v2076
        %v2078 = vlaneseq
        %v2079 = vshrl.u32 %v2078, 7
        %v2080 = vsub.s32 %v2077, %v2079
        %v2081 = vrot.slane %v2073, %v2080
        %v2082 = vcombine.high %v2081, %v2081
        %v2084 = vunpack.c.l.s4 1983009808
        %v2085 = vunpack.c.0.s8 %v2084
        %v2086 = vlaneseq
        %v2087 = vshrl.u32 %v2086, 7
        %v2088 = vsub.s32 %v2085, %v2087
        %v2089 = vrot.slane %v2074, %v2088
        %v2090 = vcombine.high %v2089, %v2089
        %v2095 = vsel %vm819, %v2081, -inf
        %v2096 = vrot.slane %v2095, 4
        %v2097 = vmax.f32 %v2095, %v2096
        %v2098 = vrot.slane %v2097, 2
        %v2099 = vmax.f32 %v2097, %v2098
        %v2100 = vrot.slane %v2099, 1
        %v2101 = vmax.f32 %v2099, %v2100
        %v2102 = vsel %vm819, %v2082, -inf
        %v2103 = vrot.slane %v2102, 4
        %v2104 = vmax.f32 %v2102, %v2103
        %v2105 = vrot.slane %v2104, 2
        %v2106 = vmax.f32 %v2104, %v2105
        %v2107 = vrot.slane %v2106, 1
        %v2108 = vmax.f32 %v2106, %v2107
        %v2109 = vsel %vm819, %v2089, -inf
        %v2110 = vrot.slane %v2109, 4
        %v2111 = vmax.f32 %v2109, %v2110
        %v2112 = vrot.slane %v2111, 2
        %v2113 = vmax.f32 %v2111, %v2112
        %v2114 = vrot.slane %v2113, 1
        %v2115 = vmax.f32 %v2113, %v2114
        %v2116 = vsel %vm819, %v2090, -inf
        %v2117 = vrot.slane %v2116, 4
        %v2118 = vmax.f32 %v2116, %v2117
        %v2119 = vrot.slane %v2118, 2
        %v2120 = vmax.f32 %v2118, %v2119
        %v2121 = vrot.slane %v2120, 1
        %v2122 = vmax.f32 %v2120, %v2121
        %v2123 = vmax.f32 %v2101, 0.0
        %v2124 = vmax.f32 %v2108, 0.0
        %v2125 = vmax.f32 %v2115, 0.0
        %v2126 = vmax.f32 %v2122, 0.0
        %v2131 = vcombine.low %v2123, %v2124
        %v2132 = vcombine.low %v2125, %v2126
        %v2133 = vrot.slane %v2132, 7
        %v2134 = vsel %vm1403, %v2133, %v2131
        %v2135 = vsel %vm1411, %v2133, %v2134
        %v2138 = vunpack.c.l.s4 1966171168
        %v2139 = vunpack.c.0.s8 %v2138
        %v2140 = vlaneseq
        %v2141 = vshrl.u32 %v2140, 7
        %v2142 = vsub.s32 %v2139, %v2141
        %v2143 = vrot.slane %v2135, %v2142
        %v2145 = vlaneseq
        %v2146 = vshrl.u32 %v2145, 7
        %v2147 = vsub.s32 0, %v2146
        %v2148 = vrot.slane %v2143, %v2147
        %v2149 = vlaneseq
        %v2150 = vshrl.u32 %v2149, 7
        %v2151 = vsub.s32 2, %v2150
        %v2152 = vrot.slane %v2143, %v2151
        %v2153 = vlaneseq
        %v2154 = vshrl.u32 %v2153, 7
        %v2155 = vsub.s32 4, %v2154
        %v2156 = vrot.slane %v2143, %v2155
        %v2157 = vlaneseq
        %v2158 = vshrl.u32 %v2157, 7
        %v2159 = vsub.s32 6, %v2158
        %v2160 = vrot.slane %v2143, %v2159
        %v2165 = vpack.c.bf16 %v2148, %v2148
        %v2166 = vpack.c.bf16 %v2152, %v2152
        %v2167 = vpack.c.bf16 %v2156, %v2156
        %v2168 = vpack.c.bf16 %v2160, %v2160
        %v2169 = vld [vmem:[#allocation5] sm:$0xff]
        %v2170 = vld [vmem:[#allocation5 + $0x8] sm:$0xff]
        %v2171 = vld [vmem:[#allocation5 + $0x10] sm:$0xff]
        %v2172 = vld [vmem:[#allocation5 + $0x18] sm:$0xff]
        %v2173 = vld [vmem:[#allocation5 + $0x20] sm:$0xff]
        %v2174 = vld [vmem:[#allocation5 + $0x28] sm:$0xff]
        %v2175 = vld [vmem:[#allocation5 + $0x30] sm:$0xff]
        %v2176 = vld [vmem:[#allocation5 + $0x38] sm:$0xff]
        %v2177 = vld [vmem:[#allocation5 + $0x40] sm:$0xff]
        %v2178 = vld [vmem:[#allocation5 + $0x48] sm:$0xff]
        %v2179 = vld [vmem:[#allocation5 + $0x50] sm:$0xff]
        %v2180 = vld [vmem:[#allocation5 + $0x58] sm:$0xff]
        %v2181 = vld [vmem:[#allocation5 + $0x60] sm:$0xff]
        %v2182 = vld [vmem:[#allocation5 + $0x68] sm:$0xff]
        %v2183 = vld [vmem:[#allocation5 + $0x70] sm:$0xff]
        %v2184 = vld [vmem:[#allocation5 + $0x78] sm:$0xff]
        %v2185 = vld [vmem:[#allocation5 + $0x80] sm:$0xff]
        %v2186 = vld [vmem:[#allocation5 + $0x88] sm:$0xff]
        %v2187 = vld [vmem:[#allocation5 + $0x90] sm:$0xff]
        %v2188 = vld [vmem:[#allocation5 + $0x98] sm:$0xff]
        %v2189 = vld [vmem:[#allocation5 + $0xa0] sm:$0xff]
        %v2190 = vld [vmem:[#allocation5 + $0xa8] sm:$0xff]
        %v2191 = vld [vmem:[#allocation5 + $0xb0] sm:$0xff]
        %v2192 = vld [vmem:[#allocation5 + $0xb8] sm:$0xff]
        %v2193 = vld [vmem:[#allocation5 + $0xc0] sm:$0xff]
        %v2194 = vld [vmem:[#allocation5 + $0xc8] sm:$0xff]
        %v2195 = vld [vmem:[#allocation5 + $0xd0] sm:$0xff]
        %v2196 = vld [vmem:[#allocation5 + $0xd8] sm:$0xff]
        %v2197 = vld [vmem:[#allocation5 + $0xe0] sm:$0xff]
        %v2198 = vld [vmem:[#allocation5 + $0xe8] sm:$0xff]
        %v2199 = vld [vmem:[#allocation5 + $0xf0] sm:$0xff]
        %v2200 = vld [vmem:[#allocation5 + $0xf8] sm:$0xff]
        %v2201 = vld [vmem:[#allocation5 + $0x100] sm:$0xff]
        %v2202 = vld [vmem:[#allocation5 + $0x108] sm:$0xff]
        %v2203 = vld [vmem:[#allocation5 + $0x110] sm:$0xff]
        %v2204 = vld [vmem:[#allocation5 + $0x118] sm:$0xff]
        %v2205 = vld [vmem:[#allocation5 + $0x120] sm:$0xff]
        %v2206 = vld [vmem:[#allocation5 + $0x128] sm:$0xff]
        %v2207 = vld [vmem:[#allocation5 + $0x130] sm:$0xff]
        %v2208 = vld [vmem:[#allocation5 + $0x138] sm:$0xff]
        %v2209 = vld [vmem:[#allocation5 + $0x140] sm:$0xff]
        %v2210 = vld [vmem:[#allocation5 + $0x148] sm:$0xff]
        %v2211 = vld [vmem:[#allocation5 + $0x150] sm:$0xff]
        %v2212 = vld [vmem:[#allocation5 + $0x158] sm:$0xff]
        %v2213 = vld [vmem:[#allocation5 + $0x160] sm:$0xff]
        %v2214 = vld [vmem:[#allocation5 + $0x168] sm:$0xff]
        %v2215 = vld [vmem:[#allocation5 + $0x170] sm:$0xff]
        %v2216 = vld [vmem:[#allocation5 + $0x178] sm:$0xff]
        %v2217 = vld [vmem:[#allocation5 + $0x180] sm:$0xff]
        %v2218 = vld [vmem:[#allocation5 + $0x188] sm:$0xff]
        %v2219 = vld [vmem:[#allocation5 + $0x190] sm:$0xff]
        %v2220 = vld [vmem:[#allocation5 + $0x198] sm:$0xff]
        %v2221 = vld [vmem:[#allocation5 + $0x1a0] sm:$0xff]
        %v2222 = vld [vmem:[#allocation5 + $0x1a8] sm:$0xff]
        %v2223 = vld [vmem:[#allocation5 + $0x1b0] sm:$0xff]
        %v2224 = vld [vmem:[#allocation5 + $0x1b8] sm:$0xff]
        %v2225 = vld [vmem:[#allocation5 + $0x1c0] sm:$0xff]
        %v2226 = vld [vmem:[#allocation5 + $0x1c8] sm:$0xff]
        %v2227 = vld [vmem:[#allocation5 + $0x1d0] sm:$0xff]
        %v2228 = vld [vmem:[#allocation5 + $0x1d8] sm:$0xff]
        %v2229 = vld [vmem:[#allocation5 + $0x1e0] sm:$0xff]
        %v2230 = vld [vmem:[#allocation5 + $0x1e8] sm:$0xff]
        %v2231 = vld [vmem:[#allocation5 + $0x1f0] sm:$0xff]
        %v2232 = vld [vmem:[#allocation5 + $0x1f8] sm:$0xff]
        %v2233 = vld [vmem:[#allocation5 + $0x200] sm:$0xff]
        %v2234 = vld [vmem:[#allocation5 + $0x208] sm:$0xff]
        %v2235 = vld [vmem:[#allocation5 + $0x210] sm:$0xff]
        %v2236 = vld [vmem:[#allocation5 + $0x218] sm:$0xff]
        %v2237 = vld [vmem:[#allocation5 + $0x220] sm:$0xff]
        %v2238 = vld [vmem:[#allocation5 + $0x228] sm:$0xff]
        %v2239 = vld [vmem:[#allocation5 + $0x230] sm:$0xff]
        %v2240 = vld [vmem:[#allocation5 + $0x238] sm:$0xff]
        %v2241 = vld [vmem:[#allocation5 + $0x240] sm:$0xff]
        %v2242 = vld [vmem:[#allocation5 + $0x248] sm:$0xff]
        %v2243 = vld [vmem:[#allocation5 + $0x250] sm:$0xff]
        %v2244 = vld [vmem:[#allocation5 + $0x258] sm:$0xff]
        %v2245 = vld [vmem:[#allocation5 + $0x260] sm:$0xff]
        %v2246 = vld [vmem:[#allocation5 + $0x268] sm:$0xff]
        %v2247 = vld [vmem:[#allocation5 + $0x270] sm:$0xff]
        %v2248 = vld [vmem:[#allocation5 + $0x278] sm:$0xff]
        %v2249 = vld [vmem:[#allocation5 + $0x280] sm:$0xff]
        %v2250 = vld [vmem:[#allocation5 + $0x288] sm:$0xff]
        %v2251 = vld [vmem:[#allocation5 + $0x290] sm:$0xff]
        %v2252 = vld [vmem:[#allocation5 + $0x298] sm:$0xff]
        %v2253 = vld [vmem:[#allocation5 + $0x2a0] sm:$0xff]
        %v2254 = vld [vmem:[#allocation5 + $0x2a8] sm:$0xff]
        %v2255 = vld [vmem:[#allocation5 + $0x2b0] sm:$0xff]
        %v2256 = vld [vmem:[#allocation5 + $0x2b8] sm:$0xff]
        %v2257 = vld [vmem:[#allocation5 + $0x2c0] sm:$0xff]
        %v2258 = vld [vmem:[#allocation5 + $0x2c8] sm:$0xff]
        %v2259 = vld [vmem:[#allocation5 + $0x2d0] sm:$0xff]
        %v2260 = vld [vmem:[#allocation5 + $0x2d8] sm:$0xff]
        %v2261 = vld [vmem:[#allocation5 + $0x2e0] sm:$0xff]
        %v2262 = vld [vmem:[#allocation5 + $0x2e8] sm:$0xff]
        %v2263 = vld [vmem:[#allocation5 + $0x2f0] sm:$0xff]
        %v2264 = vld [vmem:[#allocation5 + $0x2f8] sm:$0xff]
        %v2265 = vld [vmem:[#allocation5 + $0x300] sm:$0xff]
        %v2266 = vld [vmem:[#allocation5 + $0x308] sm:$0xff]
        %v2267 = vld [vmem:[#allocation5 + $0x310] sm:$0xff]
        %v2268 = vld [vmem:[#allocation5 + $0x318] sm:$0xff]
        %v2269 = vld [vmem:[#allocation5 + $0x320] sm:$0xff]
        %v2270 = vld [vmem:[#allocation5 + $0x328] sm:$0xff]
        %v2271 = vld [vmem:[#allocation5 + $0x330] sm:$0xff]
        %v2272 = vld [vmem:[#allocation5 + $0x338] sm:$0xff]
        %v2273 = vld [vmem:[#allocation5 + $0x340] sm:$0xff]
        %v2274 = vld [vmem:[#allocation5 + $0x348] sm:$0xff]
        %v2275 = vld [vmem:[#allocation5 + $0x350] sm:$0xff]
        %v2276 = vld [vmem:[#allocation5 + $0x358] sm:$0xff]
        %v2277 = vld [vmem:[#allocation5 + $0x360] sm:$0xff]
        %v2278 = vld [vmem:[#allocation5 + $0x368] sm:$0xff]
        %v2279 = vld [vmem:[#allocation5 + $0x370] sm:$0xff]
        %v2280 = vld [vmem:[#allocation5 + $0x378] sm:$0xff]
        %v2281 = vld [vmem:[#allocation5 + $0x380] sm:$0xff]
        %v2282 = vld [vmem:[#allocation5 + $0x388] sm:$0xff]
        %v2283 = vld [vmem:[#allocation5 + $0x390] sm:$0xff]
        %v2284 = vld [vmem:[#allocation5 + $0x398] sm:$0xff]
        %v2285 = vld [vmem:[#allocation5 + $0x3a0] sm:$0xff]
        %v2286 = vld [vmem:[#allocation5 + $0x3a8] sm:$0xff]
        %v2287 = vld [vmem:[#allocation5 + $0x3b0] sm:$0xff]
        %v2288 = vld [vmem:[#allocation5 + $0x3b8] sm:$0xff]
        %v2289 = vld [vmem:[#allocation5 + $0x3c0] sm:$0xff]
        %v2290 = vld [vmem:[#allocation5 + $0x3c8] sm:$0xff]
        %v2291 = vld [vmem:[#allocation5 + $0x3d0] sm:$0xff]
        %v2292 = vld [vmem:[#allocation5 + $0x3d8] sm:$0xff]
        %v2293 = vld [vmem:[#allocation5 + $0x3e0] sm:$0xff]
        %v2294 = vld [vmem:[#allocation5 + $0x3e8] sm:$0xff]
        %v2295 = vld [vmem:[#allocation5 + $0x3f0] sm:$0xff]
        %v2296 = vld [vmem:[#allocation5 + $0x3f8] sm:$0xff]
        %v2425 = vunpack.c.l.b16 %v2169
        %v2426 = vunpack.c.h.b16 %v2169
        %v2427 = vunpack.c.l.b16 %v2170
        %v2428 = vunpack.c.h.b16 %v2170
        %v2429 = vunpack.c.l.b16 %v2171
        %v2430 = vunpack.c.h.b16 %v2171
        %v2431 = vunpack.c.l.b16 %v2172
        %v2432 = vunpack.c.h.b16 %v2172
        %v2433 = vunpack.c.l.b16 %v2173
        %v2434 = vunpack.c.h.b16 %v2173
        %v2435 = vunpack.c.l.b16 %v2174
        %v2436 = vunpack.c.h.b16 %v2174
        %v2437 = vunpack.c.l.b16 %v2175
        %v2438 = vunpack.c.h.b16 %v2175
        %v2439 = vunpack.c.l.b16 %v2176
        %v2440 = vunpack.c.h.b16 %v2176
        %v2441 = vunpack.c.l.b16 %v2177
        %v2442 = vunpack.c.h.b16 %v2177
        %v2443 = vunpack.c.l.b16 %v2178
        %v2444 = vunpack.c.h.b16 %v2178
        %v2445 = vunpack.c.l.b16 %v2179
        %v2446 = vunpack.c.h.b16 %v2179
        %v2447 = vunpack.c.l.b16 %v2180
        %v2448 = vunpack.c.h.b16 %v2180
        %v2449 = vunpack.c.l.b16 %v2181
        %v2450 = vunpack.c.h.b16 %v2181
        %v2451 = vunpack.c.l.b16 %v2182
        %v2452 = vunpack.c.h.b16 %v2182
        %v2453 = vunpack.c.l.b16 %v2183
        %v2454 = vunpack.c.h.b16 %v2183
        %v2455 = vunpack.c.l.b16 %v2184
        %v2456 = vunpack.c.h.b16 %v2184
        %v2457 = vunpack.c.l.b16 %v2185
        %v2458 = vunpack.c.h.b16 %v2185
        %v2459 = vunpack.c.l.b16 %v2186
        %v2460 = vunpack.c.h.b16 %v2186
        %v2461 = vunpack.c.l.b16 %v2187
        %v2462 = vunpack.c.h.b16 %v2187
        %v2463 = vunpack.c.l.b16 %v2188
        %v2464 = vunpack.c.h.b16 %v2188
        %v2465 = vunpack.c.l.b16 %v2189
        %v2466 = vunpack.c.h.b16 %v2189
        %v2467 = vunpack.c.l.b16 %v2190
        %v2468 = vunpack.c.h.b16 %v2190
        %v2469 = vunpack.c.l.b16 %v2191
        %v2470 = vunpack.c.h.b16 %v2191
        %v2471 = vunpack.c.l.b16 %v2192
        %v2472 = vunpack.c.h.b16 %v2192
        %v2473 = vunpack.c.l.b16 %v2193
        %v2474 = vunpack.c.h.b16 %v2193
        %v2475 = vunpack.c.l.b16 %v2194
        %v2476 = vunpack.c.h.b16 %v2194
        %v2477 = vunpack.c.l.b16 %v2195
        %v2478 = vunpack.c.h.b16 %v2195
        %v2479 = vunpack.c.l.b16 %v2196
        %v2480 = vunpack.c.h.b16 %v2196
        %v2481 = vunpack.c.l.b16 %v2197
        %v2482 = vunpack.c.h.b16 %v2197
        %v2483 = vunpack.c.l.b16 %v2198
        %v2484 = vunpack.c.h.b16 %v2198
        %v2485 = vunpack.c.l.b16 %v2199
        %v2486 = vunpack.c.h.b16 %v2199
        %v2487 = vunpack.c.l.b16 %v2200
        %v2488 = vunpack.c.h.b16 %v2200
        %v2489 = vunpack.c.l.b16 %v2201
        %v2490 = vunpack.c.h.b16 %v2201
        %v2491 = vunpack.c.l.b16 %v2202
        %v2492 = vunpack.c.h.b16 %v2202
        %v2493 = vunpack.c.l.b16 %v2203
        %v2494 = vunpack.c.h.b16 %v2203
        %v2495 = vunpack.c.l.b16 %v2204
        %v2496 = vunpack.c.h.b16 %v2204
        %v2497 = vunpack.c.l.b16 %v2205
        %v2498 = vunpack.c.h.b16 %v2205
        %v2499 = vunpack.c.l.b16 %v2206
        %v2500 = vunpack.c.h.b16 %v2206
        %v2501 = vunpack.c.l.b16 %v2207
        %v2502 = vunpack.c.h.b16 %v2207
        %v2503 = vunpack.c.l.b16 %v2208
        %v2504 = vunpack.c.h.b16 %v2208
        %v2505 = vunpack.c.l.b16 %v2209
        %v2506 = vunpack.c.h.b16 %v2209
        %v2507 = vunpack.c.l.b16 %v2210
        %v2508 = vunpack.c.h.b16 %v2210
        %v2509 = vunpack.c.l.b16 %v2211
        %v2510 = vunpack.c.h.b16 %v2211
        %v2511 = vunpack.c.l.b16 %v2212
        %v2512 = vunpack.c.h.b16 %v2212
        %v2513 = vunpack.c.l.b16 %v2213
        %v2514 = vunpack.c.h.b16 %v2213
        %v2515 = vunpack.c.l.b16 %v2214
        %v2516 = vunpack.c.h.b16 %v2214
        %v2517 = vunpack.c.l.b16 %v2215
        %v2518 = vunpack.c.h.b16 %v2215
        %v2519 = vunpack.c.l.b16 %v2216
        %v2520 = vunpack.c.h.b16 %v2216
        %v2521 = vunpack.c.l.b16 %v2217
        %v2522 = vunpack.c.h.b16 %v2217
        %v2523 = vunpack.c.l.b16 %v2218
        %v2524 = vunpack.c.h.b16 %v2218
        %v2525 = vunpack.c.l.b16 %v2219
        %v2526 = vunpack.c.h.b16 %v2219
        %v2527 = vunpack.c.l.b16 %v2220
        %v2528 = vunpack.c.h.b16 %v2220
        %v2529 = vunpack.c.l.b16 %v2221
        %v2530 = vunpack.c.h.b16 %v2221
        %v2531 = vunpack.c.l.b16 %v2222
        %v2532 = vunpack.c.h.b16 %v2222
        %v2533 = vunpack.c.l.b16 %v2223
        %v2534 = vunpack.c.h.b16 %v2223
        %v2535 = vunpack.c.l.b16 %v2224
        %v2536 = vunpack.c.h.b16 %v2224
        %v2537 = vunpack.c.l.b16 %v2225
        %v2538 = vunpack.c.h.b16 %v2225
        %v2539 = vunpack.c.l.b16 %v2226
        %v2540 = vunpack.c.h.b16 %v2226
        %v2541 = vunpack.c.l.b16 %v2227
        %v2542 = vunpack.c.h.b16 %v2227
        %v2543 = vunpack.c.l.b16 %v2228
        %v2544 = vunpack.c.h.b16 %v2228
        %v2545 = vunpack.c.l.b16 %v2229
        %v2546 = vunpack.c.h.b16 %v2229
        %v2547 = vunpack.c.l.b16 %v2230
        %v2548 = vunpack.c.h.b16 %v2230
        %v2549 = vunpack.c.l.b16 %v2231
        %v2550 = vunpack.c.h.b16 %v2231
        %v2551 = vunpack.c.l.b16 %v2232
        %v2552 = vunpack.c.h.b16 %v2232
        %v2553 = vunpack.c.l.b16 %v2233
        %v2554 = vunpack.c.h.b16 %v2233
        %v2555 = vunpack.c.l.b16 %v2234
        %v2556 = vunpack.c.h.b16 %v2234
        %v2557 = vunpack.c.l.b16 %v2235
        %v2558 = vunpack.c.h.b16 %v2235
        %v2559 = vunpack.c.l.b16 %v2236
        %v2560 = vunpack.c.h.b16 %v2236
        %v2561 = vunpack.c.l.b16 %v2237
        %v2562 = vunpack.c.h.b16 %v2237
        %v2563 = vunpack.c.l.b16 %v2238
        %v2564 = vunpack.c.h.b16 %v2238
        %v2565 = vunpack.c.l.b16 %v2239
        %v2566 = vunpack.c.h.b16 %v2239
        %v2567 = vunpack.c.l.b16 %v2240
        %v2568 = vunpack.c.h.b16 %v2240
        %v2569 = vunpack.c.l.b16 %v2241
        %v2570 = vunpack.c.h.b16 %v2241
        %v2571 = vunpack.c.l.b16 %v2242
        %v2572 = vunpack.c.h.b16 %v2242
        %v2573 = vunpack.c.l.b16 %v2243
        %v2574 = vunpack.c.h.b16 %v2243
        %v2575 = vunpack.c.l.b16 %v2244
        %v2576 = vunpack.c.h.b16 %v2244
        %v2577 = vunpack.c.l.b16 %v2245
        %v2578 = vunpack.c.h.b16 %v2245
        %v2579 = vunpack.c.l.b16 %v2246
        %v2580 = vunpack.c.h.b16 %v2246
        %v2581 = vunpack.c.l.b16 %v2247
        %v2582 = vunpack.c.h.b16 %v2247
        %v2583 = vunpack.c.l.b16 %v2248
        %v2584 = vunpack.c.h.b16 %v2248
        %v2585 = vunpack.c.l.b16 %v2249
        %v2586 = vunpack.c.h.b16 %v2249
        %v2587 = vunpack.c.l.b16 %v2250
        %v2588 = vunpack.c.h.b16 %v2250
        %v2589 = vunpack.c.l.b16 %v2251
        %v2590 = vunpack.c.h.b16 %v2251
        %v2591 = vunpack.c.l.b16 %v2252
        %v2592 = vunpack.c.h.b16 %v2252
        %v2593 = vunpack.c.l.b16 %v2253
        %v2594 = vunpack.c.h.b16 %v2253
        %v2595 = vunpack.c.l.b16 %v2254
        %v2596 = vunpack.c.h.b16 %v2254
        %v2597 = vunpack.c.l.b16 %v2255
        %v2598 = vunpack.c.h.b16 %v2255
        %v2599 = vunpack.c.l.b16 %v2256
        %v2600 = vunpack.c.h.b16 %v2256
        %v2601 = vunpack.c.l.b16 %v2257
        %v2602 = vunpack.c.h.b16 %v2257
        %v2603 = vunpack.c.l.b16 %v2258
        %v2604 = vunpack.c.h.b16 %v2258
        %v2605 = vunpack.c.l.b16 %v2259
        %v2606 = vunpack.c.h.b16 %v2259
        %v2607 = vunpack.c.l.b16 %v2260
        %v2608 = vunpack.c.h.b16 %v2260
        %v2609 = vunpack.c.l.b16 %v2261
        %v2610 = vunpack.c.h.b16 %v2261
        %v2611 = vunpack.c.l.b16 %v2262
        %v2612 = vunpack.c.h.b16 %v2262
        %v2613 = vunpack.c.l.b16 %v2263
        %v2614 = vunpack.c.h.b16 %v2263
        %v2615 = vunpack.c.l.b16 %v2264
        %v2616 = vunpack.c.h.b16 %v2264
        %v2617 = vunpack.c.l.b16 %v2265
        %v2618 = vunpack.c.h.b16 %v2265
        %v2619 = vunpack.c.l.b16 %v2266
        %v2620 = vunpack.c.h.b16 %v2266
        %v2621 = vunpack.c.l.b16 %v2267
        %v2622 = vunpack.c.h.b16 %v2267
        %v2623 = vunpack.c.l.b16 %v2268
        %v2624 = vunpack.c.h.b16 %v2268
        %v2625 = vunpack.c.l.b16 %v2269
        %v2626 = vunpack.c.h.b16 %v2269
        %v2627 = vunpack.c.l.b16 %v2270
        %v2628 = vunpack.c.h.b16 %v2270
        %v2629 = vunpack.c.l.b16 %v2271
        %v2630 = vunpack.c.h.b16 %v2271
        %v2631 = vunpack.c.l.b16 %v2272
        %v2632 = vunpack.c.h.b16 %v2272
        %v2633 = vunpack.c.l.b16 %v2273
        %v2634 = vunpack.c.h.b16 %v2273
        %v2635 = vunpack.c.l.b16 %v2274
        %v2636 = vunpack.c.h.b16 %v2274
        %v2637 = vunpack.c.l.b16 %v2275
        %v2638 = vunpack.c.h.b16 %v2275
        %v2639 = vunpack.c.l.b16 %v2276
        %v2640 = vunpack.c.h.b16 %v2276
        %v2641 = vunpack.c.l.b16 %v2277
        %v2642 = vunpack.c.h.b16 %v2277
        %v2643 = vunpack.c.l.b16 %v2278
        %v2644 = vunpack.c.h.b16 %v2278
        %v2645 = vunpack.c.l.b16 %v2279
        %v2646 = vunpack.c.h.b16 %v2279
        %v2647 = vunpack.c.l.b16 %v2280
        %v2648 = vunpack.c.h.b16 %v2280
        %v2649 = vunpack.c.l.b16 %v2281
        %v2650 = vunpack.c.h.b16 %v2281
        %v2651 = vunpack.c.l.b16 %v2282
        %v2652 = vunpack.c.h.b16 %v2282
        %v2653 = vunpack.c.l.b16 %v2283
        %v2654 = vunpack.c.h.b16 %v2283
        %v2655 = vunpack.c.l.b16 %v2284
        %v2656 = vunpack.c.h.b16 %v2284
        %v2657 = vunpack.c.l.b16 %v2285
        %v2658 = vunpack.c.h.b16 %v2285
        %v2659 = vunpack.c.l.b16 %v2286
        %v2660 = vunpack.c.h.b16 %v2286
        %v2661 = vunpack.c.l.b16 %v2287
        %v2662 = vunpack.c.h.b16 %v2287
        %v2663 = vunpack.c.l.b16 %v2288
        %v2664 = vunpack.c.h.b16 %v2288
        %v2665 = vunpack.c.l.b16 %v2289
        %v2666 = vunpack.c.h.b16 %v2289
        %v2667 = vunpack.c.l.b16 %v2290
        %v2668 = vunpack.c.h.b16 %v2290
        %v2669 = vunpack.c.l.b16 %v2291
        %v2670 = vunpack.c.h.b16 %v2291
        %v2671 = vunpack.c.l.b16 %v2292
        %v2672 = vunpack.c.h.b16 %v2292
        %v2673 = vunpack.c.l.b16 %v2293
        %v2674 = vunpack.c.h.b16 %v2293
        %v2675 = vunpack.c.l.b16 %v2294
        %v2676 = vunpack.c.h.b16 %v2294
        %v2677 = vunpack.c.l.b16 %v2295
        %v2678 = vunpack.c.h.b16 %v2295
        %v2679 = vunpack.c.l.b16 %v2296
        %v2680 = vunpack.c.h.b16 %v2296
        %v2681 = vpack.c.b16 %v2429, %v2425
        %v2682 = vpack.c.b16 %v2430, %v2426
        %v2683 = vpack.c.b16 %v2431, %v2427
        %v2684 = vpack.c.b16 %v2432, %v2428
        %v2685 = vpack.c.b16 %v2437, %v2433
        %v2686 = vpack.c.b16 %v2438, %v2434
        %v2687 = vpack.c.b16 %v2439, %v2435
        %v2688 = vpack.c.b16 %v2440, %v2436
        %v2689 = vpack.c.b16 %v2445, %v2441
        %v2690 = vpack.c.b16 %v2446, %v2442
        %v2691 = vpack.c.b16 %v2447, %v2443
        %v2692 = vpack.c.b16 %v2448, %v2444
        %v2693 = vpack.c.b16 %v2453, %v2449
        %v2694 = vpack.c.b16 %v2454, %v2450
        %v2695 = vpack.c.b16 %v2455, %v2451
        %v2696 = vpack.c.b16 %v2456, %v2452
        %v2697 = vpack.c.b16 %v2461, %v2457
        %v2698 = vpack.c.b16 %v2462, %v2458
        %v2699 = vpack.c.b16 %v2463, %v2459
        %v2700 = vpack.c.b16 %v2464, %v2460
        %v2701 = vpack.c.b16 %v2469, %v2465
        %v2702 = vpack.c.b16 %v2470, %v2466
        %v2703 = vpack.c.b16 %v2471, %v2467
        %v2704 = vpack.c.b16 %v2472, %v2468
        %v2705 = vpack.c.b16 %v2477, %v2473
        %v2706 = vpack.c.b16 %v2478, %v2474
        %v2707 = vpack.c.b16 %v2479, %v2475
        %v2708 = vpack.c.b16 %v2480, %v2476
        %v2709 = vpack.c.b16 %v2485, %v2481
        %v2710 = vpack.c.b16 %v2486, %v2482
        %v2711 = vpack.c.b16 %v2487, %v2483
        %v2712 = vpack.c.b16 %v2488, %v2484
        %v2713 = vpack.c.b16 %v2493, %v2489
        %v2714 = vpack.c.b16 %v2494, %v2490
        %v2715 = vpack.c.b16 %v2495, %v2491
        %v2716 = vpack.c.b16 %v2496, %v2492
        %v2717 = vpack.c.b16 %v2501, %v2497
        %v2718 = vpack.c.b16 %v2502, %v2498
        %v2719 = vpack.c.b16 %v2503, %v2499
        %v2720 = vpack.c.b16 %v2504, %v2500
        %v2721 = vpack.c.b16 %v2509, %v2505
        %v2722 = vpack.c.b16 %v2510, %v2506
        %v2723 = vpack.c.b16 %v2511, %v2507
        %v2724 = vpack.c.b16 %v2512, %v2508
        %v2725 = vpack.c.b16 %v2517, %v2513
        %v2726 = vpack.c.b16 %v2518, %v2514
        %v2727 = vpack.c.b16 %v2519, %v2515
        %v2728 = vpack.c.b16 %v2520, %v2516
        %v2729 = vpack.c.b16 %v2525, %v2521
        %v2730 = vpack.c.b16 %v2526, %v2522
        %v2731 = vpack.c.b16 %v2527, %v2523
        %v2732 = vpack.c.b16 %v2528, %v2524
        %v2733 = vpack.c.b16 %v2533, %v2529
        %v2734 = vpack.c.b16 %v2534, %v2530
        %v2735 = vpack.c.b16 %v2535, %v2531
        %v2736 = vpack.c.b16 %v2536, %v2532
        %v2737 = vpack.c.b16 %v2541, %v2537
        %v2738 = vpack.c.b16 %v2542, %v2538
        %v2739 = vpack.c.b16 %v2543, %v2539
        %v2740 = vpack.c.b16 %v2544, %v2540
        %v2741 = vpack.c.b16 %v2549, %v2545
        %v2742 = vpack.c.b16 %v2550, %v2546
        %v2743 = vpack.c.b16 %v2551, %v2547
        %v2744 = vpack.c.b16 %v2552, %v2548
        %v2745 = vpack.c.b16 %v2557, %v2553
        %v2746 = vpack.c.b16 %v2558, %v2554
        %v2747 = vpack.c.b16 %v2559, %v2555
        %v2748 = vpack.c.b16 %v2560, %v2556
        %v2749 = vpack.c.b16 %v2565, %v2561
        %v2750 = vpack.c.b16 %v2566, %v2562
        %v2751 = vpack.c.b16 %v2567, %v2563
        %v2752 = vpack.c.b16 %v2568, %v2564
        %v2753 = vpack.c.b16 %v2573, %v2569
        %v2754 = vpack.c.b16 %v2574, %v2570
        %v2755 = vpack.c.b16 %v2575, %v2571
        %v2756 = vpack.c.b16 %v2576, %v2572
        %v2757 = vpack.c.b16 %v2581, %v2577
        %v2758 = vpack.c.b16 %v2582, %v2578
        %v2759 = vpack.c.b16 %v2583, %v2579
        %v2760 = vpack.c.b16 %v2584, %v2580
        %v2761 = vpack.c.b16 %v2589, %v2585
        %v2762 = vpack.c.b16 %v2590, %v2586
        %v2763 = vpack.c.b16 %v2591, %v2587
        %v2764 = vpack.c.b16 %v2592, %v2588
        %v2765 = vpack.c.b16 %v2597, %v2593
        %v2766 = vpack.c.b16 %v2598, %v2594
        %v2767 = vpack.c.b16 %v2599, %v2595
        %v2768 = vpack.c.b16 %v2600, %v2596
        %v2769 = vpack.c.b16 %v2605, %v2601
        %v2770 = vpack.c.b16 %v2606, %v2602
        %v2771 = vpack.c.b16 %v2607, %v2603
        %v2772 = vpack.c.b16 %v2608, %v2604
        %v2773 = vpack.c.b16 %v2613, %v2609
        %v2774 = vpack.c.b16 %v2614, %v2610
        %v2775 = vpack.c.b16 %v2615, %v2611
        %v2776 = vpack.c.b16 %v2616, %v2612
        %v2777 = vpack.c.b16 %v2621, %v2617
        %v2778 = vpack.c.b16 %v2622, %v2618
        %v2779 = vpack.c.b16 %v2623, %v2619
        %v2780 = vpack.c.b16 %v2624, %v2620
        %v2781 = vpack.c.b16 %v2629, %v2625
        %v2782 = vpack.c.b16 %v2630, %v2626
        %v2783 = vpack.c.b16 %v2631, %v2627
        %v2784 = vpack.c.b16 %v2632, %v2628
        %v2785 = vpack.c.b16 %v2637, %v2633
        %v2786 = vpack.c.b16 %v2638, %v2634
        %v2787 = vpack.c.b16 %v2639, %v2635
        %v2788 = vpack.c.b16 %v2640, %v2636
        %v2789 = vpack.c.b16 %v2645, %v2641
        %v2790 = vpack.c.b16 %v2646, %v2642
        %v2791 = vpack.c.b16 %v2647, %v2643
        %v2792 = vpack.c.b16 %v2648, %v2644
        %v2793 = vpack.c.b16 %v2653, %v2649
        %v2794 = vpack.c.b16 %v2654, %v2650
        %v2795 = vpack.c.b16 %v2655, %v2651
        %v2796 = vpack.c.b16 %v2656, %v2652
        %v2797 = vpack.c.b16 %v2661, %v2657
        %v2798 = vpack.c.b16 %v2662, %v2658
        %v2799 = vpack.c.b16 %v2663, %v2659
        %v2800 = vpack.c.b16 %v2664, %v2660
        %v2801 = vpack.c.b16 %v2669, %v2665
        %v2802 = vpack.c.b16 %v2670, %v2666
        %v2803 = vpack.c.b16 %v2671, %v2667
        %v2804 = vpack.c.b16 %v2672, %v2668
        %v2805 = vpack.c.b16 %v2677, %v2673
        %v2806 = vpack.c.b16 %v2678, %v2674
        %v2807 = vpack.c.b16 %v2679, %v2675
        %v2808 = vpack.c.b16 %v2680, %v2676
        %v2938 = vlaneseq
        %v2939 = vshrl.u32 %v2938, 7
        %v2940 = vsub.s32 0, %v2939
        %v2941 = vrot.slane %v352, %v2940
        %v2942 = vlaneseq
        %v2943 = vshrl.u32 %v2942, 7
        %v2944 = vsub.s32 1, %v2943
        %v2945 = vrot.slane %v352, %v2944
        %v2946 = vlaneseq
        %v2947 = vshrl.u32 %v2946, 7
        %v2948 = vsub.s32 2, %v2947
        %v2949 = vrot.slane %v352, %v2948
        %v2950 = vlaneseq
        %v2951 = vshrl.u32 %v2950, 7
        %v2952 = vsub.s32 3, %v2951
        %v2953 = vrot.slane %v352, %v2952
        %2958 = vmatprep.subr.bf16.mxu0 %v2682
        %2959 = vmatpush1.bf16.msra.mxu0 %v2681
        %2960 = vmatprep.subr.bf16.mxu0 %v2686
        %2961 = vmatpush1.bf16.msra.mxu0 %v2685
        %2962 = vmatprep.subr.bf16.mxu0 %v2690
        %2963 = vmatpush1.bf16.msra.mxu0 %v2689
        %2964 = vmatprep.subr.bf16.mxu0 %v2694
        %2965 = vmatpush1.bf16.msra.mxu0 %v2693
        %2966 = vmatprep.subr.bf16.mxu0 %v2698
        %2967 = vmatpush1.bf16.msra.mxu0 %v2697
        %2968 = vmatprep.subr.bf16.mxu0 %v2702
        %2969 = vmatpush1.bf16.msra.mxu0 %v2701
        %2970 = vmatprep.subr.bf16.mxu0 %v2706
        %2971 = vmatpush1.bf16.msra.mxu0 %v2705
        %2972 = vmatprep.subr.bf16.mxu0 %v2710
        %2973 = vmatpush1.bf16.msra.mxu0 %v2709
        %2974 = vmatprep.subr.bf16.mxu0 %v2714
        %2975 = vmatpush1.bf16.msra.mxu0 %v2713
        %2976 = vmatprep.subr.bf16.mxu0 %v2718
        %2977 = vmatpush1.bf16.msra.mxu0 %v2717
        %2978 = vmatprep.subr.bf16.mxu0 %v2722
        %2979 = vmatpush1.bf16.msra.mxu0 %v2721
        %2980 = vmatprep.subr.bf16.mxu0 %v2726
        %2981 = vmatpush1.bf16.msra.mxu0 %v2725
        %2982 = vmatprep.subr.bf16.mxu0 %v2730
        %2983 = vmatpush1.bf16.msra.mxu0 %v2729
        %2984 = vmatprep.subr.bf16.mxu0 %v2734
        %2985 = vmatpush1.bf16.msra.mxu0 %v2733
        %2986 = vmatprep.subr.bf16.mxu0 %v2738
        %2987 = vmatpush1.bf16.msra.mxu0 %v2737
        %2988 = vmatprep.subr.bf16.mxu0 %v2742
        %2989 = vmatpush1.bf16.msra.mxu0 %v2741
        %2990 = vmatprep.mubr.bf16.mxu0 %v2166
        %2991 = vmatmul.mubr.bf16.gmra.mrb[0].mxu0 %v2165
        %v2992 = vpop.f32.mrb[0].mxu0
        %v2993 = vadd.f32 %v2941, %v2992
        %v2994 = vpop.f32.mrb[0].mxu0
        %v2995 = vadd.f32 %v2945, %v2994
        %v2996 = vpop.f32.mrb[0].mxu0
        %v2997 = vpop.f32.mrb[0].mxu0
        %2998 = vdwg.mxu0
        %2999 = vmatprep.subr.bf16.mxu0 %v2746
        %3000 = vmatpush1.bf16.msra.mxu0 %v2745
        %3001 = vmatprep.subr.bf16.mxu0 %v2750
        %3002 = vmatpush1.bf16.msra.mxu0 %v2749
        %3003 = vmatprep.subr.bf16.mxu0 %v2754
        %3004 = vmatpush1.bf16.msra.mxu0 %v2753
        %3005 = vmatprep.subr.bf16.mxu0 %v2758
        %3006 = vmatpush1.bf16.msra.mxu0 %v2757
        %3007 = vmatprep.subr.bf16.mxu0 %v2762
        %3008 = vmatpush1.bf16.msra.mxu0 %v2761
        %3009 = vmatprep.subr.bf16.mxu0 %v2766
        %3010 = vmatpush1.bf16.msra.mxu0 %v2765
        %3011 = vmatprep.subr.bf16.mxu0 %v2770
        %3012 = vmatpush1.bf16.msra.mxu0 %v2769
        %3013 = vmatprep.subr.bf16.mxu0 %v2774
        %3014 = vmatpush1.bf16.msra.mxu0 %v2773
        %3015 = vmatprep.subr.bf16.mxu0 %v2778
        %3016 = vmatpush1.bf16.msra.mxu0 %v2777
        %3017 = vmatprep.subr.bf16.mxu0 %v2782
        %3018 = vmatpush1.bf16.msra.mxu0 %v2781
        %3019 = vmatprep.subr.bf16.mxu0 %v2786
        %3020 = vmatpush1.bf16.msra.mxu0 %v2785
        %3021 = vmatprep.subr.bf16.mxu0 %v2790
        %3022 = vmatpush1.bf16.msra.mxu0 %v2789
        %3023 = vmatprep.subr.bf16.mxu0 %v2794
        %3024 = vmatpush1.bf16.msra.mxu0 %v2793
        %3025 = vmatprep.subr.bf16.mxu0 %v2798
        %3026 = vmatpush1.bf16.msra.mxu0 %v2797
        %3027 = vmatprep.subr.bf16.mxu0 %v2802
        %3028 = vmatpush1.bf16.msra.mxu0 %v2801
        %3029 = vmatprep.subr.bf16.mxu0 %v2806
        %3030 = vmatpush1.bf16.msra.mxu0 %v2805
        %3031 = vmatprep.mubr.bf16.mxu0 %v2168
        %3032 = vmatmul.mubr.bf16.gmra.mrb[0].mxu0 %v2167
        %v3033 = vpop.f32.mrb[0].mxu0
        %v3034 = vadd.f32 %v2993, %v3033
        %v3035 = vpop.f32.mrb[0].mxu0
        %v3036 = vadd.f32 %v2995, %v3035
        %v3037 = vpop.f32.mrb[0].mxu0
        %v3038 = vpop.f32.mrb[0].mxu0
        %3039 = vdwg.mxu0
        %3040 = vmatprep.subr.bf16.mxu0 %v2684
        %3041 = vmatpush1.bf16.msra.mxu0 %v2683
        %3042 = vmatprep.subr.bf16.mxu0 %v2688
        %3043 = vmatpush1.bf16.msra.mxu0 %v2687
        %3044 = vmatprep.subr.bf16.mxu0 %v2692
        %3045 = vmatpush1.bf16.msra.mxu0 %v2691
        %3046 = vmatprep.subr.bf16.mxu0 %v2696
        %3047 = vmatpush1.bf16.msra.mxu0 %v2695
        %3048 = vmatprep.subr.bf16.mxu0 %v2700
        %3049 = vmatpush1.bf16.msra.mxu0 %v2699
        %3050 = vmatprep.subr.bf16.mxu0 %v2704
        %3051 = vmatpush1.bf16.msra.mxu0 %v2703
        %3052 = vmatprep.subr.bf16.mxu0 %v2708
        %3053 = vmatpush1.bf16.msra.mxu0 %v2707
        %3054 = vmatprep.subr.bf16.mxu0 %v2712
        %3055 = vmatpush1.bf16.msra.mxu0 %v2711
        %3056 = vmatprep.subr.bf16.mxu0 %v2716
        %3057 = vmatpush1.bf16.msra.mxu0 %v2715
        %3058 = vmatprep.subr.bf16.mxu0 %v2720
        %3059 = vmatpush1.bf16.msra.mxu0 %v2719
        %3060 = vmatprep.subr.bf16.mxu0 %v2724
        %3061 = vmatpush1.bf16.msra.mxu0 %v2723
        %3062 = vmatprep.subr.bf16.mxu0 %v2728
        %3063 = vmatpush1.bf16.msra.mxu0 %v2727
        %3064 = vmatprep.subr.bf16.mxu0 %v2732
        %3065 = vmatpush1.bf16.msra.mxu0 %v2731
        %3066 = vmatprep.subr.bf16.mxu0 %v2736
        %3067 = vmatpush1.bf16.msra.mxu0 %v2735
        %3068 = vmatprep.subr.bf16.mxu0 %v2740
        %3069 = vmatpush1.bf16.msra.mxu0 %v2739
        %3070 = vmatprep.subr.bf16.mxu0 %v2744
        %3071 = vmatpush1.bf16.msra.mxu0 %v2743
        %3072 = vmatprep.mubr.bf16.mxu0 %v2166
        %3073 = vmatmul.mubr.bf16.gmra.mrb[0].mxu0 %v2165
        %v3074 = vpop.f32.mrb[0].mxu0
        %v3075 = vadd.f32 %v2949, %v3074
        %v3076 = vpop.f32.mrb[0].mxu0
        %v3077 = vadd.f32 %v2953, %v3076
        %v3078 = vpop.f32.mrb[0].mxu0
        %v3079 = vpop.f32.mrb[0].mxu0
        %3080 = vdwg.mxu0
        %3081 = vmatprep.subr.bf16.mxu0 %v2748
        %3082 = vmatpush1.bf16.msra.mxu0 %v2747
        %3083 = vmatprep.subr.bf16.mxu0 %v2752
        %3084 = vmatpush1.bf16.msra.mxu0 %v2751
        %3085 = vmatprep.subr.bf16.mxu0 %v2756
        %3086 = vmatpush1.bf16.msra.mxu0 %v2755
        %3087 = vmatprep.subr.bf16.mxu0 %v2760
        %3088 = vmatpush1.bf16.msra.mxu0 %v2759
        %3089 = vmatprep.subr.bf16.mxu0 %v2764
        %3090 = vmatpush1.bf16.msra.mxu0 %v2763
        %3091 = vmatprep.subr.bf16.mxu0 %v2768
        %3092 = vmatpush1.bf16.msra.mxu0 %v2767
        %3093 = vmatprep.subr.bf16.mxu0 %v2772
        %3094 = vmatpush1.bf16.msra.mxu0 %v2771
        %3095 = vmatprep.subr.bf16.mxu0 %v2776
        %3096 = vmatpush1.bf16.msra.mxu0 %v2775
        %3097 = vmatprep.subr.bf16.mxu0 %v2780
        %3098 = vmatpush1.bf16.msra.mxu0 %v2779
        %3099 = vmatprep.subr.bf16.mxu0 %v2784
        %3100 = vmatpush1.bf16.msra.mxu0 %v2783
        %3101 = vmatprep.subr.bf16.mxu0 %v2788
        %3102 = vmatpush1.bf16.msra.mxu0 %v2787
        %3103 = vmatprep.subr.bf16.mxu0 %v2792
        %3104 = vmatpush1.bf16.msra.mxu0 %v2791
        %3105 = vmatprep.subr.bf16.mxu0 %v2796
        %3106 = vmatpush1.bf16.msra.mxu0 %v2795
        %3107 = vmatprep.subr.bf16.mxu0 %v2800
        %3108 = vmatpush1.bf16.msra.mxu0 %v2799
        %3109 = vmatprep.subr.bf16.mxu0 %v2804
        %3110 = vmatpush1.bf16.msra.mxu0 %v2803
        %3111 = vmatprep.subr.bf16.mxu0 %v2808
        %3112 = vmatpush1.bf16.msra.mxu0 %v2807
        %3113 = vmatprep.mubr.bf16.mxu0 %v2168
        %3114 = vmatmul.mubr.bf16.gmra.mrb[0].mxu0 %v2167
        %v3115 = vpop.f32.mrb[0].mxu0
        %v3116 = vadd.f32 %v3075, %v3115
        %v3117 = vpop.f32.mrb[0].mxu0
        %v3118 = vadd.f32 %v3077, %v3117
        %v3119 = vpop.f32.mrb[0].mxu0
        %v3120 = vpop.f32.mrb[0].mxu0
        %3121 = vdwg.mxu0
        %v3122 = vmax.f32 %v3034, 0.0
        %v3123 = vmax.f32 %v3036, 0.0
        %v3124 = vmax.f32 %v3116, 0.0
        %v3125 = vmax.f32 %v3118, 0.0
        %v3126 = vpack.c.bf16 %v3122, %v3122
        %v3127 = vpack.c.bf16 %v3123, %v3123
        %v3128 = vpack.c.bf16 %v3124, %v3124
        %v3129 = vpack.c.bf16 %v3125, %v3125
        %v3130 = vld [vmem:[#allocation7] sm:$0xff]
        %v3131 = vld [vmem:[#allocation7 + $0x8] sm:$0xff]
        %v3132 = vld [vmem:[#allocation7 + $0x10] sm:$0xff]
        %v3133 = vld [vmem:[#allocation7 + $0x18] sm:$0xff]
        %v3134 = vld [vmem:[#allocation7 + $0x20] sm:$0xff]
        %v3135 = vld [vmem:[#allocation7 + $0x28] sm:$0xff]
        %v3136 = vld [vmem:[#allocation7 + $0x30] sm:$0xff]
        %v3137 = vld [vmem:[#allocation7 + $0x38] sm:$0xff]
        %v3138 = vld [vmem:[#allocation7 + $0x40] sm:$0xff]
        %v3139 = vld [vmem:[#allocation7 + $0x48] sm:$0xff]
        %v3140 = vld [vmem:[#allocation7 + $0x50] sm:$0xff]
        %v3141 = vld [vmem:[#allocation7 + $0x58] sm:$0xff]
        %v3142 = vld [vmem:[#allocation7 + $0x60] sm:$0xff]
        %v3143 = vld [vmem:[#allocation7 + $0x68] sm:$0xff]
        %v3144 = vld [vmem:[#allocation7 + $0x70] sm:$0xff]
        %v3145 = vld [vmem:[#allocation7 + $0x78] sm:$0xff]
        %v3146 = vld [vmem:[#allocation7 + $0x80] sm:$0xff]
        %v3147 = vld [vmem:[#allocation7 + $0x88] sm:$0xff]
        %v3148 = vld [vmem:[#allocation7 + $0x90] sm:$0xff]
        %v3149 = vld [vmem:[#allocation7 + $0x98] sm:$0xff]
        %v3150 = vld [vmem:[#allocation7 + $0xa0] sm:$0xff]
        %v3151 = vld [vmem:[#allocation7 + $0xa8] sm:$0xff]
        %v3152 = vld [vmem:[#allocation7 + $0xb0] sm:$0xff]
        %v3153 = vld [vmem:[#allocation7 + $0xb8] sm:$0xff]
        %v3154 = vld [vmem:[#allocation7 + $0xc0] sm:$0xff]
        %v3155 = vld [vmem:[#allocation7 + $0xc8] sm:$0xff]
        %v3156 = vld [vmem:[#allocation7 + $0xd0] sm:$0xff]
        %v3157 = vld [vmem:[#allocation7 + $0xd8] sm:$0xff]
        %v3158 = vld [vmem:[#allocation7 + $0xe0] sm:$0xff]
        %v3159 = vld [vmem:[#allocation7 + $0xe8] sm:$0xff]
        %v3160 = vld [vmem:[#allocation7 + $0xf0] sm:$0xff]
        %v3161 = vld [vmem:[#allocation7 + $0xf8] sm:$0xff]
        %v3162 = vld [vmem:[#allocation7 + $0x100] sm:$0xff]
        %v3163 = vld [vmem:[#allocation7 + $0x108] sm:$0xff]
        %v3164 = vld [vmem:[#allocation7 + $0x110] sm:$0xff]
        %v3165 = vld [vmem:[#allocation7 + $0x118] sm:$0xff]
        %v3166 = vld [vmem:[#allocation7 + $0x120] sm:$0xff]
        %v3167 = vld [vmem:[#allocation7 + $0x128] sm:$0xff]
        %v3168 = vld [vmem:[#allocation7 + $0x130] sm:$0xff]
        %v3169 = vld [vmem:[#allocation7 + $0x138] sm:$0xff]
        %v3170 = vld [vmem:[#allocation7 + $0x140] sm:$0xff]
        %v3171 = vld [vmem:[#allocation7 + $0x148] sm:$0xff]
        %v3172 = vld [vmem:[#allocation7 + $0x150] sm:$0xff]
        %v3173 = vld [vmem:[#allocation7 + $0x158] sm:$0xff]
        %v3174 = vld [vmem:[#allocation7 + $0x160] sm:$0xff]
        %v3175 = vld [vmem:[#allocation7 + $0x168] sm:$0xff]
        %v3176 = vld [vmem:[#allocation7 + $0x170] sm:$0xff]
        %v3177 = vld [vmem:[#allocation7 + $0x178] sm:$0xff]
        %v3178 = vld [vmem:[#allocation7 + $0x180] sm:$0xff]
        %v3179 = vld [vmem:[#allocation7 + $0x188] sm:$0xff]
        %v3180 = vld [vmem:[#allocation7 + $0x190] sm:$0xff]
        %v3181 = vld [vmem:[#allocation7 + $0x198] sm:$0xff]
        %v3182 = vld [vmem:[#allocation7 + $0x1a0] sm:$0xff]
        %v3183 = vld [vmem:[#allocation7 + $0x1a8] sm:$0xff]
        %v3184 = vld [vmem:[#allocation7 + $0x1b0] sm:$0xff]
        %v3185 = vld [vmem:[#allocation7 + $0x1b8] sm:$0xff]
        %v3186 = vld [vmem:[#allocation7 + $0x1c0] sm:$0xff]
        %v3187 = vld [vmem:[#allocation7 + $0x1c8] sm:$0xff]
        %v3188 = vld [vmem:[#allocation7 + $0x1d0] sm:$0xff]
        %v3189 = vld [vmem:[#allocation7 + $0x1d8] sm:$0xff]
        %v3190 = vld [vmem:[#allocation7 + $0x1e0] sm:$0xff]
        %v3191 = vld [vmem:[#allocation7 + $0x1e8] sm:$0xff]
        %v3192 = vld [vmem:[#allocation7 + $0x1f0] sm:$0xff]
        %v3193 = vld [vmem:[#allocation7 + $0x1f8] sm:$0xff]
        %v3194 = vld [vmem:[#allocation7 + $0x200] sm:$0xff]
        %v3195 = vld [vmem:[#allocation7 + $0x208] sm:$0xff]
        %v3196 = vld [vmem:[#allocation7 + $0x210] sm:$0xff]
        %v3197 = vld [vmem:[#allocation7 + $0x218] sm:$0xff]
        %v3198 = vld [vmem:[#allocation7 + $0x220] sm:$0xff]
        %v3199 = vld [vmem:[#allocation7 + $0x228] sm:$0xff]
        %v3200 = vld [vmem:[#allocation7 + $0x230] sm:$0xff]
        %v3201 = vld [vmem:[#allocation7 + $0x238] sm:$0xff]
        %v3202 = vld [vmem:[#allocation7 + $0x240] sm:$0xff]
        %v3203 = vld [vmem:[#allocation7 + $0x248] sm:$0xff]
        %v3204 = vld [vmem:[#allocation7 + $0x250] sm:$0xff]
        %v3205 = vld [vmem:[#allocation7 + $0x258] sm:$0xff]
        %v3206 = vld [vmem:[#allocation7 + $0x260] sm:$0xff]
        %v3207 = vld [vmem:[#allocation7 + $0x268] sm:$0xff]
        %v3208 = vld [vmem:[#allocation7 + $0x270] sm:$0xff]
        %v3209 = vld [vmem:[#allocation7 + $0x278] sm:$0xff]
        %v3210 = vld [vmem:[#allocation7 + $0x280] sm:$0xff]
        %v3211 = vld [vmem:[#allocation7 + $0x288] sm:$0xff]
        %v3212 = vld [vmem:[#allocation7 + $0x290] sm:$0xff]
        %v3213 = vld [vmem:[#allocation7 + $0x298] sm:$0xff]
        %v3214 = vld [vmem:[#allocation7 + $0x2a0] sm:$0xff]
        %v3215 = vld [vmem:[#allocation7 + $0x2a8] sm:$0xff]
        %v3216 = vld [vmem:[#allocation7 + $0x2b0] sm:$0xff]
        %v3217 = vld [vmem:[#allocation7 + $0x2b8] sm:$0xff]
        %v3218 = vld [vmem:[#allocation7 + $0x2c0] sm:$0xff]
        %v3219 = vld [vmem:[#allocation7 + $0x2c8] sm:$0xff]
        %v3220 = vld [vmem:[#allocation7 + $0x2d0] sm:$0xff]
        %v3221 = vld [vmem:[#allocation7 + $0x2d8] sm:$0xff]
        %v3222 = vld [vmem:[#allocation7 + $0x2e0] sm:$0xff]
        %v3223 = vld [vmem:[#allocation7 + $0x2e8] sm:$0xff]
        %v3224 = vld [vmem:[#allocation7 + $0x2f0] sm:$0xff]
        %v3225 = vld [vmem:[#allocation7 + $0x2f8] sm:$0xff]
        %v3226 = vld [vmem:[#allocation7 + $0x300] sm:$0xff]
        %v3227 = vld [vmem:[#allocation7 + $0x308] sm:$0xff]
        %v3228 = vld [vmem:[#allocation7 + $0x310] sm:$0xff]
        %v3229 = vld [vmem:[#allocation7 + $0x318] sm:$0xff]
        %v3230 = vld [vmem:[#allocation7 + $0x320] sm:$0xff]
        %v3231 = vld [vmem:[#allocation7 + $0x328] sm:$0xff]
        %v3232 = vld [vmem:[#allocation7 + $0x330] sm:$0xff]
        %v3233 = vld [vmem:[#allocation7 + $0x338] sm:$0xff]
        %v3234 = vld [vmem:[#allocation7 + $0x340] sm:$0xff]
        %v3235 = vld [vmem:[#allocation7 + $0x348] sm:$0xff]
        %v3236 = vld [vmem:[#allocation7 + $0x350] sm:$0xff]
        %v3237 = vld [vmem:[#allocation7 + $0x358] sm:$0xff]
        %v3238 = vld [vmem:[#allocation7 + $0x360] sm:$0xff]
        %v3239 = vld [vmem:[#allocation7 + $0x368] sm:$0xff]
        %v3240 = vld [vmem:[#allocation7 + $0x370] sm:$0xff]
        %v3241 = vld [vmem:[#allocation7 + $0x378] sm:$0xff]
        %v3242 = vld [vmem:[#allocation7 + $0x380] sm:$0xff]
        %v3243 = vld [vmem:[#allocation7 + $0x388] sm:$0xff]
        %v3244 = vld [vmem:[#allocation7 + $0x390] sm:$0xff]
        %v3245 = vld [vmem:[#allocation7 + $0x398] sm:$0xff]
        %v3246 = vld [vmem:[#allocation7 + $0x3a0] sm:$0xff]
        %v3247 = vld [vmem:[#allocation7 + $0x3a8] sm:$0xff]
        %v3248 = vld [vmem:[#allocation7 + $0x3b0] sm:$0xff]
        %v3249 = vld [vmem:[#allocation7 + $0x3b8] sm:$0xff]
        %v3250 = vld [vmem:[#allocation7 + $0x3c0] sm:$0xff]
        %v3251 = vld [vmem:[#allocation7 + $0x3c8] sm:$0xff]
        %v3252 = vld [vmem:[#allocation7 + $0x3d0] sm:$0xff]
        %v3253 = vld [vmem:[#allocation7 + $0x3d8] sm:$0xff]
        %v3254 = vld [vmem:[#allocation7 + $0x3e0] sm:$0xff]
        %v3255 = vld [vmem:[#allocation7 + $0x3e8] sm:$0xff]
        %v3256 = vld [vmem:[#allocation7 + $0x3f0] sm:$0xff]
        %v3257 = vld [vmem:[#allocation7 + $0x3f8] sm:$0xff]
        %v3386 = vunpack.c.l.b16 %v3130
        %v3387 = vunpack.c.h.b16 %v3130
        %v3388 = vunpack.c.l.b16 %v3131
        %v3389 = vunpack.c.h.b16 %v3131
        %v3390 = vunpack.c.l.b16 %v3132
        %v3391 = vunpack.c.h.b16 %v3132
        %v3392 = vunpack.c.l.b16 %v3133
        %v3393 = vunpack.c.h.b16 %v3133
        %v3394 = vunpack.c.l.b16 %v3134
        %v3395 = vunpack.c.h.b16 %v3134
        %v3396 = vunpack.c.l.b16 %v3135
        %v3397 = vunpack.c.h.b16 %v3135
        %v3398 = vunpack.c.l.b16 %v3136
        %v3399 = vunpack.c.h.b16 %v3136
        %v3400 = vunpack.c.l.b16 %v3137
        %v3401 = vunpack.c.h.b16 %v3137
        %v3402 = vunpack.c.l.b16 %v3138
        %v3403 = vunpack.c.h.b16 %v3138
        %v3404 = vunpack.c.l.b16 %v3139
        %v3405 = vunpack.c.h.b16 %v3139
        %v3406 = vunpack.c.l.b16 %v3140
        %v3407 = vunpack.c.h.b16 %v3140
        %v3408 = vunpack.c.l.b16 %v3141
        %v3409 = vunpack.c.h.b16 %v3141
        %v3410 = vunpack.c.l.b16 %v3142
        %v3411 = vunpack.c.h.b16 %v3142
        %v3412 = vunpack.c.l.b16 %v3143
        %v3413 = vunpack.c.h.b16 %v3143
        %v3414 = vunpack.c.l.b16 %v3144
        %v3415 = vunpack.c.h.b16 %v3144
        %v3416 = vunpack.c.l.b16 %v3145
        %v3417 = vunpack.c.h.b16 %v3145
        %v3418 = vunpack.c.l.b16 %v3146
        %v3419 = vunpack.c.h.b16 %v3146
        %v3420 = vunpack.c.l.b16 %v3147
        %v3421 = vunpack.c.h.b16 %v3147
        %v3422 = vunpack.c.l.b16 %v3148
        %v3423 = vunpack.c.h.b16 %v3148
        %v3424 = vunpack.c.l.b16 %v3149
        %v3425 = vunpack.c.h.b16 %v3149
        %v3426 = vunpack.c.l.b16 %v3150
        %v3427 = vunpack.c.h.b16 %v3150
        %v3428 = vunpack.c.l.b16 %v3151
        %v3429 = vunpack.c.h.b16 %v3151
        %v3430 = vunpack.c.l.b16 %v3152
        %v3431 = vunpack.c.h.b16 %v3152
        %v3432 = vunpack.c.l.b16 %v3153
        %v3433 = vunpack.c.h.b16 %v3153
        %v3434 = vunpack.c.l.b16 %v3154
        %v3435 = vunpack.c.h.b16 %v3154
        %v3436 = vunpack.c.l.b16 %v3155
        %v3437 = vunpack.c.h.b16 %v3155
        %v3438 = vunpack.c.l.b16 %v3156
        %v3439 = vunpack.c.h.b16 %v3156
        %v3440 = vunpack.c.l.b16 %v3157
        %v3441 = vunpack.c.h.b16 %v3157
        %v3442 = vunpack.c.l.b16 %v3158
        %v3443 = vunpack.c.h.b16 %v3158
        %v3444 = vunpack.c.l.b16 %v3159
        %v3445 = vunpack.c.h.b16 %v3159
        %v3446 = vunpack.c.l.b16 %v3160
        %v3447 = vunpack.c.h.b16 %v3160
        %v3448 = vunpack.c.l.b16 %v3161
        %v3449 = vunpack.c.h.b16 %v3161
        %v3450 = vunpack.c.l.b16 %v3162
        %v3451 = vunpack.c.h.b16 %v3162
        %v3452 = vunpack.c.l.b16 %v3163
        %v3453 = vunpack.c.h.b16 %v3163
        %v3454 = vunpack.c.l.b16 %v3164
        %v3455 = vunpack.c.h.b16 %v3164
        %v3456 = vunpack.c.l.b16 %v3165
        %v3457 = vunpack.c.h.b16 %v3165
        %v3458 = vunpack.c.l.b16 %v3166
        %v3459 = vunpack.c.h.b16 %v3166
        %v3460 = vunpack.c.l.b16 %v3167
        %v3461 = vunpack.c.h.b16 %v3167
        %v3462 = vunpack.c.l.b16 %v3168
        %v3463 = vunpack.c.h.b16 %v3168
        %v3464 = vunpack.c.l.b16 %v3169
        %v3465 = vunpack.c.h.b16 %v3169
        %v3466 = vunpack.c.l.b16 %v3170
        %v3467 = vunpack.c.h.b16 %v3170
        %v3468 = vunpack.c.l.b16 %v3171
        %v3469 = vunpack.c.h.b16 %v3171
        %v3470 = vunpack.c.l.b16 %v3172
        %v3471 = vunpack.c.h.b16 %v3172
        %v3472 = vunpack.c.l.b16 %v3173
        %v3473 = vunpack.c.h.b16 %v3173
        %v3474 = vunpack.c.l.b16 %v3174
        %v3475 = vunpack.c.h.b16 %v3174
        %v3476 = vunpack.c.l.b16 %v3175
        %v3477 = vunpack.c.h.b16 %v3175
        %v3478 = vunpack.c.l.b16 %v3176
        %v3479 = vunpack.c.h.b16 %v3176
        %v3480 = vunpack.c.l.b16 %v3177
        %v3481 = vunpack.c.h.b16 %v3177
        %v3482 = vunpack.c.l.b16 %v3178
        %v3483 = vunpack.c.h.b16 %v3178
        %v3484 = vunpack.c.l.b16 %v3179
        %v3485 = vunpack.c.h.b16 %v3179
        %v3486 = vunpack.c.l.b16 %v3180
        %v3487 = vunpack.c.h.b16 %v3180
        %v3488 = vunpack.c.l.b16 %v3181
        %v3489 = vunpack.c.h.b16 %v3181
        %v3490 = vunpack.c.l.b16 %v3182
        %v3491 = vunpack.c.h.b16 %v3182
        %v3492 = vunpack.c.l.b16 %v3183
        %v3493 = vunpack.c.h.b16 %v3183
        %v3494 = vunpack.c.l.b16 %v3184
        %v3495 = vunpack.c.h.b16 %v3184
        %v3496 = vunpack.c.l.b16 %v3185
        %v3497 = vunpack.c.h.b16 %v3185
        %v3498 = vunpack.c.l.b16 %v3186
        %v3499 = vunpack.c.h.b16 %v3186
        %v3500 = vunpack.c.l.b16 %v3187
        %v3501 = vunpack.c.h.b16 %v3187
        %v3502 = vunpack.c.l.b16 %v3188
        %v3503 = vunpack.c.h.b16 %v3188
        %v3504 = vunpack.c.l.b16 %v3189
        %v3505 = vunpack.c.h.b16 %v3189
        %v3506 = vunpack.c.l.b16 %v3190
        %v3507 = vunpack.c.h.b16 %v3190
        %v3508 = vunpack.c.l.b16 %v3191
        %v3509 = vunpack.c.h.b16 %v3191
        %v3510 = vunpack.c.l.b16 %v3192
        %v3511 = vunpack.c.h.b16 %v3192
        %v3512 = vunpack.c.l.b16 %v3193
        %v3513 = vunpack.c.h.b16 %v3193
        %v3514 = vunpack.c.l.b16 %v3194
        %v3515 = vunpack.c.h.b16 %v3194
        %v3516 = vunpack.c.l.b16 %v3195
        %v3517 = vunpack.c.h.b16 %v3195
        %v3518 = vunpack.c.l.b16 %v3196
        %v3519 = vunpack.c.h.b16 %v3196
        %v3520 = vunpack.c.l.b16 %v3197
        %v3521 = vunpack.c.h.b16 %v3197
        %v3522 = vunpack.c.l.b16 %v3198
        %v3523 = vunpack.c.h.b16 %v3198
        %v3524 = vunpack.c.l.b16 %v3199
        %v3525 = vunpack.c.h.b16 %v3199
        %v3526 = vunpack.c.l.b16 %v3200
        %v3527 = vunpack.c.h.b16 %v3200
        %v3528 = vunpack.c.l.b16 %v3201
        %v3529 = vunpack.c.h.b16 %v3201
        %v3530 = vunpack.c.l.b16 %v3202
        %v3531 = vunpack.c.h.b16 %v3202
        %v3532 = vunpack.c.l.b16 %v3203
        %v3533 = vunpack.c.h.b16 %v3203
        %v3534 = vunpack.c.l.b16 %v3204
        %v3535 = vunpack.c.h.b16 %v3204
        %v3536 = vunpack.c.l.b16 %v3205
        %v3537 = vunpack.c.h.b16 %v3205
        %v3538 = vunpack.c.l.b16 %v3206
        %v3539 = vunpack.c.h.b16 %v3206
        %v3540 = vunpack.c.l.b16 %v3207
        %v3541 = vunpack.c.h.b16 %v3207
        %v3542 = vunpack.c.l.b16 %v3208
        %v3543 = vunpack.c.h.b16 %v3208
        %v3544 = vunpack.c.l.b16 %v3209
        %v3545 = vunpack.c.h.b16 %v3209
        %v3546 = vunpack.c.l.b16 %v3210
        %v3547 = vunpack.c.h.b16 %v3210
        %v3548 = vunpack.c.l.b16 %v3211
        %v3549 = vunpack.c.h.b16 %v3211
        %v3550 = vunpack.c.l.b16 %v3212
        %v3551 = vunpack.c.h.b16 %v3212
        %v3552 = vunpack.c.l.b16 %v3213
        %v3553 = vunpack.c.h.b16 %v3213
        %v3554 = vunpack.c.l.b16 %v3214
        %v3555 = vunpack.c.h.b16 %v3214
        %v3556 = vunpack.c.l.b16 %v3215
        %v3557 = vunpack.c.h.b16 %v3215
        %v3558 = vunpack.c.l.b16 %v3216
        %v3559 = vunpack.c.h.b16 %v3216
        %v3560 = vunpack.c.l.b16 %v3217
        %v3561 = vunpack.c.h.b16 %v3217
        %v3562 = vunpack.c.l.b16 %v3218
        %v3563 = vunpack.c.h.b16 %v3218
        %v3564 = vunpack.c.l.b16 %v3219
        %v3565 = vunpack.c.h.b16 %v3219
        %v3566 = vunpack.c.l.b16 %v3220
        %v3567 = vunpack.c.h.b16 %v3220
        %v3568 = vunpack.c.l.b16 %v3221
        %v3569 = vunpack.c.h.b16 %v3221
        %v3570 = vunpack.c.l.b16 %v3222
        %v3571 = vunpack.c.h.b16 %v3222
        %v3572 = vunpack.c.l.b16 %v3223
        %v3573 = vunpack.c.h.b16 %v3223
        %v3574 = vunpack.c.l.b16 %v3224
        %v3575 = vunpack.c.h.b16 %v3224
        %v3576 = vunpack.c.l.b16 %v3225
        %v3577 = vunpack.c.h.b16 %v3225
        %v3578 = vunpack.c.l.b16 %v3226
        %v3579 = vunpack.c.h.b16 %v3226
        %v3580 = vunpack.c.l.b16 %v3227
        %v3581 = vunpack.c.h.b16 %v3227
        %v3582 = vunpack.c.l.b16 %v3228
        %v3583 = vunpack.c.h.b16 %v3228
        %v3584 = vunpack.c.l.b16 %v3229
        %v3585 = vunpack.c.h.b16 %v3229
        %v3586 = vunpack.c.l.b16 %v3230
        %v3587 = vunpack.c.h.b16 %v3230
        %v3588 = vunpack.c.l.b16 %v3231
        %v3589 = vunpack.c.h.b16 %v3231
        %v3590 = vunpack.c.l.b16 %v3232
        %v3591 = vunpack.c.h.b16 %v3232
        %v3592 = vunpack.c.l.b16 %v3233
        %v3593 = vunpack.c.h.b16 %v3233
        %v3594 = vunpack.c.l.b16 %v3234
        %v3595 = vunpack.c.h.b16 %v3234
        %v3596 = vunpack.c.l.b16 %v3235
        %v3597 = vunpack.c.h.b16 %v3235
        %v3598 = vunpack.c.l.b16 %v3236
        %v3599 = vunpack.c.h.b16 %v3236
        %v3600 = vunpack.c.l.b16 %v3237
        %v3601 = vunpack.c.h.b16 %v3237
        %v3602 = vunpack.c.l.b16 %v3238
        %v3603 = vunpack.c.h.b16 %v3238
        %v3604 = vunpack.c.l.b16 %v3239
        %v3605 = vunpack.c.h.b16 %v3239
        %v3606 = vunpack.c.l.b16 %v3240
        %v3607 = vunpack.c.h.b16 %v3240
        %v3608 = vunpack.c.l.b16 %v3241
        %v3609 = vunpack.c.h.b16 %v3241
        %v3610 = vunpack.c.l.b16 %v3242
        %v3611 = vunpack.c.h.b16 %v3242
        %v3612 = vunpack.c.l.b16 %v3243
        %v3613 = vunpack.c.h.b16 %v3243
        %v3614 = vunpack.c.l.b16 %v3244
        %v3615 = vunpack.c.h.b16 %v3244
        %v3616 = vunpack.c.l.b16 %v3245
        %v3617 = vunpack.c.h.b16 %v3245
        %v3618 = vunpack.c.l.b16 %v3246
        %v3619 = vunpack.c.h.b16 %v3246
        %v3620 = vunpack.c.l.b16 %v3247
        %v3621 = vunpack.c.h.b16 %v3247
        %v3622 = vunpack.c.l.b16 %v3248
        %v3623 = vunpack.c.h.b16 %v3248
        %v3624 = vunpack.c.l.b16 %v3249
        %v3625 = vunpack.c.h.b16 %v3249
        %v3626 = vunpack.c.l.b16 %v3250
        %v3627 = vunpack.c.h.b16 %v3250
        %v3628 = vunpack.c.l.b16 %v3251
        %v3629 = vunpack.c.h.b16 %v3251
        %v3630 = vunpack.c.l.b16 %v3252
        %v3631 = vunpack.c.h.b16 %v3252
        %v3632 = vunpack.c.l.b16 %v3253
        %v3633 = vunpack.c.h.b16 %v3253
        %v3634 = vunpack.c.l.b16 %v3254
        %v3635 = vunpack.c.h.b16 %v3254
        %v3636 = vunpack.c.l.b16 %v3255
        %v3637 = vunpack.c.h.b16 %v3255
        %v3638 = vunpack.c.l.b16 %v3256
        %v3639 = vunpack.c.h.b16 %v3256
        %v3640 = vunpack.c.l.b16 %v3257
        %v3641 = vunpack.c.h.b16 %v3257
        %v3642 = vpack.c.b16 %v3390, %v3386
        %v3643 = vpack.c.b16 %v3391, %v3387
        %v3644 = vpack.c.b16 %v3392, %v3388
        %v3645 = vpack.c.b16 %v3393, %v3389
        %v3646 = vpack.c.b16 %v3398, %v3394
        %v3647 = vpack.c.b16 %v3399, %v3395
        %v3648 = vpack.c.b16 %v3400, %v3396
        %v3649 = vpack.c.b16 %v3401, %v3397
        %v3650 = vpack.c.b16 %v3406, %v3402
        %v3651 = vpack.c.b16 %v3407, %v3403
        %v3652 = vpack.c.b16 %v3408, %v3404
        %v3653 = vpack.c.b16 %v3409, %v3405
        %v3654 = vpack.c.b16 %v3414, %v3410
        %v3655 = vpack.c.b16 %v3415, %v3411
        %v3656 = vpack.c.b16 %v3416, %v3412
        %v3657 = vpack.c.b16 %v3417, %v3413
        %v3658 = vpack.c.b16 %v3422, %v3418
        %v3659 = vpack.c.b16 %v3423, %v3419
        %v3660 = vpack.c.b16 %v3424, %v3420
        %v3661 = vpack.c.b16 %v3425, %v3421
        %v3662 = vpack.c.b16 %v3430, %v3426
        %v3663 = vpack.c.b16 %v3431, %v3427
        %v3664 = vpack.c.b16 %v3432, %v3428
        %v3665 = vpack.c.b16 %v3433, %v3429
        %v3666 = vpack.c.b16 %v3438, %v3434
        %v3667 = vpack.c.b16 %v3439, %v3435
        %v3668 = vpack.c.b16 %v3440, %v3436
        %v3669 = vpack.c.b16 %v3441, %v3437
        %v3670 = vpack.c.b16 %v3446, %v3442
        %v3671 = vpack.c.b16 %v3447, %v3443
        %v3672 = vpack.c.b16 %v3448, %v3444
        %v3673 = vpack.c.b16 %v3449, %v3445
        %v3674 = vpack.c.b16 %v3454, %v3450
        %v3675 = vpack.c.b16 %v3455, %v3451
        %v3676 = vpack.c.b16 %v3456, %v3452
        %v3677 = vpack.c.b16 %v3457, %v3453
        %v3678 = vpack.c.b16 %v3462, %v3458
        %v3679 = vpack.c.b16 %v3463, %v3459
        %v3680 = vpack.c.b16 %v3464, %v3460
        %v3681 = vpack.c.b16 %v3465, %v3461
        %v3682 = vpack.c.b16 %v3470, %v3466
        %v3683 = vpack.c.b16 %v3471, %v3467
        %v3684 = vpack.c.b16 %v3472, %v3468
        %v3685 = vpack.c.b16 %v3473, %v3469
        %v3686 = vpack.c.b16 %v3478, %v3474
        %v3687 = vpack.c.b16 %v3479, %v3475
        %v3688 = vpack.c.b16 %v3480, %v3476
        %v3689 = vpack.c.b16 %v3481, %v3477
        %v3690 = vpack.c.b16 %v3486, %v3482
        %v3691 = vpack.c.b16 %v3487, %v3483
        %v3692 = vpack.c.b16 %v3488, %v3484
        %v3693 = vpack.c.b16 %v3489, %v3485
        %v3694 = vpack.c.b16 %v3494, %v3490
        %v3695 = vpack.c.b16 %v3495, %v3491
        %v3696 = vpack.c.b16 %v3496, %v3492
        %v3697 = vpack.c.b16 %v3497, %v3493
        %v3698 = vpack.c.b16 %v3502, %v3498
        %v3699 = vpack.c.b16 %v3503, %v3499
        %v3700 = vpack.c.b16 %v3504, %v3500
        %v3701 = vpack.c.b16 %v3505, %v3501
        %v3702 = vpack.c.b16 %v3510, %v3506
        %v3703 = vpack.c.b16 %v3511, %v3507
        %v3704 = vpack.c.b16 %v3512, %v3508
        %v3705 = vpack.c.b16 %v3513, %v3509
        %v3706 = vpack.c.b16 %v3518, %v3514
        %v3707 = vpack.c.b16 %v3519, %v3515
        %v3708 = vpack.c.b16 %v3520, %v3516
        %v3709 = vpack.c.b16 %v3521, %v3517
        %v3710 = vpack.c.b16 %v3526, %v3522
        %v3711 = vpack.c.b16 %v3527, %v3523
        %v3712 = vpack.c.b16 %v3528, %v3524
        %v3713 = vpack.c.b16 %v3529, %v3525
        %v3714 = vpack.c.b16 %v3534, %v3530
        %v3715 = vpack.c.b16 %v3535, %v3531
        %v3716 = vpack.c.b16 %v3536, %v3532
        %v3717 = vpack.c.b16 %v3537, %v3533
        %v3718 = vpack.c.b16 %v3542, %v3538
        %v3719 = vpack.c.b16 %v3543, %v3539
        %v3720 = vpack.c.b16 %v3544, %v3540
        %v3721 = vpack.c.b16 %v3545, %v3541
        %v3722 = vpack.c.b16 %v3550, %v3546
        %v3723 = vpack.c.b16 %v3551, %v3547
        %v3724 = vpack.c.b16 %v3552, %v3548
        %v3725 = vpack.c.b16 %v3553, %v3549
        %v3726 = vpack.c.b16 %v3558, %v3554
        %v3727 = vpack.c.b16 %v3559, %v3555
        %v3728 = vpack.c.b16 %v3560, %v3556
        %v3729 = vpack.c.b16 %v3561, %v3557
        %v3730 = vpack.c.b16 %v3566, %v3562
        %v3731 = vpack.c.b16 %v3567, %v3563
        %v3732 = vpack.c.b16 %v3568, %v3564
        %v3733 = vpack.c.b16 %v3569, %v3565
        %v3734 = vpack.c.b16 %v3574, %v3570
        %v3735 = vpack.c.b16 %v3575, %v3571
        %v3736 = vpack.c.b16 %v3576, %v3572
        %v3737 = vpack.c.b16 %v3577, %v3573
        %v3738 = vpack.c.b16 %v3582, %v3578
        %v3739 = vpack.c.b16 %v3583, %v3579
        %v3740 = vpack.c.b16 %v3584, %v3580
        %v3741 = vpack.c.b16 %v3585, %v3581
        %v3742 = vpack.c.b16 %v3590, %v3586
        %v3743 = vpack.c.b16 %v3591, %v3587
        %v3744 = vpack.c.b16 %v3592, %v3588
        %v3745 = vpack.c.b16 %v3593, %v3589
        %v3746 = vpack.c.b16 %v3598, %v3594
        %v3747 = vpack.c.b16 %v3599, %v3595
        %v3748 = vpack.c.b16 %v3600, %v3596
        %v3749 = vpack.c.b16 %v3601, %v3597
        %v3750 = vpack.c.b16 %v3606, %v3602
        %v3751 = vpack.c.b16 %v3607, %v3603
        %v3752 = vpack.c.b16 %v3608, %v3604
        %v3753 = vpack.c.b16 %v3609, %v3605
        %v3754 = vpack.c.b16 %v3614, %v3610
        %v3755 = vpack.c.b16 %v3615, %v3611
        %v3756 = vpack.c.b16 %v3616, %v3612
        %v3757 = vpack.c.b16 %v3617, %v3613
        %v3758 = vpack.c.b16 %v3622, %v3618
        %v3759 = vpack.c.b16 %v3623, %v3619
        %v3760 = vpack.c.b16 %v3624, %v3620
        %v3761 = vpack.c.b16 %v3625, %v3621
        %v3762 = vpack.c.b16 %v3630, %v3626
        %v3763 = vpack.c.b16 %v3631, %v3627
        %v3764 = vpack.c.b16 %v3632, %v3628
        %v3765 = vpack.c.b16 %v3633, %v3629
        %v3766 = vpack.c.b16 %v3638, %v3634
        %v3767 = vpack.c.b16 %v3639, %v3635
        %v3768 = vpack.c.b16 %v3640, %v3636
        %v3769 = vpack.c.b16 %v3641, %v3637
        %v3899 = vlaneseq
        %v3900 = vshrl.u32 %v3899, 7
        %v3901 = vsub.s32 0, %v3900
        %v3902 = vrot.slane %v353, %v3901
        %v3903 = vlaneseq
        %v3904 = vshrl.u32 %v3903, 7
        %v3905 = vsub.s32 1, %v3904
        %v3906 = vrot.slane %v353, %v3905
        %v3907 = vlaneseq
        %v3908 = vshrl.u32 %v3907, 7
        %v3909 = vsub.s32 2, %v3908
        %v3910 = vrot.slane %v353, %v3909
        %v3911 = vlaneseq
        %v3912 = vshrl.u32 %v3911, 7
        %v3913 = vsub.s32 3, %v3912
        %v3914 = vrot.slane %v353, %v3913
        %3919 = vmatprep.subr.bf16.mxu0 %v3643
        %3920 = vmatpush1.bf16.msra.mxu0 %v3642
        %3921 = vmatprep.subr.bf16.mxu0 %v3647
        %3922 = vmatpush1.bf16.msra.mxu0 %v3646
        %3923 = vmatprep.subr.bf16.mxu0 %v3651
        %3924 = vmatpush1.bf16.msra.mxu0 %v3650
        %3925 = vmatprep.subr.bf16.mxu0 %v3655
        %3926 = vmatpush1.bf16.msra.mxu0 %v3654
        %3927 = vmatprep.subr.bf16.mxu0 %v3659
        %3928 = vmatpush1.bf16.msra.mxu0 %v3658
        %3929 = vmatprep.subr.bf16.mxu0 %v3663
        %3930 = vmatpush1.bf16.msra.mxu0 %v3662
        %3931 = vmatprep.subr.bf16.mxu0 %v3667
        %3932 = vmatpush1.bf16.msra.mxu0 %v3666
        %3933 = vmatprep.subr.bf16.mxu0 %v3671
        %3934 = vmatpush1.bf16.msra.mxu0 %v3670
        %3935 = vmatprep.subr.bf16.mxu0 %v3675
        %3936 = vmatpush1.bf16.msra.mxu0 %v3674
        %3937 = vmatprep.subr.bf16.mxu0 %v3679
        %3938 = vmatpush1.bf16.msra.mxu0 %v3678
        %3939 = vmatprep.subr.bf16.mxu0 %v3683
        %3940 = vmatpush1.bf16.msra.mxu0 %v3682
        %3941 = vmatprep.subr.bf16.mxu0 %v3687
        %3942 = vmatpush1.bf16.msra.mxu0 %v3686
        %3943 = vmatprep.subr.bf16.mxu0 %v3691
        %3944 = vmatpush1.bf16.msra.mxu0 %v3690
        %3945 = vmatprep.subr.bf16.mxu0 %v3695
        %3946 = vmatpush1.bf16.msra.mxu0 %v3694
        %3947 = vmatprep.subr.bf16.mxu0 %v3699
        %3948 = vmatpush1.bf16.msra.mxu0 %v3698
        %3949 = vmatprep.subr.bf16.mxu0 %v3703
        %3950 = vmatpush1.bf16.msra.mxu0 %v3702
        %3951 = vmatprep.mubr.bf16.mxu0 %v3127
        %3952 = vmatmul.mubr.bf16.gmra.mrb[0].mxu0 %v3126
        %v3953 = vpop.f32.mrb[0].mxu0
        %v3954 = vadd.f32 %v3902, %v3953
        %v3955 = vpop.f32.mrb[0].mxu0
        %v3956 = vadd.f32 %v3906, %v3955
        %v3957 = vpop.f32.mrb[0].mxu0
        %v3958 = vpop.f32.mrb[0].mxu0
        %3959 = vdwg.mxu0
        %3960 = vmatprep.subr.bf16.mxu0 %v3707
        %3961 = vmatpush1.bf16.msra.mxu0 %v3706
        %3962 = vmatprep.subr.bf16.mxu0 %v3711
        %3963 = vmatpush1.bf16.msra.mxu0 %v3710
        %3964 = vmatprep.subr.bf16.mxu0 %v3715
        %3965 = vmatpush1.bf16.msra.mxu0 %v3714
        %3966 = vmatprep.subr.bf16.mxu0 %v3719
        %3967 = vmatpush1.bf16.msra.mxu0 %v3718
        %3968 = vmatprep.subr.bf16.mxu0 %v3723
        %3969 = vmatpush1.bf16.msra.mxu0 %v3722
        %3970 = vmatprep.subr.bf16.mxu0 %v3727
        %3971 = vmatpush1.bf16.msra.mxu0 %v3726
        %3972 = vmatprep.subr.bf16.mxu0 %v3731
        %3973 = vmatpush1.bf16.msra.mxu0 %v3730
        %3974 = vmatprep.subr.bf16.mxu0 %v3735
        %3975 = vmatpush1.bf16.msra.mxu0 %v3734
        %3976 = vmatprep.subr.bf16.mxu0 %v3739
        %3977 = vmatpush1.bf16.msra.mxu0 %v3738
        %3978 = vmatprep.subr.bf16.mxu0 %v3743
        %3979 = vmatpush1.bf16.msra.mxu0 %v3742
        %3980 = vmatprep.subr.bf16.mxu0 %v3747
        %3981 = vmatpush1.bf16.msra.mxu0 %v3746
        %3982 = vmatprep.subr.bf16.mxu0 %v3751
        %3983 = vmatpush1.bf16.msra.mxu0 %v3750
        %3984 = vmatprep.subr.bf16.mxu0 %v3755
        %3985 = vmatpush1.bf16.msra.mxu0 %v3754
        %3986 = vmatprep.subr.bf16.mxu0 %v3759
        %3987 = vmatpush1.bf16.msra.mxu0 %v3758
        %3988 = vmatprep.subr.bf16.mxu0 %v3763
        %3989 = vmatpush1.bf16.msra.mxu0 %v3762
        %3990 = vmatprep.subr.bf16.mxu0 %v3767
        %3991 = vmatpush1.bf16.msra.mxu0 %v3766
        %3992 = vmatprep.mubr.bf16.mxu0 %v3129
        %3993 = vmatmul.mubr.bf16.gmra.mrb[0].mxu0 %v3128
        %v3994 = vpop.f32.mrb[0].mxu0
        %v3995 = vadd.f32 %v3954, %v3994
        %v3996 = vpop.f32.mrb[0].mxu0
        %v3997 = vadd.f32 %v3956, %v3996
        %v3998 = vpop.f32.mrb[0].mxu0
        %v3999 = vpop.f32.mrb[0].mxu0
        %4000 = vdwg.mxu0
        %4001 = vmatprep.subr.bf16.mxu0 %v3645
        %4002 = vmatpush1.bf16.msra.mxu0 %v3644
        %4003 = vmatprep.subr.bf16.mxu0 %v3649
        %4004 = vmatpush1.bf16.msra.mxu0 %v3648
        %4005 = vmatprep.subr.bf16.mxu0 %v3653
        %4006 = vmatpush1.bf16.msra.mxu0 %v3652
        %4007 = vmatprep.subr.bf16.mxu0 %v3657
        %4008 = vmatpush1.bf16.msra.mxu0 %v3656
        %4009 = vmatprep.subr.bf16.mxu0 %v3661
        %4010 = vmatpush1.bf16.msra.mxu0 %v3660
        %4011 = vmatprep.subr.bf16.mxu0 %v3665
        %4012 = vmatpush1.bf16.msra.mxu0 %v3664
        %4013 = vmatprep.subr.bf16.mxu0 %v3669
        %4014 = vmatpush1.bf16.msra.mxu0 %v3668
        %4015 = vmatprep.subr.bf16.mxu0 %v3673
        %4016 = vmatpush1.bf16.msra.mxu0 %v3672
        %4017 = vmatprep.subr.bf16.mxu0 %v3677
        %4018 = vmatpush1.bf16.msra.mxu0 %v3676
        %4019 = vmatprep.subr.bf16.mxu0 %v3681
        %4020 = vmatpush1.bf16.msra.mxu0 %v3680
        %4021 = vmatprep.subr.bf16.mxu0 %v3685
        %4022 = vmatpush1.bf16.msra.mxu0 %v3684
        %4023 = vmatprep.subr.bf16.mxu0 %v3689
        %4024 = vmatpush1.bf16.msra.mxu0 %v3688
        %4025 = vmatprep.subr.bf16.mxu0 %v3693
        %4026 = vmatpush1.bf16.msra.mxu0 %v3692
        %4027 = vmatprep.subr.bf16.mxu0 %v3697
        %4028 = vmatpush1.bf16.msra.mxu0 %v3696
        %4029 = vmatprep.subr.bf16.mxu0 %v3701
        %4030 = vmatpush1.bf16.msra.mxu0 %v3700
        %4031 = vmatprep.subr.bf16.mxu0 %v3705
        %4032 = vmatpush1.bf16.msra.mxu0 %v3704
        %4033 = vmatprep.mubr.bf16.mxu0 %v3127
        %4034 = vmatmul.mubr.bf16.gmra.mrb[0].mxu0 %v3126
        %v4035 = vpop.f32.mrb[0].mxu0
        %v4036 = vadd.f32 %v3910, %v4035
        %v4037 = vpop.f32.mrb[0].mxu0
        %v4038 = vadd.f32 %v3914, %v4037
        %v4039 = vpop.f32.mrb[0].mxu0
        %v4040 = vpop.f32.mrb[0].mxu0
        %4041 = vdwg.mxu0
        %4042 = vmatprep.subr.bf16.mxu0 %v3709
        %4043 = vmatpush1.bf16.msra.mxu0 %v3708
        %4044 = vmatprep.subr.bf16.mxu0 %v3713
        %4045 = vmatpush1.bf16.msra.mxu0 %v3712
        %4046 = vmatprep.subr.bf16.mxu0 %v3717
        %4047 = vmatpush1.bf16.msra.mxu0 %v3716
        %4048 = vmatprep.subr.bf16.mxu0 %v3721
        %4049 = vmatpush1.bf16.msra.mxu0 %v3720
        %4050 = vmatprep.subr.bf16.mxu0 %v3725
        %4051 = vmatpush1.bf16.msra.mxu0 %v3724
        %4052 = vmatprep.subr.bf16.mxu0 %v3729
        %4053 = vmatpush1.bf16.msra.mxu0 %v3728
        %4054 = vmatprep.subr.bf16.mxu0 %v3733
        %4055 = vmatpush1.bf16.msra.mxu0 %v3732
        %4056 = vmatprep.subr.bf16.mxu0 %v3737
        %4057 = vmatpush1.bf16.msra.mxu0 %v3736
        %4058 = vmatprep.subr.bf16.mxu0 %v3741
        %4059 = vmatpush1.bf16.msra.mxu0 %v3740
        %4060 = vmatprep.subr.bf16.mxu0 %v3745
        %4061 = vmatpush1.bf16.msra.mxu0 %v3744
        %4062 = vmatprep.subr.bf16.mxu0 %v3749
        %4063 = vmatpush1.bf16.msra.mxu0 %v3748
        %4064 = vmatprep.subr.bf16.mxu0 %v3753
        %4065 = vmatpush1.bf16.msra.mxu0 %v3752
        %4066 = vmatprep.subr.bf16.mxu0 %v3757
        %4067 = vmatpush1.bf16.msra.mxu0 %v3756
        %4068 = vmatprep.subr.bf16.mxu0 %v3761
        %4069 = vmatpush1.bf16.msra.mxu0 %v3760
        %4070 = vmatprep.subr.bf16.mxu0 %v3765
        %4071 = vmatpush1.bf16.msra.mxu0 %v3764
        %4072 = vmatprep.subr.bf16.mxu0 %v3769
        %4073 = vmatpush1.bf16.msra.mxu0 %v3768
        %4074 = vmatprep.mubr.bf16.mxu0 %v3129
        %4075 = vmatmul.mubr.bf16.gmra.mrb[0].mxu0 %v3128
        %v4076 = vpop.f32.mrb[0].mxu0
        %v4077 = vadd.f32 %v4036, %v4076
        %v4078 = vpop.f32.mrb[0].mxu0
        %v4079 = vadd.f32 %v4038, %v4078
        %v4080 = vpop.f32.mrb[0].mxu0
        %v4081 = vpop.f32.mrb[0].mxu0
        %4082 = vdwg.mxu0
        %v4083 = vmax.f32 %v3995, 0.0
        %v4084 = vmax.f32 %v3997, 0.0
        %v4085 = vmax.f32 %v4077, 0.0
        %v4086 = vmax.f32 %v4079, 0.0
        %v4088 = vlaneseq
        %v4089 = vshrl.u32 %v4088, 7
        %v4090 = vsub.s32 0, %v4089
        %v4091 = vrot.slane %v354, %v4090
        %v4092 = vlaneseq
        %v4093 = vshrl.u32 %v4092, 7
        %v4094 = vsub.s32 1, %v4093
        %v4095 = vrot.slane %v354, %v4094
        %v4096 = vlaneseq
        %v4097 = vshrl.u32 %v4096, 7
        %v4098 = vsub.s32 2, %v4097
        %v4099 = vrot.slane %v354, %v4098
        %v4100 = vlaneseq
        %v4101 = vshrl.u32 %v4100, 7
        %v4102 = vsub.s32 3, %v4101
        %v4103 = vrot.slane %v354, %v4102
        %v4108 = vmul.f32 %v4083, %v4091
        %v4109 = vmul.f32 %v4084, %v4095
        %v4110 = vmul.f32 %v4085, %v4099
        %v4111 = vmul.f32 %v4086, %v4103
        %v4112 = vsel %vm899, %v4108, 0.0
        %v4113 = vsel %vm899, %v4109, 0.0
        %v4114 = vadd.f32 %v4112, %v4113
        %v4115 = vsel %vm899, %v4110, 0.0
        %v4116 = vadd.f32 %v4114, %v4115
        %v4117 = vsel %vm899, %v4111, 0.0
        %v4118 = vadd.f32 %v4116, %v4117
        %4119 = vadd.xlane.f32.xlu0 %v4118
        %v4120 = vpop.xlane.xlu0 %4119
        %v4121 = vadd.f32 %v4120, %v355
        %vm4122 = vcmask 0
        %4123 = vst.msk [vmem:[%s347] sm:$0x1] %vm4122, %v4121
        %p4124 = scmp.lt.s32.totalorder %s23, 1
        %s4125 = scalar_select %p4124, %s23, 1
        %s4126 = scalar_lea.vmem %s8, %s4125
        // Predicated region
        $region65: #{wf1dcnn3fc2_forward_prepared.1} parent=51 // pred_check
          %p4127 = pneg %p214
        $region66: #{wf1dcnn3fc2_forward_prepared.1} parent=51 // pred_check_branch
          %4129 = sbr.rel (%p4127) target = $region68
        $region67: #{wf1dcnn3fc2_forward_prepared.1} parent=51 // pred_region
          _
        $region68: #{wf1dcnn3fc2_forward_prepared.1} parent=51 // pred_fallthru
          _
      $region52: #{wf1dcnn3fc2_forward_prepared.1} parent=5 // pred_fallthru
        _
      %p4130 = scmp.le.s32.totalorder 2, %s18
      // Predicated region
      $region69: #{wf1dcnn3fc2_forward_prepared.1} parent=5 // pred_check
        %p4131 = pneg %p4130
      $region70: #{wf1dcnn3fc2_forward_prepared.1} parent=5 // pred_check_branch
        %4133 = sbr.rel (%p4131) target = $region72
      $region71: #{wf1dcnn3fc2_forward_prepared.1} parent=5 // pred_region
        %s4134 = ssub.s32 %s18, 2
        // Predicated region
        $region73: #{wf1dcnn3fc2_forward_prepared.1} parent=71 // pred_check
          %p4135 = pneg %p220
        $region74: #{wf1dcnn3fc2_forward_prepared.1} parent=71 // pred_check_branch
          %4137 = sbr.rel (%p4135) target = $region76
        $region75: #{wf1dcnn3fc2_forward_prepared.1} parent=71 // pred_region
          %p4138 = scmp.lt.s32.totalorder %s24, 1
          %s4139 = scalar_select %p4138, %s24, 1
          %s4140 = scalar_lea.vmem %s8, %s4139
        $region76: #{wf1dcnn3fc2_forward_prepared.1} parent=71 // pred_fallthru
          _
      $region72: #{wf1dcnn3fc2_forward_prepared.1} parent=5 // pred_fallthru
        _
    $region6: #{wf1dcnn3fc2_forward_prepared.1} parent=1 // loop_footer
      %s22 = sadd.s32 1, %s18
    $region7: #{wf1dcnn3fc2_forward_prepared.1} parent=1 // loop_footer_branch
      %17 = sbr.rel target = $region3
    $region8: #{wf1dcnn3fc2_forward_prepared.1} parent=1 // loop_exit
      _
    %4141 = vsyncpa [#allocation4], 1
    %s4142 = scalar_lea.sflag [#allocation4], 1
    %4143 = vsyncpa %s4142, 1
    %4144 = vsyncpa [#allocation6], 1

</llo_original>
